<compile_context>
chip_gen: v7x
topology: tpu7x:2x2x1
jax: 0.10.0
libtpu: 0.0.40
codegen_flags: <defaults>
</compile_context>

<pallas_src>
import functools
import math

import jax
import jax.numpy as jnp
from jax.experimental import pallas as pl
from jax.experimental.pallas import tpu as pltpu

D_MODEL = 32
H = 4
D_K = D_Q = D_V = D_MODEL // H
N = 2
N_WORDS_ENCODER = 100
P_DROPOUT = 0.1  # unused (identity dropout)
LN_EPS = 1e-5
D_FF = 4 * D_MODEL
HDK = H * D_K  # 32


def encoder_kernel(idx_ref, emb_ref, pe_ref,
                   wqkv_ref, bqkv_ref, wo_ref, bo_ref,
                   gamma_ref, beta_ref,
                   w1_ref, b1_ref, w2_ref, b2_ref,
                   o_ref, xbuf_ref, *, batch, seq):
    """Fused embedding-gather + PE add + all N encoder blocks (whole batch).

    idx_ref:  [B*S]      int32 token ids (SMEM)
    emb_ref:  [V, D]     f32 embedding table (VMEM)
    pe_ref:   [B*S, D]   f32 positional encodings, pre-tiled over batch
    wqkv: [N, D, 3*H*Dk] bf16 (q slab pre-scaled by 1/sqrt(Dk))
    bqkv: [N, 1, 3*H*Dk] f32  (q bias pre-scaled)
    wo:   [N, H*Dv, D]   bf16    bo: [N, 1, D] f32
    gamma/beta: [N, 1, D] f32 (one LayerNorm per block, applied twice, as in
                               the PyTorch module which reuses self.normalization)
    w1: [N, D, 4D] bf16  b1: [N, 1, 4D] f32   w2: [N, 4D, D] bf16  b2: [N, 1, D] f32
    o_ref: [B*S, D] f32 output;  xbuf_ref: [B*S, D] f32 VMEM scratch.
    """
    BS = batch * seq

    # ---- embedding gather (dynamic sublane loads driven by SMEM scalars) ----
    for r in range(BS):
        xbuf_ref[pl.ds(r, 1), :] = emb_ref[pl.ds(idx_ref[r], 1), :]
    x = xbuf_ref[...] + pe_ref[...]                      # [BS, D] f32

    def layer_norm(y, gamma, beta):
        mean = jnp.mean(y, axis=-1, keepdims=True)
        var = jnp.mean((y - mean) ** 2, axis=-1, keepdims=True)
        return (y - mean) * jax.lax.rsqrt(var + LN_EPS) * gamma + beta

    for i in range(N):                                   # N=2 blocks, unrolled
        gamma = gamma_ref[i]                             # [1, D]
        beta = beta_ref[i]

        # ---- multi-head attention --------------------------------------
        # One fused QKV matmul (scale folded into the q slab on the host).
        qkv = jnp.dot(x.astype(jnp.bfloat16), wqkv_ref[i],
                      preferred_element_type=jnp.float32) + bqkv_ref[i]
        qkv = qkv.astype(jnp.bfloat16)                   # [BS, 3*HDK]

        # Split heads into a leading batch axis with static lane slices;
        # [H, B*S, Dk] -> [H*B, S, Dk] is a pure leading-dim reshape
        # (rows are (b, s)-major), so no transposes / relayouts are needed.
        q_h = jnp.stack([qkv[:, h * D_K:(h + 1) * D_K]
                         for h in range(H)], axis=0)
        k_h = jnp.stack([qkv[:, HDK + h * D_K:HDK + (h + 1) * D_K]
                         for h in range(H)], axis=0)
        v_h = jnp.stack([qkv[:, 2 * HDK + h * D_K:2 * HDK + (h + 1) * D_K]
                         for h in range(H)], axis=0)
        qg = q_h.reshape(H * batch, seq, D_K)
        kg = k_h.reshape(H * batch, seq, D_K)
        vg = v_h.reshape(H * batch, seq, D_V)

        # One batched score einsum + ONE softmax chain over all (head, batch).
        s = jnp.einsum('gqd,gkd->gqk', qg, kg,
                       preferred_element_type=jnp.float32)      # [H*B, S, S]
        s = s - jnp.max(s, axis=-1, keepdims=True)
        e = jnp.exp(s)
        p = e * pl.reciprocal(jnp.sum(e, axis=-1, keepdims=True), approx=True)
        og = jnp.einsum('gqk,gkd->gqd', p.astype(jnp.bfloat16), vg,
                        preferred_element_type=jnp.float32)     # [H*B, S, Dv]

        # Concatenate heads back into lanes and do ONE output projection.
        oh = og.reshape(H, BS, D_V)
        cat = jnp.concatenate([oh[h] for h in range(H)], axis=-1)  # [BS, H*Dv]
        mha = jnp.dot(cat.astype(jnp.bfloat16), wo_ref[i],
                      preferred_element_type=jnp.float32) + bo_ref[i]

        # residual + LayerNorm (dropout == identity)
        y = layer_norm(x + mha, gamma, beta)

        # ---- feed-forward ----------------------------------------------
        z = jnp.dot(y.astype(jnp.bfloat16), w1_ref[i],
                    preferred_element_type=jnp.float32) + b1_ref[i]
        z = jnp.maximum(z, 0.0)
        z = jnp.dot(z.astype(jnp.bfloat16), w2_ref[i],
                    preferred_element_type=jnp.float32) + b2_ref[i]

        # residual + LayerNorm (same gamma/beta: PyTorch reuses self.normalization)
        x = layer_norm(y + z, gamma, beta)

    o_ref[...] = x.astype(o_ref.dtype)


def make_positional_encoding(max_len, d_model):
    position = jnp.arange(0, max_len, dtype=jnp.float32)[:, None]           # [L, 1]
    div_term = jnp.exp(jnp.arange(0, d_model, 2, dtype=jnp.float32)
                       * (-math.log(10000.0) / d_model))                    # [D/2]
    pe = jnp.zeros((max_len, d_model), dtype=jnp.float32)
    pe = pe.at[:, 0::2].set(jnp.sin(position * div_term))
    pe = pe.at[:, 1::2].set(jnp.cos(position * div_term))
    return pe


def _lin_init(key, fan_in, fan_out):
    k1, k2 = jax.random.split(key)
    w = jax.random.normal(k1, (fan_in, fan_out), jnp.float32) / math.sqrt(fan_in)
    b = jax.random.normal(k2, (1, fan_out), jnp.float32) * 0.01
    return w, b


def init_params(key):
    """Deterministic synthetic parameters (not a checkpoint load)."""
    key, sub = jax.random.split(key)
    embedding = jax.random.normal(sub, (N_WORDS_ENCODER, D_MODEL),
                                  jnp.float32) * 0.02
    blocks = []
    for _ in range(N):
        key, kq, kk, kv, ko, k1, k2 = jax.random.split(key, 7)
        wq, bq = _lin_init(kq, D_MODEL, D_Q * H)
        wk, bk = _lin_init(kk, D_MODEL, D_K * H)
        wv, bv = _lin_init(kv, D_MODEL, D_V * H)
        wo, bo = _lin_init(ko, D_V * H, D_MODEL)
        gamma = jnp.ones((1, D_MODEL), jnp.float32)
        beta = jnp.zeros((1, D_MODEL), jnp.float32)
        w1, b1 = _lin_init(k1, D_MODEL, D_FF)
        w2, b2 = _lin_init(k2, D_FF, D_MODEL)
        blocks.append(dict(wq=wq, bq=bq, wk=wk, bk=bk, wv=wv, bv=bv,
                           wo=wo, bo=bo, gamma=gamma, beta=beta,
                           w1=w1, b1=b1, w2=w2, b2=b2))
    return embedding, blocks


def pack_params(blocks):
    """Repack per-block params into N-stacked, MXU-friendly slabs (done once).

    - QKV weights/biases fused along the output-feature axis; 1/sqrt(D_K)
      folded into the q slab.  Matmul weights are stored in bf16.
    """
    scale = 1.0 / math.sqrt(D_K)
    wqkv = jnp.stack([jnp.concatenate([b["wq"] * scale, b["wk"], b["wv"]], axis=1)
                      for b in blocks]).astype(jnp.bfloat16)            # [N, D, 3*HDK]
    bqkv = jnp.stack([jnp.concatenate([b["bq"] * scale, b["bk"], b["bv"]], axis=1)
                      for b in blocks])                                 # [N, 1, 3*HDK]
    wo = jnp.stack([b["wo"] for b in blocks]).astype(jnp.bfloat16)      # [N, H*Dv, D]
    bo = jnp.stack([b["bo"] for b in blocks])                           # [N, 1, D]
    gamma = jnp.stack([b["gamma"] for b in blocks])
    beta = jnp.stack([b["beta"] for b in blocks])
    w1 = jnp.stack([b["w1"] for b in blocks]).astype(jnp.bfloat16)      # [N, D, 4D]
    b1 = jnp.stack([b["b1"] for b in blocks])
    w2 = jnp.stack([b["w2"] for b in blocks]).astype(jnp.bfloat16)      # [N, 4D, D]
    b2 = jnp.stack([b["b2"] for b in blocks])
    return (wqkv, bqkv, wo, bo, gamma, beta, w1, b1, w2, b2)


@jax.jit
def encoder_forward(inp, embedding, pe, packed):
    B, S = inp.shape
    BS = B * S
    idx = inp.reshape(BS).astype(jnp.int32)          # token ids -> SMEM
    pe_bs = jnp.tile(pe[:S, :], (B, 1))              # [B*S, D] pre-tiled PE

    vmem = pl.BlockSpec(memory_space=pltpu.MemorySpace.VMEM)
    smem = pl.BlockSpec(memory_space=pltpu.MemorySpace.SMEM)
    kernel = functools.partial(encoder_kernel, batch=B, seq=S)

    out2d = pl.pallas_call(
        kernel,
        out_shape=jax.ShapeDtypeStruct((BS, D_MODEL), jnp.float32),
        in_specs=[smem, vmem, vmem] + [vmem] * len(packed),
        out_specs=vmem,
        scratch_shapes=[pltpu.VMEM((BS, D_MODEL), jnp.float32)],
    )(idx, embedding, pe_bs, *packed)
    return out2d.reshape(B, S, D_MODEL)


if __name__ == "__main__":
    B, S = 2, 8
    key = jax.random.PRNGKey(0)
    key, k_inp, k_par = jax.random.split(key, 3)

    inp = jax.random.randint(k_inp, (B, S), 0, N_WORDS_ENCODER, dtype=jnp.int32)
    embedding, blocks = init_params(k_par)
    packed = pack_params(blocks)
    pe = make_positional_encoding(5000, D_MODEL)

    out = encoder_forward(inp, embedding, pe, packed)
    out = jax.block_until_ready(out)

    assert out.shape == (B, S, D_MODEL), out.shape
    assert bool(jnp.all(jnp.isfinite(out)))
    print("KERNEL_OK")
</pallas_src>

<mosaic_0001>
module attributes {stable_mosaic.version = 11 : i64} {
  func.func @encoder_kernel(%arg0: memref<16xi32, #tpu.memory_space<smem>>, %arg1: memref<100x32xf32, #tpu.memory_space<vmem>>, %arg2: memref<16x32xf32, #tpu.memory_space<vmem>>, %arg3: memref<2x32x96xbf16, #tpu.memory_space<vmem>>, %arg4: memref<2x1x96xf32, #tpu.memory_space<vmem>>, %arg5: memref<2x32x32xbf16, #tpu.memory_space<vmem>>, %arg6: memref<2x1x32xf32, #tpu.memory_space<vmem>>, %arg7: memref<2x1x32xf32, #tpu.memory_space<vmem>>, %arg8: memref<2x1x32xf32, #tpu.memory_space<vmem>>, %arg9: memref<2x32x128xbf16, #tpu.memory_space<vmem>>, %arg10: memref<2x1x128xf32, #tpu.memory_space<vmem>>, %arg11: memref<2x128x32xbf16, #tpu.memory_space<vmem>>, %arg12: memref<2x1x32xf32, #tpu.memory_space<vmem>>, %arg13: memref<16x32xf32, #tpu.memory_space<vmem>>, %arg14: memref<16x32xf32, #tpu.memory_space<vmem>>) attributes {dimension_semantics = [], scalar_prefetch = 0 : i64, scratch_operands = 1 : i64, tpu.core_type = #tpu.core_type<tc>} {
    %c0 = arith.constant 0 : index
    %0 = memref.load %arg0[%c0] : memref<16xi32, #tpu.memory_space<smem>>
    %1 = arith.index_cast %0 : i32 to index
    %c0_0 = arith.constant 0 : index
    %2 = vector.load %arg1[%1, %c0_0] : memref<100x32xf32, #tpu.memory_space<vmem>>, vector<1x32xf32>
    %c0_1 = arith.constant 0 : index
    %c0_2 = arith.constant 0 : index
    %3 = vector.load %arg14[%c0_1, %c0_2] : memref<16x32xf32, #tpu.memory_space<vmem>>, vector<1x32xf32>
    tpu.vector_store %arg14[%c0_1, %c0_2], %2 {strides = array<i32>} : memref<16x32xf32, #tpu.memory_space<vmem>>, vector<1x32xf32>,
    %c1 = arith.constant 1 : index
    %4 = memref.load %arg0[%c1] : memref<16xi32, #tpu.memory_space<smem>>
    %5 = arith.index_cast %4 : i32 to index
    %c0_3 = arith.constant 0 : index
    %6 = vector.load %arg1[%5, %c0_3] : memref<100x32xf32, #tpu.memory_space<vmem>>, vector<1x32xf32>
    %c1_4 = arith.constant 1 : index
    %c0_5 = arith.constant 0 : index
    %7 = vector.load %arg14[%c1_4, %c0_5] : memref<16x32xf32, #tpu.memory_space<vmem>>, vector<1x32xf32>
    tpu.vector_store %arg14[%c1_4, %c0_5], %6 {strides = array<i32>} : memref<16x32xf32, #tpu.memory_space<vmem>>, vector<1x32xf32>,
    %c2 = arith.constant 2 : index
    %8 = memref.load %arg0[%c2] : memref<16xi32, #tpu.memory_space<smem>>
    %9 = arith.index_cast %8 : i32 to index
    %c0_6 = arith.constant 0 : index
    %10 = vector.load %arg1[%9, %c0_6] : memref<100x32xf32, #tpu.memory_space<vmem>>, vector<1x32xf32>
    %c2_7 = arith.constant 2 : index
    %c0_8 = arith.constant 0 : index
    %11 = vector.load %arg14[%c2_7, %c0_8] : memref<16x32xf32, #tpu.memory_space<vmem>>, vector<1x32xf32>
    tpu.vector_store %arg14[%c2_7, %c0_8], %10 {strides = array<i32>} : memref<16x32xf32, #tpu.memory_space<vmem>>, vector<1x32xf32>,
    %c3 = arith.constant 3 : index
    %12 = memref.load %arg0[%c3] : memref<16xi32, #tpu.memory_space<smem>>
    %13 = arith.index_cast %12 : i32 to index
    %c0_9 = arith.constant 0 : index
    %14 = vector.load %arg1[%13, %c0_9] : memref<100x32xf32, #tpu.memory_space<vmem>>, vector<1x32xf32>
    %c3_10 = arith.constant 3 : index
    %c0_11 = arith.constant 0 : index
    %15 = vector.load %arg14[%c3_10, %c0_11] : memref<16x32xf32, #tpu.memory_space<vmem>>, vector<1x32xf32>
    tpu.vector_store %arg14[%c3_10, %c0_11], %14 {strides = array<i32>} : memref<16x32xf32, #tpu.memory_space<vmem>>, vector<1x32xf32>,
    %c4 = arith.constant 4 : index
    %16 = memref.load %arg0[%c4] : memref<16xi32, #tpu.memory_space<smem>>
    %17 = arith.index_cast %16 : i32 to index
    %c0_12 = arith.constant 0 : index
    %18 = vector.load %arg1[%17, %c0_12] : memref<100x32xf32, #tpu.memory_space<vmem>>, vector<1x32xf32>
    %c4_13 = arith.constant 4 : index
    %c0_14 = arith.constant 0 : index
    %19 = vector.load %arg14[%c4_13, %c0_14] : memref<16x32xf32, #tpu.memory_space<vmem>>, vector<1x32xf32>
    tpu.vector_store %arg14[%c4_13, %c0_14], %18 {strides = array<i32>} : memref<16x32xf32, #tpu.memory_space<vmem>>, vector<1x32xf32>,
    %c5 = arith.constant 5 : index
    %20 = memref.load %arg0[%c5] : memref<16xi32, #tpu.memory_space<smem>>
    %21 = arith.index_cast %20 : i32 to index
    %c0_15 = arith.constant 0 : index
    %22 = vector.load %arg1[%21, %c0_15] : memref<100x32xf32, #tpu.memory_space<vmem>>, vector<1x32xf32>
    %c5_16 = arith.constant 5 : index
    %c0_17 = arith.constant 0 : index
    %23 = vector.load %arg14[%c5_16, %c0_17] : memref<16x32xf32, #tpu.memory_space<vmem>>, vector<1x32xf32>
    tpu.vector_store %arg14[%c5_16, %c0_17], %22 {strides = array<i32>} : memref<16x32xf32, #tpu.memory_space<vmem>>, vector<1x32xf32>,
    %c6 = arith.constant 6 : index
    %24 = memref.load %arg0[%c6] : memref<16xi32, #tpu.memory_space<smem>>
    %25 = arith.index_cast %24 : i32 to index
    %c0_18 = arith.constant 0 : index
    %26 = vector.load %arg1[%25, %c0_18] : memref<100x32xf32, #tpu.memory_space<vmem>>, vector<1x32xf32>
    %c6_19 = arith.constant 6 : index
    %c0_20 = arith.constant 0 : index
    %27 = vector.load %arg14[%c6_19, %c0_20] : memref<16x32xf32, #tpu.memory_space<vmem>>, vector<1x32xf32>
    tpu.vector_store %arg14[%c6_19, %c0_20], %26 {strides = array<i32>} : memref<16x32xf32, #tpu.memory_space<vmem>>, vector<1x32xf32>,
    %c7 = arith.constant 7 : index
    %28 = memref.load %arg0[%c7] : memref<16xi32, #tpu.memory_space<smem>>
    %29 = arith.index_cast %28 : i32 to index
    %c0_21 = arith.constant 0 : index
    %30 = vector.load %arg1[%29, %c0_21] : memref<100x32xf32, #tpu.memory_space<vmem>>, vector<1x32xf32>
    %c7_22 = arith.constant 7 : index
    %c0_23 = arith.constant 0 : index
    %31 = vector.load %arg14[%c7_22, %c0_23] : memref<16x32xf32, #tpu.memory_space<vmem>>, vector<1x32xf32>
    tpu.vector_store %arg14[%c7_22, %c0_23], %30 {strides = array<i32>} : memref<16x32xf32, #tpu.memory_space<vmem>>, vector<1x32xf32>,
    %c8 = arith.constant 8 : index
    %32 = memref.load %arg0[%c8] : memref<16xi32, #tpu.memory_space<smem>>
    %33 = arith.index_cast %32 : i32 to index
    %c0_24 = arith.constant 0 : index
    %34 = vector.load %arg1[%33, %c0_24] : memref<100x32xf32, #tpu.memory_space<vmem>>, vector<1x32xf32>
    %c8_25 = arith.constant 8 : index
    %c0_26 = arith.constant 0 : index
    %35 = vector.load %arg14[%c8_25, %c0_26] : memref<16x32xf32, #tpu.memory_space<vmem>>, vector<1x32xf32>
    tpu.vector_store %arg14[%c8_25, %c0_26], %34 {strides = array<i32>} : memref<16x32xf32, #tpu.memory_space<vmem>>, vector<1x32xf32>,
    %c9 = arith.constant 9 : index
    %36 = memref.load %arg0[%c9] : memref<16xi32, #tpu.memory_space<smem>>
    %37 = arith.index_cast %36 : i32 to index
    %c0_27 = arith.constant 0 : index
    %38 = vector.load %arg1[%37, %c0_27] : memref<100x32xf32, #tpu.memory_space<vmem>>, vector<1x32xf32>
    %c9_28 = arith.constant 9 : index
    %c0_29 = arith.constant 0 : index
    %39 = vector.load %arg14[%c9_28, %c0_29] : memref<16x32xf32, #tpu.memory_space<vmem>>, vector<1x32xf32>
    tpu.vector_store %arg14[%c9_28, %c0_29], %38 {strides = array<i32>} : memref<16x32xf32, #tpu.memory_space<vmem>>, vector<1x32xf32>,
    %c10 = arith.constant 10 : index
    %40 = memref.load %arg0[%c10] : memref<16xi32, #tpu.memory_space<smem>>
    %41 = arith.index_cast %40 : i32 to index
    %c0_30 = arith.constant 0 : index
    %42 = vector.load %arg1[%41, %c0_30] : memref<100x32xf32, #tpu.memory_space<vmem>>, vector<1x32xf32>
    %c10_31 = arith.constant 10 : index
    %c0_32 = arith.constant 0 : index
    %43 = vector.load %arg14[%c10_31, %c0_32] : memref<16x32xf32, #tpu.memory_space<vmem>>, vector<1x32xf32>
    tpu.vector_store %arg14[%c10_31, %c0_32], %42 {strides = array<i32>} : memref<16x32xf32, #tpu.memory_space<vmem>>, vector<1x32xf32>,
    %c11 = arith.constant 11 : index
    %44 = memref.load %arg0[%c11] : memref<16xi32, #tpu.memory_space<smem>>
    %45 = arith.index_cast %44 : i32 to index
    %c0_33 = arith.constant 0 : index
    %46 = vector.load %arg1[%45, %c0_33] : memref<100x32xf32, #tpu.memory_space<vmem>>, vector<1x32xf32>
    %c11_34 = arith.constant 11 : index
    %c0_35 = arith.constant 0 : index
    %47 = vector.load %arg14[%c11_34, %c0_35] : memref<16x32xf32, #tpu.memory_space<vmem>>, vector<1x32xf32>
    tpu.vector_store %arg14[%c11_34, %c0_35], %46 {strides = array<i32>} : memref<16x32xf32, #tpu.memory_space<vmem>>, vector<1x32xf32>,
    %c12 = arith.constant 12 : index
    %48 = memref.load %arg0[%c12] : memref<16xi32, #tpu.memory_space<smem>>
    %49 = arith.index_cast %48 : i32 to index
    %c0_36 = arith.constant 0 : index
    %50 = vector.load %arg1[%49, %c0_36] : memref<100x32xf32, #tpu.memory_space<vmem>>, vector<1x32xf32>
    %c12_37 = arith.constant 12 : index
    %c0_38 = arith.constant 0 : index
    %51 = vector.load %arg14[%c12_37, %c0_38] : memref<16x32xf32, #tpu.memory_space<vmem>>, vector<1x32xf32>
    tpu.vector_store %arg14[%c12_37, %c0_38], %50 {strides = array<i32>} : memref<16x32xf32, #tpu.memory_space<vmem>>, vector<1x32xf32>,
    %c13 = arith.constant 13 : index
    %52 = memref.load %arg0[%c13] : memref<16xi32, #tpu.memory_space<smem>>
    %53 = arith.index_cast %52 : i32 to index
    %c0_39 = arith.constant 0 : index
    %54 = vector.load %arg1[%53, %c0_39] : memref<100x32xf32, #tpu.memory_space<vmem>>, vector<1x32xf32>
    %c13_40 = arith.constant 13 : index
    %c0_41 = arith.constant 0 : index
    %55 = vector.load %arg14[%c13_40, %c0_41] : memref<16x32xf32, #tpu.memory_space<vmem>>, vector<1x32xf32>
    tpu.vector_store %arg14[%c13_40, %c0_41], %54 {strides = array<i32>} : memref<16x32xf32, #tpu.memory_space<vmem>>, vector<1x32xf32>,
    %c14 = arith.constant 14 : index
    %56 = memref.load %arg0[%c14] : memref<16xi32, #tpu.memory_space<smem>>
    %57 = arith.index_cast %56 : i32 to index
    %c0_42 = arith.constant 0 : index
    %58 = vector.load %arg1[%57, %c0_42] : memref<100x32xf32, #tpu.memory_space<vmem>>, vector<1x32xf32>
    %c14_43 = arith.constant 14 : index
    %c0_44 = arith.constant 0 : index
    %59 = vector.load %arg14[%c14_43, %c0_44] : memref<16x32xf32, #tpu.memory_space<vmem>>, vector<1x32xf32>
    tpu.vector_store %arg14[%c14_43, %c0_44], %58 {strides = array<i32>} : memref<16x32xf32, #tpu.memory_space<vmem>>, vector<1x32xf32>,
    %c15 = arith.constant 15 : index
    %60 = memref.load %arg0[%c15] : memref<16xi32, #tpu.memory_space<smem>>
    %61 = arith.index_cast %60 : i32 to index
    %c0_45 = arith.constant 0 : index
    %62 = vector.load %arg1[%61, %c0_45] : memref<100x32xf32, #tpu.memory_space<vmem>>, vector<1x32xf32>
    %c15_46 = arith.constant 15 : index
    %c0_47 = arith.constant 0 : index
    %63 = vector.load %arg14[%c15_46, %c0_47] : memref<16x32xf32, #tpu.memory_space<vmem>>, vector<1x32xf32>
    tpu.vector_store %arg14[%c15_46, %c0_47], %62 {strides = array<i32>} : memref<16x32xf32, #tpu.memory_space<vmem>>, vector<1x32xf32>,
    %c0_48 = arith.constant 0 : index
    %c0_49 = arith.constant 0 : index
    %64 = vector.load %arg14[%c0_48, %c0_49] : memref<16x32xf32, #tpu.memory_space<vmem>>, vector<16x32xf32>
    %c0_50 = arith.constant 0 : index
    %c0_51 = arith.constant 0 : index
    %65 = vector.load %arg2[%c0_50, %c0_51] : memref<16x32xf32, #tpu.memory_space<vmem>>, vector<16x32xf32>
    %66 = arith.addf %64, %65 : vector<16x32xf32>
    %c0_52 = arith.constant 0 : index
    %c0_53 = arith.constant 0 : index
    %c0_54 = arith.constant 0 : index
    %67 = vector.load %arg7[%c0_52, %c0_53, %c0_54] : memref<2x1x32xf32, #tpu.memory_space<vmem>>, vector<1x1x32xf32>
    %68 = vector.shape_cast %67 : vector<1x1x32xf32> to vector<1x32xf32>
    %c0_55 = arith.constant 0 : index
    %c0_56 = arith.constant 0 : index
    %c0_57 = arith.constant 0 : index
    %69 = vector.load %arg8[%c0_55, %c0_56, %c0_57] : memref<2x1x32xf32, #tpu.memory_space<vmem>>, vector<1x1x32xf32>
    %70 = vector.shape_cast %69 : vector<1x1x32xf32> to vector<1x32xf32>
    %71 = arith.truncf %66 : vector<16x32xf32> to vector<16x32xbf16>
    %c0_58 = arith.constant 0 : index
    %c0_59 = arith.constant 0 : index
    %c0_60 = arith.constant 0 : index
    %72 = vector.load %arg3[%c0_58, %c0_59, %c0_60] : memref<2x32x96xbf16, #tpu.memory_space<vmem>>, vector<1x32x96xbf16>
    %73 = vector.shape_cast %72 : vector<1x32x96xbf16> to vector<32x96xbf16>
    %cst = arith.constant dense<0.000000e+00> : vector<16x96xf32>
    %74 = tpu.matmul %71, %73, %cst {dimension_numbers = #tpu.dot_dimension_numbers<[1], [0], [0], [1], [0, 0, 1, 1], [], []>} : vector<16x32xbf16>, vector<32x96xbf16>, vector<16x96xf32> -> vector<16x96xf32>
    %c0_61 = arith.constant 0 : index
    %c0_62 = arith.constant 0 : index
    %c0_63 = arith.constant 0 : index
    %75 = vector.load %arg4[%c0_61, %c0_62, %c0_63] : memref<2x1x96xf32, #tpu.memory_space<vmem>>, vector<1x1x96xf32>
    %76 = vector.shape_cast %75 : vector<1x1x96xf32> to vector<1x96xf32>
    %77 = vector.broadcast %76 : vector<1x96xf32> to vector<16x96xf32>
    %78 = arith.addf %74, %77 : vector<16x96xf32>
    %79 = arith.truncf %78 : vector<16x96xf32> to vector<16x96xbf16>
    %80 = vector.extract_strided_slice %79 {offsets = [0, 0], sizes = [16, 8], strides = [1, 1]} : vector<16x96xbf16> to vector<16x8xbf16>
    %81 = vector.extract_strided_slice %79 {offsets = [0, 8], sizes = [16, 8], strides = [1, 1]} : vector<16x96xbf16> to vector<16x8xbf16>
    %82 = vector.extract_strided_slice %79 {offsets = [0, 16], sizes = [16, 8], strides = [1, 1]} : vector<16x96xbf16> to vector<16x8xbf16>
    %83 = vector.extract_strided_slice %79 {offsets = [0, 24], sizes = [16, 8], strides = [1, 1]} : vector<16x96xbf16> to vector<16x8xbf16>
    %84 = vector.shape_cast %80 : vector<16x8xbf16> to vector<1x16x8xbf16>
    %85 = vector.shape_cast %81 : vector<16x8xbf16> to vector<1x16x8xbf16>
    %86 = vector.shape_cast %82 : vector<16x8xbf16> to vector<1x16x8xbf16>
    %87 = vector.shape_cast %83 : vector<16x8xbf16> to vector<1x16x8xbf16>
    %88 = tpu.concatenate %84, %85, %86, %87 in 0 : vector<1x16x8xbf16>, vector<1x16x8xbf16>, vector<1x16x8xbf16>, vector<1x16x8xbf16> -> vector<4x16x8xbf16>
    %89 = vector.extract_strided_slice %79 {offsets = [0, 32], sizes = [16, 8], strides = [1, 1]} : vector<16x96xbf16> to vector<16x8xbf16>
    %90 = vector.extract_strided_slice %79 {offsets = [0, 40], sizes = [16, 8], strides = [1, 1]} : vector<16x96xbf16> to vector<16x8xbf16>
    %91 = vector.extract_strided_slice %79 {offsets = [0, 48], sizes = [16, 8], strides = [1, 1]} : vector<16x96xbf16> to vector<16x8xbf16>
    %92 = vector.extract_strided_slice %79 {offsets = [0, 56], sizes = [16, 8], strides = [1, 1]} : vector<16x96xbf16> to vector<16x8xbf16>
    %93 = vector.shape_cast %89 : vector<16x8xbf16> to vector<1x16x8xbf16>
    %94 = vector.shape_cast %90 : vector<16x8xbf16> to vector<1x16x8xbf16>
    %95 = vector.shape_cast %91 : vector<16x8xbf16> to vector<1x16x8xbf16>
    %96 = vector.shape_cast %92 : vector<16x8xbf16> to vector<1x16x8xbf16>
    %97 = tpu.concatenate %93, %94, %95, %96 in 0 : vector<1x16x8xbf16>, vector<1x16x8xbf16>, vector<1x16x8xbf16>, vector<1x16x8xbf16> -> vector<4x16x8xbf16>
    %98 = vector.extract_strided_slice %79 {offsets = [0, 64], sizes = [16, 8], strides = [1, 1]} : vector<16x96xbf16> to vector<16x8xbf16>
    %99 = vector.extract_strided_slice %79 {offsets = [0, 72], sizes = [16, 8], strides = [1, 1]} : vector<16x96xbf16> to vector<16x8xbf16>
    %100 = vector.extract_strided_slice %79 {offsets = [0, 80], sizes = [16, 8], strides = [1, 1]} : vector<16x96xbf16> to vector<16x8xbf16>
    %101 = vector.extract_strided_slice %79 {offsets = [0, 88], sizes = [16, 8], strides = [1, 1]} : vector<16x96xbf16> to vector<16x8xbf16>
    %102 = vector.shape_cast %98 : vector<16x8xbf16> to vector<1x16x8xbf16>
    %103 = vector.shape_cast %99 : vector<16x8xbf16> to vector<1x16x8xbf16>
    %104 = vector.shape_cast %100 : vector<16x8xbf16> to vector<1x16x8xbf16>
    %105 = vector.shape_cast %101 : vector<16x8xbf16> to vector<1x16x8xbf16>
    %106 = tpu.concatenate %102, %103, %104, %105 in 0 : vector<1x16x8xbf16>, vector<1x16x8xbf16>, vector<1x16x8xbf16>, vector<1x16x8xbf16> -> vector<4x16x8xbf16>
    %107 = vector.shape_cast %88 : vector<4x16x8xbf16> to vector<8x8x8xbf16>
    %108 = vector.shape_cast %97 : vector<4x16x8xbf16> to vector<8x8x8xbf16>
    %109 = vector.shape_cast %106 : vector<4x16x8xbf16> to vector<8x8x8xbf16>
    "tpu.trace_start"() <{level = 10 : i32, message = "gqd,gkd->gqk"}> : () -> ()
    %cst_64 = arith.constant dense<0.000000e+00> : vector<8x8x8xf32>
    %110 = tpu.matmul %107, %108, %cst_64 {dimension_numbers = #tpu.dot_dimension_numbers<[2], [2], [1], [1], [0, 0, 0, 1, 1, 1], [0], [0]>} : vector<8x8x8xbf16>, vector<8x8x8xbf16>, vector<8x8x8xf32> -> vector<8x8x8xf32>
    "tpu.trace_stop"() : () -> ()
    %cst_65 = arith.constant dense<0xFF800000> : vector<8x8xf32>
    %111 = vector.multi_reduction <maximumf>, %110, %cst_65 [2] : vector<8x8x8xf32> to vector<8x8xf32>
    %112 = vector.shape_cast %111 : vector<8x8xf32> to vector<8x8x1xf32>
    %113 = vector.broadcast %112 : vector<8x8x1xf32> to vector<8x8x8xf32>
    %114 = arith.subf %110, %113 : vector<8x8x8xf32>
    %115 = math.exp %114 : vector<8x8x8xf32>
    %cst_66 = arith.constant dense<0.000000e+00> : vector<8x8xf32>
    %116 = vector.multi_reduction <add>, %115, %cst_66 [2] : vector<8x8x8xf32> to vector<8x8xf32>
    %117 = vector.shape_cast %116 : vector<8x8xf32> to vector<8x8x1xf32>
    %118 = tpu.reciprocal %117 {approx = true} : vector<8x8x1xf32> -> vector<8x8x1xf32>
    %119 = vector.broadcast %118 : vector<8x8x1xf32> to vector<8x8x8xf32>
    %120 = arith.mulf %115, %119 : vector<8x8x8xf32>
    %121 = arith.truncf %120 : vector<8x8x8xf32> to vector<8x8x8xbf16>
    "tpu.trace_start"() <{level = 10 : i32, message = "gqk,gkd->gqd"}> : () -> ()
    %cst_67 = arith.constant dense<0.000000e+00> : vector<8x8x8xf32>
    %122 = tpu.matmul %121, %109, %cst_67 {dimension_numbers = #tpu.dot_dimension_numbers<[2], [1], [1], [2], [0, 0, 0, 1, 1, 2], [0], [0]>} : vector<8x8x8xbf16>, vector<8x8x8xbf16>, vector<8x8x8xf32> -> vector<8x8x8xf32>
    "tpu.trace_stop"() : () -> ()
    %123 = vector.shape_cast %122 : vector<8x8x8xf32> to vector<4x16x8xf32>
    %124 = vector.extract_strided_slice %123 {offsets = [0, 0, 0], sizes = [1, 16, 8], strides = [1, 1, 1]} : vector<4x16x8xf32> to vector<1x16x8xf32>
    %125 = vector.shape_cast %124 : vector<1x16x8xf32> to vector<16x8xf32>
    %126 = vector.extract_strided_slice %123 {offsets = [1, 0, 0], sizes = [1, 16, 8], strides = [1, 1, 1]} : vector<4x16x8xf32> to vector<1x16x8xf32>
    %127 = vector.shape_cast %126 : vector<1x16x8xf32> to vector<16x8xf32>
    %128 = vector.extract_strided_slice %123 {offsets = [2, 0, 0], sizes = [1, 16, 8], strides = [1, 1, 1]} : vector<4x16x8xf32> to vector<1x16x8xf32>
    %129 = vector.shape_cast %128 : vector<1x16x8xf32> to vector<16x8xf32>
    %130 = vector.extract_strided_slice %123 {offsets = [3, 0, 0], sizes = [1, 16, 8], strides = [1, 1, 1]} : vector<4x16x8xf32> to vector<1x16x8xf32>
    %131 = vector.shape_cast %130 : vector<1x16x8xf32> to vector<16x8xf32>
    %132 = tpu.concatenate %125, %127, %129, %131 in 1 : vector<16x8xf32>, vector<16x8xf32>, vector<16x8xf32>, vector<16x8xf32> -> vector<16x32xf32>
    %133 = arith.truncf %132 : vector<16x32xf32> to vector<16x32xbf16>
    %c0_68 = arith.constant 0 : index
    %c0_69 = arith.constant 0 : index
    %c0_70 = arith.constant 0 : index
    %134 = vector.load %arg5[%c0_68, %c0_69, %c0_70] : memref<2x32x32xbf16, #tpu.memory_space<vmem>>, vector<1x32x32xbf16>
    %135 = vector.shape_cast %134 : vector<1x32x32xbf16> to vector<32x32xbf16>
    %cst_71 = arith.constant dense<0.000000e+00> : vector<16x32xf32>
    %136 = tpu.matmul %133, %135, %cst_71 {dimension_numbers = #tpu.dot_dimension_numbers<[1], [0], [0], [1], [0, 0, 1, 1], [], []>} : vector<16x32xbf16>, vector<32x32xbf16>, vector<16x32xf32> -> vector<16x32xf32>
    %c0_72 = arith.constant 0 : index
    %c0_73 = arith.constant 0 : index
    %c0_74 = arith.constant 0 : index
    %137 = vector.load %arg6[%c0_72, %c0_73, %c0_74] : memref<2x1x32xf32, #tpu.memory_space<vmem>>, vector<1x1x32xf32>
    %138 = vector.shape_cast %137 : vector<1x1x32xf32> to vector<1x32xf32>
    %139 = vector.broadcast %138 : vector<1x32xf32> to vector<16x32xf32>
    %140 = arith.addf %136, %139 : vector<16x32xf32>
    %141 = arith.addf %66, %140 : vector<16x32xf32>
    %cst_75 = arith.constant dense<0.000000e+00> : vector<16xf32>
    %142 = vector.multi_reduction <add>, %141, %cst_75 [1] : vector<16x32xf32> to vector<16xf32>
    %143 = vector.shape_cast %142 : vector<16xf32> to vector<16x1xf32>
    %cst_76 = arith.constant 3.200000e+01 : f32
    %144 = vector.broadcast %cst_76 : f32 to vector<16x1xf32>
    %145 = arith.divf %143, %144 : vector<16x1xf32>
    %146 = vector.broadcast %145 : vector<16x1xf32> to vector<16x32xf32>
    %147 = arith.subf %141, %146 : vector<16x32xf32>
    %148 = arith.mulf %147, %147 : vector<16x32xf32>
    %cst_77 = arith.constant dense<0.000000e+00> : vector<16xf32>
    %149 = vector.multi_reduction <add>, %148, %cst_77 [1] : vector<16x32xf32> to vector<16xf32>
    %150 = vector.shape_cast %149 : vector<16xf32> to vector<16x1xf32>
    %cst_78 = arith.constant 3.200000e+01 : f32
    %151 = vector.broadcast %cst_78 : f32 to vector<16x1xf32>
    %152 = arith.divf %150, %151 : vector<16x1xf32>
    %153 = vector.broadcast %145 : vector<16x1xf32> to vector<16x32xf32>
    %154 = arith.subf %141, %153 : vector<16x32xf32>
    %cst_79 = arith.constant 9.99999974E-6 : f32
    %155 = vector.broadcast %cst_79 : f32 to vector<16x1xf32>
    %156 = arith.addf %152, %155 : vector<16x1xf32>
    %157 = math.rsqrt %156 : vector<16x1xf32>
    %158 = vector.broadcast %157 : vector<16x1xf32> to vector<16x32xf32>
    %159 = arith.mulf %154, %158 : vector<16x32xf32>
    %160 = vector.broadcast %68 : vector<1x32xf32> to vector<16x32xf32>
    %161 = arith.mulf %159, %160 : vector<16x32xf32>
    %162 = vector.broadcast %70 : vector<1x32xf32> to vector<16x32xf32>
    %163 = arith.addf %161, %162 : vector<16x32xf32>
    %164 = arith.truncf %163 : vector<16x32xf32> to vector<16x32xbf16>
    %c0_80 = arith.constant 0 : index
    %c0_81 = arith.constant 0 : index
    %c0_82 = arith.constant 0 : index
    %165 = vector.load %arg9[%c0_80, %c0_81, %c0_82] : memref<2x32x128xbf16, #tpu.memory_space<vmem>>, vector<1x32x128xbf16>
    %166 = vector.shape_cast %165 : vector<1x32x128xbf16> to vector<32x128xbf16>
    %cst_83 = arith.constant dense<0.000000e+00> : vector<16x128xf32>
    %167 = tpu.matmul %164, %166, %cst_83 {dimension_numbers = #tpu.dot_dimension_numbers<[1], [0], [0], [1], [0, 0, 1, 1], [], []>} : vector<16x32xbf16>, vector<32x128xbf16>, vector<16x128xf32> -> vector<16x128xf32>
    %c0_84 = arith.constant 0 : index
    %c0_85 = arith.constant 0 : index
    %c0_86 = arith.constant 0 : index
    %168 = vector.load %arg10[%c0_84, %c0_85, %c0_86] : memref<2x1x128xf32, #tpu.memory_space<vmem>>, vector<1x1x128xf32>
    %169 = vector.shape_cast %168 : vector<1x1x128xf32> to vector<1x128xf32>
    %170 = vector.broadcast %169 : vector<1x128xf32> to vector<16x128xf32>
    %171 = arith.addf %167, %170 : vector<16x128xf32>
    %cst_87 = arith.constant 0.000000e+00 : f32
    %172 = vector.broadcast %cst_87 : f32 to vector<16x128xf32>
    %173 = arith.maximumf %171, %172 : vector<16x128xf32>
    %174 = arith.truncf %173 : vector<16x128xf32> to vector<16x128xbf16>
    %c0_88 = arith.constant 0 : index
    %c0_89 = arith.constant 0 : index
    %c0_90 = arith.constant 0 : index
    %175 = vector.load %arg11[%c0_88, %c0_89, %c0_90] : memref<2x128x32xbf16, #tpu.memory_space<vmem>>, vector<1x128x32xbf16>
    %176 = vector.shape_cast %175 : vector<1x128x32xbf16> to vector<128x32xbf16>
    %cst_91 = arith.constant dense<0.000000e+00> : vector<16x32xf32>
    %177 = tpu.matmul %174, %176, %cst_91 {dimension_numbers = #tpu.dot_dimension_numbers<[1], [0], [0], [1], [0, 0, 1, 1], [], []>} : vector<16x128xbf16>, vector<128x32xbf16>, vector<16x32xf32> -> vector<16x32xf32>
    %c0_92 = arith.constant 0 : index
    %c0_93 = arith.constant 0 : index
    %c0_94 = arith.constant 0 : index
    %178 = vector.load %arg12[%c0_92, %c0_93, %c0_94] : memref<2x1x32xf32, #tpu.memory_space<vmem>>, vector<1x1x32xf32>
    %179 = vector.shape_cast %178 : vector<1x1x32xf32> to vector<1x32xf32>
    %180 = vector.broadcast %179 : vector<1x32xf32> to vector<16x32xf32>
    %181 = arith.addf %177, %180 : vector<16x32xf32>
    %182 = arith.addf %163, %181 : vector<16x32xf32>
    %cst_95 = arith.constant dense<0.000000e+00> : vector<16xf32>
    %183 = vector.multi_reduction <add>, %182, %cst_95 [1] : vector<16x32xf32> to vector<16xf32>
    %184 = vector.shape_cast %183 : vector<16xf32> to vector<16x1xf32>
    %cst_96 = arith.constant 3.200000e+01 : f32
    %185 = vector.broadcast %cst_96 : f32 to vector<16x1xf32>
    %186 = arith.divf %184, %185 : vector<16x1xf32>
    %187 = vector.broadcast %186 : vector<16x1xf32> to vector<16x32xf32>
    %188 = arith.subf %182, %187 : vector<16x32xf32>
    %189 = arith.mulf %188, %188 : vector<16x32xf32>
    %cst_97 = arith.constant dense<0.000000e+00> : vector<16xf32>
    %190 = vector.multi_reduction <add>, %189, %cst_97 [1] : vector<16x32xf32> to vector<16xf32>
    %191 = vector.shape_cast %190 : vector<16xf32> to vector<16x1xf32>
    %cst_98 = arith.constant 3.200000e+01 : f32
    %192 = vector.broadcast %cst_98 : f32 to vector<16x1xf32>
    %193 = arith.divf %191, %192 : vector<16x1xf32>
    %194 = vector.broadcast %186 : vector<16x1xf32> to vector<16x32xf32>
    %195 = arith.subf %182, %194 : vector<16x32xf32>
    %cst_99 = arith.constant 9.99999974E-6 : f32
    %196 = vector.broadcast %cst_99 : f32 to vector<16x1xf32>
    %197 = arith.addf %193, %196 : vector<16x1xf32>
    %198 = math.rsqrt %197 : vector<16x1xf32>
    %199 = vector.broadcast %198 : vector<16x1xf32> to vector<16x32xf32>
    %200 = arith.mulf %195, %199 : vector<16x32xf32>
    %201 = vector.broadcast %68 : vector<1x32xf32> to vector<16x32xf32>
    %202 = arith.mulf %200, %201 : vector<16x32xf32>
    %203 = vector.broadcast %70 : vector<1x32xf32> to vector<16x32xf32>
    %204 = arith.addf %202, %203 : vector<16x32xf32>
    %c1_100 = arith.constant 1 : index
    %c0_101 = arith.constant 0 : index
    %c0_102 = arith.constant 0 : index
    %205 = vector.load %arg7[%c1_100, %c0_101, %c0_102] : memref<2x1x32xf32, #tpu.memory_space<vmem>>, vector<1x1x32xf32>
    %206 = vector.shape_cast %205 : vector<1x1x32xf32> to vector<1x32xf32>
    %c1_103 = arith.constant 1 : index
    %c0_104 = arith.constant 0 : index
    %c0_105 = arith.constant 0 : index
    %207 = vector.load %arg8[%c1_103, %c0_104, %c0_105] : memref<2x1x32xf32, #tpu.memory_space<vmem>>, vector<1x1x32xf32>
    %208 = vector.shape_cast %207 : vector<1x1x32xf32> to vector<1x32xf32>
    %209 = arith.truncf %204 : vector<16x32xf32> to vector<16x32xbf16>
    %c1_106 = arith.constant 1 : index
    %c0_107 = arith.constant 0 : index
    %c0_108 = arith.constant 0 : index
    %210 = vector.load %arg3[%c1_106, %c0_107, %c0_108] : memref<2x32x96xbf16, #tpu.memory_space<vmem>>, vector<1x32x96xbf16>
    %211 = vector.shape_cast %210 : vector<1x32x96xbf16> to vector<32x96xbf16>
    %cst_109 = arith.constant dense<0.000000e+00> : vector<16x96xf32>
    %212 = tpu.matmul %209, %211, %cst_109 {dimension_numbers = #tpu.dot_dimension_numbers<[1], [0], [0], [1], [0, 0, 1, 1], [], []>} : vector<16x32xbf16>, vector<32x96xbf16>, vector<16x96xf32> -> vector<16x96xf32>
    %c1_110 = arith.constant 1 : index
    %c0_111 = arith.constant 0 : index
    %c0_112 = arith.constant 0 : index
    %213 = vector.load %arg4[%c1_110, %c0_111, %c0_112] : memref<2x1x96xf32, #tpu.memory_space<vmem>>, vector<1x1x96xf32>
    %214 = vector.shape_cast %213 : vector<1x1x96xf32> to vector<1x96xf32>
    %215 = vector.broadcast %214 : vector<1x96xf32> to vector<16x96xf32>
    %216 = arith.addf %212, %215 : vector<16x96xf32>
    %217 = arith.truncf %216 : vector<16x96xf32> to vector<16x96xbf16>
    %218 = vector.extract_strided_slice %217 {offsets = [0, 0], sizes = [16, 8], strides = [1, 1]} : vector<16x96xbf16> to vector<16x8xbf16>
    %219 = vector.extract_strided_slice %217 {offsets = [0, 8], sizes = [16, 8], strides = [1, 1]} : vector<16x96xbf16> to vector<16x8xbf16>
    %220 = vector.extract_strided_slice %217 {offsets = [0, 16], sizes = [16, 8], strides = [1, 1]} : vector<16x96xbf16> to vector<16x8xbf16>
    %221 = vector.extract_strided_slice %217 {offsets = [0, 24], sizes = [16, 8], strides = [1, 1]} : vector<16x96xbf16> to vector<16x8xbf16>
    %222 = vector.shape_cast %218 : vector<16x8xbf16> to vector<1x16x8xbf16>
    %223 = vector.shape_cast %219 : vector<16x8xbf16> to vector<1x16x8xbf16>
    %224 = vector.shape_cast %220 : vector<16x8xbf16> to vector<1x16x8xbf16>
    %225 = vector.shape_cast %221 : vector<16x8xbf16> to vector<1x16x8xbf16>
    %226 = tpu.concatenate %222, %223, %224, %225 in 0 : vector<1x16x8xbf16>, vector<1x16x8xbf16>, vector<1x16x8xbf16>, vector<1x16x8xbf16> -> vector<4x16x8xbf16>
    %227 = vector.extract_strided_slice %217 {offsets = [0, 32], sizes = [16, 8], strides = [1, 1]} : vector<16x96xbf16> to vector<16x8xbf16>
    %228 = vector.extract_strided_slice %217 {offsets = [0, 40], sizes = [16, 8], strides = [1, 1]} : vector<16x96xbf16> to vector<16x8xbf16>
    %229 = vector.extract_strided_slice %217 {offsets = [0, 48], sizes = [16, 8], strides = [1, 1]} : vector<16x96xbf16> to vector<16x8xbf16>
    %230 = vector.extract_strided_slice %217 {offsets = [0, 56], sizes = [16, 8], strides = [1, 1]} : vector<16x96xbf16> to vector<16x8xbf16>
    %231 = vector.shape_cast %227 : vector<16x8xbf16> to vector<1x16x8xbf16>
    %232 = vector.shape_cast %228 : vector<16x8xbf16> to vector<1x16x8xbf16>
    %233 = vector.shape_cast %229 : vector<16x8xbf16> to vector<1x16x8xbf16>
    %234 = vector.shape_cast %230 : vector<16x8xbf16> to vector<1x16x8xbf16>
    %235 = tpu.concatenate %231, %232, %233, %234 in 0 : vector<1x16x8xbf16>, vector<1x16x8xbf16>, vector<1x16x8xbf16>, vector<1x16x8xbf16> -> vector<4x16x8xbf16>
    %236 = vector.extract_strided_slice %217 {offsets = [0, 64], sizes = [16, 8], strides = [1, 1]} : vector<16x96xbf16> to vector<16x8xbf16>
    %237 = vector.extract_strided_slice %217 {offsets = [0, 72], sizes = [16, 8], strides = [1, 1]} : vector<16x96xbf16> to vector<16x8xbf16>
    %238 = vector.extract_strided_slice %217 {offsets = [0, 80], sizes = [16, 8], strides = [1, 1]} : vector<16x96xbf16> to vector<16x8xbf16>
    %239 = vector.extract_strided_slice %217 {offsets = [0, 88], sizes = [16, 8], strides = [1, 1]} : vector<16x96xbf16> to vector<16x8xbf16>
    %240 = vector.shape_cast %236 : vector<16x8xbf16> to vector<1x16x8xbf16>
    %241 = vector.shape_cast %237 : vector<16x8xbf16> to vector<1x16x8xbf16>
    %242 = vector.shape_cast %238 : vector<16x8xbf16> to vector<1x16x8xbf16>
    %243 = vector.shape_cast %239 : vector<16x8xbf16> to vector<1x16x8xbf16>
    %244 = tpu.concatenate %240, %241, %242, %243 in 0 : vector<1x16x8xbf16>, vector<1x16x8xbf16>, vector<1x16x8xbf16>, vector<1x16x8xbf16> -> vector<4x16x8xbf16>
    %245 = vector.shape_cast %226 : vector<4x16x8xbf16> to vector<8x8x8xbf16>
    %246 = vector.shape_cast %235 : vector<4x16x8xbf16> to vector<8x8x8xbf16>
    %247 = vector.shape_cast %244 : vector<4x16x8xbf16> to vector<8x8x8xbf16>
    "tpu.trace_start"() <{level = 10 : i32, message = "gqd,gkd->gqk"}> : () -> ()
    %cst_113 = arith.constant dense<0.000000e+00> : vector<8x8x8xf32>
    %248 = tpu.matmul %245, %246, %cst_113 {dimension_numbers = #tpu.dot_dimension_numbers<[2], [2], [1], [1], [0, 0, 0, 1, 1, 1], [0], [0]>} : vector<8x8x8xbf16>, vector<8x8x8xbf16>, vector<8x8x8xf32> -> vector<8x8x8xf32>
    "tpu.trace_stop"() : () -> ()
    %cst_114 = arith.constant dense<0xFF800000> : vector<8x8xf32>
    %249 = vector.multi_reduction <maximumf>, %248, %cst_114 [2] : vector<8x8x8xf32> to vector<8x8xf32>
    %250 = vector.shape_cast %249 : vector<8x8xf32> to vector<8x8x1xf32>
    %251 = vector.broadcast %250 : vector<8x8x1xf32> to vector<8x8x8xf32>
    %252 = arith.subf %248, %251 : vector<8x8x8xf32>
    %253 = math.exp %252 : vector<8x8x8xf32>
    %cst_115 = arith.constant dense<0.000000e+00> : vector<8x8xf32>
    %254 = vector.multi_reduction <add>, %253, %cst_115 [2] : vector<8x8x8xf32> to vector<8x8xf32>
    %255 = vector.shape_cast %254 : vector<8x8xf32> to vector<8x8x1xf32>
    %256 = tpu.reciprocal %255 {approx = true} : vector<8x8x1xf32> -> vector<8x8x1xf32>
    %257 = vector.broadcast %256 : vector<8x8x1xf32> to vector<8x8x8xf32>
    %258 = arith.mulf %253, %257 : vector<8x8x8xf32>
    %259 = arith.truncf %258 : vector<8x8x8xf32> to vector<8x8x8xbf16>
    "tpu.trace_start"() <{level = 10 : i32, message = "gqk,gkd->gqd"}> : () -> ()
    %cst_116 = arith.constant dense<0.000000e+00> : vector<8x8x8xf32>
    %260 = tpu.matmul %259, %247, %cst_116 {dimension_numbers = #tpu.dot_dimension_numbers<[2], [1], [1], [2], [0, 0, 0, 1, 1, 2], [0], [0]>} : vector<8x8x8xbf16>, vector<8x8x8xbf16>, vector<8x8x8xf32> -> vector<8x8x8xf32>
    "tpu.trace_stop"() : () -> ()
    %261 = vector.shape_cast %260 : vector<8x8x8xf32> to vector<4x16x8xf32>
    %262 = vector.extract_strided_slice %261 {offsets = [0, 0, 0], sizes = [1, 16, 8], strides = [1, 1, 1]} : vector<4x16x8xf32> to vector<1x16x8xf32>
    %263 = vector.shape_cast %262 : vector<1x16x8xf32> to vector<16x8xf32>
    %264 = vector.extract_strided_slice %261 {offsets = [1, 0, 0], sizes = [1, 16, 8], strides = [1, 1, 1]} : vector<4x16x8xf32> to vector<1x16x8xf32>
    %265 = vector.shape_cast %264 : vector<1x16x8xf32> to vector<16x8xf32>
    %266 = vector.extract_strided_slice %261 {offsets = [2, 0, 0], sizes = [1, 16, 8], strides = [1, 1, 1]} : vector<4x16x8xf32> to vector<1x16x8xf32>
    %267 = vector.shape_cast %266 : vector<1x16x8xf32> to vector<16x8xf32>
    %268 = vector.extract_strided_slice %261 {offsets = [3, 0, 0], sizes = [1, 16, 8], strides = [1, 1, 1]} : vector<4x16x8xf32> to vector<1x16x8xf32>
    %269 = vector.shape_cast %268 : vector<1x16x8xf32> to vector<16x8xf32>
    %270 = tpu.concatenate %263, %265, %267, %269 in 1 : vector<16x8xf32>, vector<16x8xf32>, vector<16x8xf32>, vector<16x8xf32> -> vector<16x32xf32>
    %271 = arith.truncf %270 : vector<16x32xf32> to vector<16x32xbf16>
    %c1_117 = arith.constant 1 : index
    %c0_118 = arith.constant 0 : index
    %c0_119 = arith.constant 0 : index
    %272 = vector.load %arg5[%c1_117, %c0_118, %c0_119] : memref<2x32x32xbf16, #tpu.memory_space<vmem>>, vector<1x32x32xbf16>
    %273 = vector.shape_cast %272 : vector<1x32x32xbf16> to vector<32x32xbf16>
    %cst_120 = arith.constant dense<0.000000e+00> : vector<16x32xf32>
    %274 = tpu.matmul %271, %273, %cst_120 {dimension_numbers = #tpu.dot_dimension_numbers<[1], [0], [0], [1], [0, 0, 1, 1], [], []>} : vector<16x32xbf16>, vector<32x32xbf16>, vector<16x32xf32> -> vector<16x32xf32>
    %c1_121 = arith.constant 1 : index
    %c0_122 = arith.constant 0 : index
    %c0_123 = arith.constant 0 : index
    %275 = vector.load %arg6[%c1_121, %c0_122, %c0_123] : memref<2x1x32xf32, #tpu.memory_space<vmem>>, vector<1x1x32xf32>
    %276 = vector.shape_cast %275 : vector<1x1x32xf32> to vector<1x32xf32>
    %277 = vector.broadcast %276 : vector<1x32xf32> to vector<16x32xf32>
    %278 = arith.addf %274, %277 : vector<16x32xf32>
    %279 = arith.addf %204, %278 : vector<16x32xf32>
    %cst_124 = arith.constant dense<0.000000e+00> : vector<16xf32>
    %280 = vector.multi_reduction <add>, %279, %cst_124 [1] : vector<16x32xf32> to vector<16xf32>
    %281 = vector.shape_cast %280 : vector<16xf32> to vector<16x1xf32>
    %cst_125 = arith.constant 3.200000e+01 : f32
    %282 = vector.broadcast %cst_125 : f32 to vector<16x1xf32>
    %283 = arith.divf %281, %282 : vector<16x1xf32>
    %284 = vector.broadcast %283 : vector<16x1xf32> to vector<16x32xf32>
    %285 = arith.subf %279, %284 : vector<16x32xf32>
    %286 = arith.mulf %285, %285 : vector<16x32xf32>
    %cst_126 = arith.constant dense<0.000000e+00> : vector<16xf32>
    %287 = vector.multi_reduction <add>, %286, %cst_126 [1] : vector<16x32xf32> to vector<16xf32>
    %288 = vector.shape_cast %287 : vector<16xf32> to vector<16x1xf32>
    %cst_127 = arith.constant 3.200000e+01 : f32
    %289 = vector.broadcast %cst_127 : f32 to vector<16x1xf32>
    %290 = arith.divf %288, %289 : vector<16x1xf32>
    %291 = vector.broadcast %283 : vector<16x1xf32> to vector<16x32xf32>
    %292 = arith.subf %279, %291 : vector<16x32xf32>
    %cst_128 = arith.constant 9.99999974E-6 : f32
    %293 = vector.broadcast %cst_128 : f32 to vector<16x1xf32>
    %294 = arith.addf %290, %293 : vector<16x1xf32>
    %295 = math.rsqrt %294 : vector<16x1xf32>
    %296 = vector.broadcast %295 : vector<16x1xf32> to vector<16x32xf32>
    %297 = arith.mulf %292, %296 : vector<16x32xf32>
    %298 = vector.broadcast %206 : vector<1x32xf32> to vector<16x32xf32>
    %299 = arith.mulf %297, %298 : vector<16x32xf32>
    %300 = vector.broadcast %208 : vector<1x32xf32> to vector<16x32xf32>
    %301 = arith.addf %299, %300 : vector<16x32xf32>
    %302 = arith.truncf %301 : vector<16x32xf32> to vector<16x32xbf16>
    %c1_129 = arith.constant 1 : index
    %c0_130 = arith.constant 0 : index
    %c0_131 = arith.constant 0 : index
    %303 = vector.load %arg9[%c1_129, %c0_130, %c0_131] : memref<2x32x128xbf16, #tpu.memory_space<vmem>>, vector<1x32x128xbf16>
    %304 = vector.shape_cast %303 : vector<1x32x128xbf16> to vector<32x128xbf16>
    %cst_132 = arith.constant dense<0.000000e+00> : vector<16x128xf32>
    %305 = tpu.matmul %302, %304, %cst_132 {dimension_numbers = #tpu.dot_dimension_numbers<[1], [0], [0], [1], [0, 0, 1, 1], [], []>} : vector<16x32xbf16>, vector<32x128xbf16>, vector<16x128xf32> -> vector<16x128xf32>
    %c1_133 = arith.constant 1 : index
    %c0_134 = arith.constant 0 : index
    %c0_135 = arith.constant 0 : index
    %306 = vector.load %arg10[%c1_133, %c0_134, %c0_135] : memref<2x1x128xf32, #tpu.memory_space<vmem>>, vector<1x1x128xf32>
    %307 = vector.shape_cast %306 : vector<1x1x128xf32> to vector<1x128xf32>
    %308 = vector.broadcast %307 : vector<1x128xf32> to vector<16x128xf32>
    %309 = arith.addf %305, %308 : vector<16x128xf32>
    %cst_136 = arith.constant 0.000000e+00 : f32
    %310 = vector.broadcast %cst_136 : f32 to vector<16x128xf32>
    %311 = arith.maximumf %309, %310 : vector<16x128xf32>
    %312 = arith.truncf %311 : vector<16x128xf32> to vector<16x128xbf16>
    %c1_137 = arith.constant 1 : index
    %c0_138 = arith.constant 0 : index
    %c0_139 = arith.constant 0 : index
    %313 = vector.load %arg11[%c1_137, %c0_138, %c0_139] : memref<2x128x32xbf16, #tpu.memory_space<vmem>>, vector<1x128x32xbf16>
    %314 = vector.shape_cast %313 : vector<1x128x32xbf16> to vector<128x32xbf16>
    %cst_140 = arith.constant dense<0.000000e+00> : vector<16x32xf32>
    %315 = tpu.matmul %312, %314, %cst_140 {dimension_numbers = #tpu.dot_dimension_numbers<[1], [0], [0], [1], [0, 0, 1, 1], [], []>} : vector<16x128xbf16>, vector<128x32xbf16>, vector<16x32xf32> -> vector<16x32xf32>
    %c1_141 = arith.constant 1 : index
    %c0_142 = arith.constant 0 : index
    %c0_143 = arith.constant 0 : index
    %316 = vector.load %arg12[%c1_141, %c0_142, %c0_143] : memref<2x1x32xf32, #tpu.memory_space<vmem>>, vector<1x1x32xf32>
    %317 = vector.shape_cast %316 : vector<1x1x32xf32> to vector<1x32xf32>
    %318 = vector.broadcast %317 : vector<1x32xf32> to vector<16x32xf32>
    %319 = arith.addf %315, %318 : vector<16x32xf32>
    %320 = arith.addf %301, %319 : vector<16x32xf32>
    %cst_144 = arith.constant dense<0.000000e+00> : vector<16xf32>
    %321 = vector.multi_reduction <add>, %320, %cst_144 [1] : vector<16x32xf32> to vector<16xf32>
    %322 = vector.shape_cast %321 : vector<16xf32> to vector<16x1xf32>
    %cst_145 = arith.constant 3.200000e+01 : f32
    %323 = vector.broadcast %cst_145 : f32 to vector<16x1xf32>
    %324 = arith.divf %322, %323 : vector<16x1xf32>
    %325 = vector.broadcast %324 : vector<16x1xf32> to vector<16x32xf32>
    %326 = arith.subf %320, %325 : vector<16x32xf32>
    %327 = arith.mulf %326, %326 : vector<16x32xf32>
    %cst_146 = arith.constant dense<0.000000e+00> : vector<16xf32>
    %328 = vector.multi_reduction <add>, %327, %cst_146 [1] : vector<16x32xf32> to vector<16xf32>
    %329 = vector.shape_cast %328 : vector<16xf32> to vector<16x1xf32>
    %cst_147 = arith.constant 3.200000e+01 : f32
    %330 = vector.broadcast %cst_147 : f32 to vector<16x1xf32>
    %331 = arith.divf %329, %330 : vector<16x1xf32>
    %332 = vector.broadcast %324 : vector<16x1xf32> to vector<16x32xf32>
    %333 = arith.subf %320, %332 : vector<16x32xf32>
    %cst_148 = arith.constant 9.99999974E-6 : f32
    %334 = vector.broadcast %cst_148 : f32 to vector<16x1xf32>
    %335 = arith.addf %331, %334 : vector<16x1xf32>
    %336 = math.rsqrt %335 : vector<16x1xf32>
    %337 = vector.broadcast %336 : vector<16x1xf32> to vector<16x32xf32>
    %338 = arith.mulf %333, %337 : vector<16x32xf32>
    %339 = vector.broadcast %206 : vector<1x32xf32> to vector<16x32xf32>
    %340 = arith.mulf %338, %339 : vector<16x32xf32>
    %341 = vector.broadcast %208 : vector<1x32xf32> to vector<16x32xf32>
    %342 = arith.addf %340, %341 : vector<16x32xf32>
    %c0_149 = arith.constant 0 : index
    %c0_150 = arith.constant 0 : index
    %343 = vector.load %arg13[%c0_149, %c0_150] : memref<16x32xf32, #tpu.memory_space<vmem>>, vector<16x32xf32>
    tpu.vector_store %arg13[%c0_149, %c0_150], %342 {strides = array<i32>} : memref<16x32xf32, #tpu.memory_space<vmem>>, vector<16x32xf32>,
    return
  }
}

</mosaic_0001>

<llo_original>
// kernel: encoder_forward.1
$region0: #{encoder_forward.1}
  #allocation0 [shape = 'u32[]', space=smem, size = 0x4, offset = 0x4, fixed_abs, tag = 'smem constant byte address 0x4 - core index']
  #allocation1 [shape = 'u32[144,128]{1,0:T(1,128)}', space=vmem, size = 0x12000, scoped, tag = 'internal scratch']
  #allocation2 [shape = 'f32[16,32]{1,0:T(8,128)}', space=vmem, size = 0x2000, scoped, tag = 'scratch operand']
  %s0 = inlined_call_operand.vmem [shape: s32[16], index: 0, kind: input, shape index: {}]
  %s1 = inlined_call_operand.vmem [shape: f32[100,32], index: 1, kind: input, shape index: {}]
  %s2 = inlined_call_operand.vmem [shape: f32[16,32], index: 2, kind: input, shape index: {}]
  %s3 = inlined_call_operand.vmem [shape: bf16[2,32,96], index: 3, kind: input, shape index: {}]
  %s4 = inlined_call_operand.vmem [shape: f32[2,1,96], index: 4, kind: input, shape index: {}]
  %s5 = inlined_call_operand.vmem [shape: bf16[2,32,32], index: 5, kind: input, shape index: {}]
  %s6 = inlined_call_operand.vmem [shape: f32[2,1,32], index: 6, kind: input, shape index: {}]
  %s7 = inlined_call_operand.vmem [shape: f32[2,1,32], index: 7, kind: input, shape index: {}]
  %s8 = inlined_call_operand.vmem [shape: f32[2,1,32], index: 8, kind: input, shape index: {}]
  %s9 = inlined_call_operand.vmem [shape: bf16[2,32,128], index: 9, kind: input, shape index: {}]
  %s10 = inlined_call_operand.vmem [shape: f32[2,1,128], index: 10, kind: input, shape index: {}]
  %s11 = inlined_call_operand.vmem [shape: bf16[2,128,32], index: 11, kind: input, shape index: {}]
  %s12 = inlined_call_operand.vmem [shape: f32[2,1,32], index: 12, kind: input, shape index: {}]
  %s13 = inlined_call_operand.hbm [shape: f32[16,32], index: 13, kind: output, shape index: {}]
  %s14 = sld [smem:[#allocation0]]
  $region66: #{encoder_forward.1} parent=0
    _
  %s16 = ssub.s32 1, %s14
  %s17 = scalar_select 0, %s16, %s14
  $region1: #{encoder_forward.1} parent=0
    #allocation3 [shape = 'u8[512]{0}', space=smem, size = 0x200, scoped, tag = 'input window, operand 0, single buffered']
    #allocation4 [shape = 's32[1]{0}', space=sflag, size = 0x4, scoped, tag = 'scoped memory for encoder_forward.1']
    #allocation5 [shape = 's32[1]{0}', space=sflag, size = 0x4, scoped, tag = 'scoped memory for encoder_forward.1']
    #allocation6 [shape = 'u8[8192]{0}', space=vmem, size = 0x2000, scoped, tag = 'output window, operand 0, single buffered']
    %18 = vsyncpa [#allocation5], 0
    %19 = vsyncpa [#allocation4], 0
    // Predicated region
    $region2: #{encoder_forward.1} parent=1 // pred_check
      _
    $region3: #{encoder_forward.1} parent=1 // pred_check_branch
      %21 = sbr.rel (0) target = $region5
    $region4: #{encoder_forward.1} parent=1 // pred_region
      %s23 = ssub.s32 16, 16
      %24 = vsyncadd [#allocation5], %s23
      %s26 = sshll.u32 %s0, 4
      %s27 = int_to_ptr.vmem [resolvable:$true] %s26
      %29 = dma.vmem_to_smem %s27, 16, [#allocation3], [#allocation5]
    $region5: #{encoder_forward.1} parent=1 // pred_fallthru
      _
    // Predicated region
    $region6: #{encoder_forward.1} parent=1 // pred_check
      _
    $region7: #{encoder_forward.1} parent=1 // pred_check_branch
      %31 = sbr.rel (0) target = $region9
    $region8: #{encoder_forward.1} parent=1 // pred_region
      _
    $region9: #{encoder_forward.1} parent=1 // pred_fallthru
      _
    // Predicated region
    $region10: #{encoder_forward.1} parent=1 // pred_check
      _
    $region11: #{encoder_forward.1} parent=1 // pred_check_branch
      %33 = sbr.rel (0) target = $region13
    $region12: #{encoder_forward.1} parent=1 // pred_region
      _
    $region13: #{encoder_forward.1} parent=1 // pred_fallthru
      _
    // Predicated region
    $region14: #{encoder_forward.1} parent=1 // pred_check
      _
    $region15: #{encoder_forward.1} parent=1 // pred_check_branch
      %35 = sbr.rel (0) target = $region17
    $region16: #{encoder_forward.1} parent=1 // pred_region
      _
    $region17: #{encoder_forward.1} parent=1 // pred_fallthru
      _
    // Predicated region
    $region18: #{encoder_forward.1} parent=1 // pred_check
      _
    $region19: #{encoder_forward.1} parent=1 // pred_check_branch
      %37 = sbr.rel (0) target = $region21
    $region20: #{encoder_forward.1} parent=1 // pred_region
      _
    $region21: #{encoder_forward.1} parent=1 // pred_fallthru
      _
    // Predicated region
    $region22: #{encoder_forward.1} parent=1 // pred_check
      _
    $region23: #{encoder_forward.1} parent=1 // pred_check_branch
      %39 = sbr.rel (0) target = $region25
    $region24: #{encoder_forward.1} parent=1 // pred_region
      _
    $region25: #{encoder_forward.1} parent=1 // pred_fallthru
      _
    // Predicated region
    $region26: #{encoder_forward.1} parent=1 // pred_check
      _
    $region27: #{encoder_forward.1} parent=1 // pred_check_branch
      %41 = sbr.rel (0) target = $region29
    $region28: #{encoder_forward.1} parent=1 // pred_region
      _
    $region29: #{encoder_forward.1} parent=1 // pred_fallthru
      _
    // Predicated region
    $region30: #{encoder_forward.1} parent=1 // pred_check
      _
    $region31: #{encoder_forward.1} parent=1 // pred_check_branch
      %43 = sbr.rel (0) target = $region33
    $region32: #{encoder_forward.1} parent=1 // pred_region
      _
    $region33: #{encoder_forward.1} parent=1 // pred_fallthru
      _
    // Predicated region
    $region34: #{encoder_forward.1} parent=1 // pred_check
      _
    $region35: #{encoder_forward.1} parent=1 // pred_check_branch
      %45 = sbr.rel (0) target = $region37
    $region36: #{encoder_forward.1} parent=1 // pred_region
      _
    $region37: #{encoder_forward.1} parent=1 // pred_fallthru
      _
    // Predicated region
    $region38: #{encoder_forward.1} parent=1 // pred_check
      _
    $region39: #{encoder_forward.1} parent=1 // pred_check_branch
      %47 = sbr.rel (0) target = $region41
    $region40: #{encoder_forward.1} parent=1 // pred_region
      _
    $region41: #{encoder_forward.1} parent=1 // pred_fallthru
      _
    // Predicated region
    $region42: #{encoder_forward.1} parent=1 // pred_check
      _
    $region43: #{encoder_forward.1} parent=1 // pred_check_branch
      %49 = sbr.rel (0) target = $region45
    $region44: #{encoder_forward.1} parent=1 // pred_region
      _
    $region45: #{encoder_forward.1} parent=1 // pred_fallthru
      _
    // Predicated region
    $region46: #{encoder_forward.1} parent=1 // pred_check
      _
    $region47: #{encoder_forward.1} parent=1 // pred_check_branch
      %51 = sbr.rel (0) target = $region49
    $region48: #{encoder_forward.1} parent=1 // pred_region
      _
    $region49: #{encoder_forward.1} parent=1 // pred_fallthru
      _
    // Predicated region
    $region50: #{encoder_forward.1} parent=1 // pred_check
      _
    $region51: #{encoder_forward.1} parent=1 // pred_check_branch
      %53 = sbr.rel (0) target = $region53
    $region52: #{encoder_forward.1} parent=1 // pred_region
      _
    $region53: #{encoder_forward.1} parent=1 // pred_fallthru
      _
    // Predicated region
    $region54: #{encoder_forward.1} parent=1 // pred_check
      _
    $region55: #{encoder_forward.1} parent=1 // pred_check_branch
      %55 = sbr.rel (0) target = $region57
    $region56: #{encoder_forward.1} parent=1 // pred_region
      %56 = dma.done [#allocation5], 16
    $region57: #{encoder_forward.1} parent=1 // pred_fallthru
      _
    %57 = sfence
    %s59 = sld [smem:[#allocation3]]
    %s60 = scalar_lea.vmem %s1, %s59
    %v61 = vld [vmem:[%s60] sm:$0x1]
    %vm62 = vcmask 253952
    %63 = vst.msk [vmem:[#allocation2] sm:$0x1] %vm62, %v61
    %s64 = sld [smem:[#allocation3 + $0x1]]
    %s65 = scalar_lea.vmem %s1, %s64
    %v66 = vld [vmem:[%s65] sm:$0x1]
    %67 = vst.msk [vmem:[#allocation2 + $0x1] sm:$0x1] %vm62, %v66
    %s68 = sld [smem:[#allocation3 + $0x2]]
    %s69 = scalar_lea.vmem %s1, %s68
    %v70 = vld [vmem:[%s69] sm:$0x1]
    %71 = vst.msk [vmem:[#allocation2 + $0x2] sm:$0x1] %vm62, %v70
    %s72 = sld [smem:[#allocation3 + $0x3]]
    %s73 = scalar_lea.vmem %s1, %s72
    %v74 = vld [vmem:[%s73] sm:$0x1]
    %75 = vst.msk [vmem:[#allocation2 + $0x3] sm:$0x1] %vm62, %v74
    %s76 = sld [smem:[#allocation3 + $0x4]]
    %s77 = scalar_lea.vmem %s1, %s76
    %v78 = vld [vmem:[%s77] sm:$0x1]
    %79 = vst.msk [vmem:[#allocation2 + $0x4] sm:$0x1] %vm62, %v78
    %s80 = sld [smem:[#allocation3 + $0x5]]
    %s81 = scalar_lea.vmem %s1, %s80
    %v82 = vld [vmem:[%s81] sm:$0x1]
    %83 = vst.msk [vmem:[#allocation2 + $0x5] sm:$0x1] %vm62, %v82
    %s84 = sld [smem:[#allocation3 + $0x6]]
    %s85 = scalar_lea.vmem %s1, %s84
    %v86 = vld [vmem:[%s85] sm:$0x1]
    %87 = vst.msk [vmem:[#allocation2 + $0x6] sm:$0x1] %vm62, %v86
    %s88 = sld [smem:[#allocation3 + $0x7]]
    %s89 = scalar_lea.vmem %s1, %s88
    %v90 = vld [vmem:[%s89] sm:$0x1]
    %91 = vst.msk [vmem:[#allocation2 + $0x7] sm:$0x1] %vm62, %v90
    %s92 = sld [smem:[#allocation3 + $0x8]]
    %s93 = scalar_lea.vmem %s1, %s92
    %v94 = vld [vmem:[%s93] sm:$0x1]
    %95 = vst.msk [vmem:[#allocation2 + $0x8] sm:$0x1] %vm62, %v94
    %s96 = sld [smem:[#allocation3 + $0x9]]
    %s97 = scalar_lea.vmem %s1, %s96
    %v98 = vld [vmem:[%s97] sm:$0x1]
    %99 = vst.msk [vmem:[#allocation2 + $0x9] sm:$0x1] %vm62, %v98
    %s100 = sld [smem:[#allocation3 + $0xa]]
    %s101 = scalar_lea.vmem %s1, %s100
    %v102 = vld [vmem:[%s101] sm:$0x1]
    %103 = vst.msk [vmem:[#allocation2 + $0xa] sm:$0x1] %vm62, %v102
    %s104 = sld [smem:[#allocation3 + $0xb]]
    %s105 = scalar_lea.vmem %s1, %s104
    %v106 = vld [vmem:[%s105] sm:$0x1]
    %107 = vst.msk [vmem:[#allocation2 + $0xb] sm:$0x1] %vm62, %v106
    %s108 = sld [smem:[#allocation3 + $0xc]]
    %s109 = scalar_lea.vmem %s1, %s108
    %v110 = vld [vmem:[%s109] sm:$0x1]
    %111 = vst.msk [vmem:[#allocation2 + $0xc] sm:$0x1] %vm62, %v110
    %s112 = sld [smem:[#allocation3 + $0xd]]
    %s113 = scalar_lea.vmem %s1, %s112
    %v114 = vld [vmem:[%s113] sm:$0x1]
    %115 = vst.msk [vmem:[#allocation2 + $0xd] sm:$0x1] %vm62, %v114
    %s116 = sld [smem:[#allocation3 + $0xe]]
    %s117 = scalar_lea.vmem %s1, %s116
    %v118 = vld [vmem:[%s117] sm:$0x1]
    %119 = vst.msk [vmem:[#allocation2 + $0xe] sm:$0x1] %vm62, %v118
    %s120 = sld [smem:[#allocation3 + $0xf]]
    %s121 = scalar_lea.vmem %s1, %s120
    %v122 = vld [vmem:[%s121] sm:$0x1]
    %123 = vst.msk [vmem:[#allocation2 + $0xf] sm:$0x1] %vm62, %v122
    %v124 = vld [vmem:[#allocation2] sm:$0xff]
    %v125 = vld [vmem:[#allocation2 + $0x8] sm:$0xff]
    %v126 = vld [vmem:[%s2] sm:$0xff]
    %v127 = vld [vmem:[%s2 + $0x8] sm:$0xff]
    %v128 = vadd.f32 %v124, %v126
    %v129 = vadd.f32 %v125, %v127
    %v130 = vld [vmem:[%s7] sm:$0x1]
    %v131 = vld [vmem:[%s8] sm:$0x1]
    %v132 = vpack.c.bf16 %v129, %v128
    %v133 = vld [vmem:[%s3] sm:$0xf]
    %v134 = vld [vmem:[%s3 + $0x4] sm:$0xf]
    %v135 = vld [vmem:[%s3 + $0x8] sm:$0xf]
    %v136 = vld [vmem:[%s3 + $0xc] sm:$0xf]
    %v137 = vld [vmem:[%s4] sm:$0x1]
    %v139 = vlaneseq
    %v140 = vshrl.u32 %v139, 7
    %v141 = vsub.s32 0, %v140
    %v142 = vrot.slane %v137, %v141
    %v148 = vunpack.c.l.b16 %v133
    %v149 = vunpack.c.l.b16 %v134
    %v150 = vunpack.c.l.b16 %v135
    %v151 = vunpack.c.l.b16 %v136
    %v152 = vpack.c.b16 %v149, %v148
    %v153 = vpack.c.b16 %v151, %v150
    %vm156 = vcmask 261120
    %v158 = vsel %vm156, %v132, 0
    %160 = vmatprep.subr.bf16.mxu0 0
    %161 = vmatpush1.bf16.msra.mxu0 %v152
    %162 = vmatprep.subr.bf16.mxu0 0
    %163 = vmatpush1.bf16.msra.mxu0 %v153
    %164 = vmatprep.subr.bf16.mxu0 0
    %165 = vmatpush1.bf16.msra.mxu0 0
    %166 = vmatprep.subr.bf16.mxu0 0
    %167 = vmatpush1.bf16.msra.mxu0 0
    %168 = vmatprep.subr.bf16.mxu0 0
    %169 = vmatpush1.bf16.msra.mxu0 0
    %170 = vmatprep.subr.bf16.mxu0 0
    %171 = vmatpush1.bf16.msra.mxu0 0
    %172 = vmatprep.subr.bf16.mxu0 0
    %173 = vmatpush1.bf16.msra.mxu0 0
    %174 = vmatprep.subr.bf16.mxu0 0
    %175 = vmatpush1.bf16.msra.mxu0 0
    %176 = vmatprep.subr.bf16.mxu0 0
    %177 = vmatpush1.bf16.msra.mxu0 0
    %178 = vmatprep.subr.bf16.mxu0 0
    %179 = vmatpush1.bf16.msra.mxu0 0
    %180 = vmatprep.subr.bf16.mxu0 0
    %181 = vmatpush1.bf16.msra.mxu0 0
    %182 = vmatprep.subr.bf16.mxu0 0
    %183 = vmatpush1.bf16.msra.mxu0 0
    %184 = vmatprep.subr.bf16.mxu0 0
    %185 = vmatpush1.bf16.msra.mxu0 0
    %186 = vmatprep.subr.bf16.mxu0 0
    %187 = vmatpush1.bf16.msra.mxu0 0
    %188 = vmatprep.subr.bf16.mxu0 0
    %189 = vmatpush1.bf16.msra.mxu0 0
    %190 = vmatprep.subr.bf16.mxu0 0
    %191 = vmatpush1.bf16.msra.mxu0 0
    %192 = vmatprep.mubr.bf16.mxu0 0
    %193 = vmatmul.mubr.bf16.gmra.mrb[0].mxu0 %v158
    %v194 = vpop.f32.mrb[0].mxu0
    %v195 = vadd.f32 %v142, %v194
    %v196 = vpop.f32.mrb[0].mxu0
    %v197 = vpop.f32.mrb[0].mxu0
    %v198 = vadd.f32 %v142, %v197
    %v199 = vpop.f32.mrb[0].mxu0
    %200 = vdwg.mxu0
    %v201 = vpack.c.bf16 %v198, %v195
    %203 = vrot.lane.b32.xlu0 %v201, 120
    %v204 = vpop.permute.xlu0 %203
    %205 = vrot.lane.b32.xlu0 %v201, 112
    %v206 = vpop.permute.xlu0 %205
    %207 = vrot.lane.b32.xlu0 %v201, 104
    %v208 = vpop.permute.xlu0 %207
    %v209 = vunpack.c.l.b16 %v201
    %v210 = vunpack.c.h.b16 %v201
    %v211 = vunpack.c.l.b16 %v204
    %v212 = vunpack.c.h.b16 %v204
    %v213 = vunpack.c.l.b16 %v206
    %v214 = vunpack.c.h.b16 %v206
    %v215 = vunpack.c.l.b16 %v208
    %v216 = vunpack.c.h.b16 %v208
    %v217 = vpack.c.b16 %v209, %v209
    %v218 = vpack.c.b16 %v210, %v210
    %v219 = vpack.c.b16 %v211, %v211
    %v220 = vpack.c.b16 %v212, %v212
    %v221 = vpack.c.b16 %v213, %v213
    %v222 = vpack.c.b16 %v214, %v214
    %v223 = vpack.c.b16 %v215, %v215
    %v224 = vpack.c.b16 %v216, %v216
    %225 = vrot.lane.b32.xlu0 %v217, 96
    %v226 = vpop.permute.xlu0 %225
    %vm227 = vcmask 64512
    %v229 = vsel %vm227, %v217, 0
    %v232 = vsel %vm227, %v226, 0
    %234 = vmatprep.subr.bf16.mxu0 0
    %235 = vmatpush1.bf16.xpose.msra.mxu0 %v232
    %236 = vmatprep.subr.bf16.mxu0 0
    %237 = vmatpush1.bf16.xpose.msra.mxu0 0
    %238 = vmatprep.subr.bf16.mxu0 0
    %239 = vmatpush1.bf16.xpose.msra.mxu0 0
    %240 = vmatprep.subr.bf16.mxu0 0
    %241 = vmatpush1.bf16.xpose.msra.mxu0 0
    %242 = vmatprep.subr.bf16.mxu0 0
    %243 = vmatpush1.bf16.xpose.msra.mxu0 0
    %244 = vmatprep.subr.bf16.mxu0 0
    %245 = vmatpush1.bf16.xpose.msra.mxu0 0
    %246 = vmatprep.subr.bf16.mxu0 0
    %247 = vmatpush1.bf16.xpose.msra.mxu0 0
    %248 = vmatprep.subr.bf16.mxu0 0
    %249 = vmatpush1.bf16.xpose.msra.mxu0 0
    %250 = vmatprep.subr.bf16.mxu0 0
    %251 = vmatpush1.bf16.xpose.msra.mxu0 0
    %252 = vmatprep.subr.bf16.mxu0 0
    %253 = vmatpush1.bf16.xpose.msra.mxu0 0
    %254 = vmatprep.subr.bf16.mxu0 0
    %255 = vmatpush1.bf16.xpose.msra.mxu0 0
    %256 = vmatprep.subr.bf16.mxu0 0
    %257 = vmatpush1.bf16.xpose.msra.mxu0 0
    %258 = vmatprep.subr.bf16.mxu0 0
    %259 = vmatpush1.bf16.xpose.msra.mxu0 0
    %260 = vmatprep.subr.bf16.mxu0 0
    %261 = vmatpush1.bf16.xpose.msra.mxu0 0
    %262 = vmatprep.subr.bf16.mxu0 0
    %263 = vmatpush1.bf16.xpose.msra.mxu0 0
    %264 = vmatprep.subr.bf16.mxu0 0
    %265 = vmatpush1.bf16.xpose.msra.mxu0 0
    %266 = vmatprep.mubr.bf16.mxu0 0
    %267 = vmatmul.mubr.bf16.gmra.mrb[0].mxu0 %v229
    %v268 = vpop.f32.mrb[0].mxu0
    %v269 = vadd.f32 0.0, %v268
    %v270 = vpop.f32.mrb[0].mxu0
    %v271 = vpop.f32.mrb[0].mxu0
    %v272 = vpop.f32.mrb[0].mxu0
    %273 = vdwg.mxu0
    %274 = vrot.lane.b32.xlu0 %v218, 96
    %v275 = vpop.permute.xlu0 %274
    %v277 = vsel %vm227, %v218, 0
    %v280 = vsel %vm227, %v275, 0
    %282 = vmatprep.subr.bf16.mxu0 0
    %283 = vmatpush1.bf16.xpose.msra.mxu0 %v280
    %284 = vmatprep.subr.bf16.mxu0 0
    %285 = vmatpush1.bf16.xpose.msra.mxu0 0
    %286 = vmatprep.subr.bf16.mxu0 0
    %287 = vmatpush1.bf16.xpose.msra.mxu0 0
    %288 = vmatprep.subr.bf16.mxu0 0
    %289 = vmatpush1.bf16.xpose.msra.mxu0 0
    %290 = vmatprep.subr.bf16.mxu0 0
    %291 = vmatpush1.bf16.xpose.msra.mxu0 0
    %292 = vmatprep.subr.bf16.mxu0 0
    %293 = vmatpush1.bf16.xpose.msra.mxu0 0
    %294 = vmatprep.subr.bf16.mxu0 0
    %295 = vmatpush1.bf16.xpose.msra.mxu0 0
    %296 = vmatprep.subr.bf16.mxu0 0
    %297 = vmatpush1.bf16.xpose.msra.mxu0 0
    %298 = vmatprep.subr.bf16.mxu0 0
    %299 = vmatpush1.bf16.xpose.msra.mxu0 0
    %300 = vmatprep.subr.bf16.mxu0 0
    %301 = vmatpush1.bf16.xpose.msra.mxu0 0
    %302 = vmatprep.subr.bf16.mxu0 0
    %303 = vmatpush1.bf16.xpose.msra.mxu0 0
    %304 = vmatprep.subr.bf16.mxu0 0
    %305 = vmatpush1.bf16.xpose.msra.mxu0 0
    %306 = vmatprep.subr.bf16.mxu0 0
    %307 = vmatpush1.bf16.xpose.msra.mxu0 0
    %308 = vmatprep.subr.bf16.mxu0 0
    %309 = vmatpush1.bf16.xpose.msra.mxu0 0
    %310 = vmatprep.subr.bf16.mxu0 0
    %311 = vmatpush1.bf16.xpose.msra.mxu0 0
    %312 = vmatprep.subr.bf16.mxu0 0
    %313 = vmatpush1.bf16.xpose.msra.mxu0 0
    %314 = vmatprep.mubr.bf16.mxu0 0
    %315 = vmatmul.mubr.bf16.gmra.mrb[0].mxu0 %v277
    %v316 = vpop.f32.mrb[0].mxu0
    %v317 = vadd.f32 0.0, %v316
    %v318 = vpop.f32.mrb[0].mxu0
    %v319 = vpop.f32.mrb[0].mxu0
    %v320 = vpop.f32.mrb[0].mxu0
    %321 = vdwg.mxu0
    %322 = vrot.lane.b32.xlu0 %v219, 96
    %v323 = vpop.permute.xlu0 %322
    %v325 = vsel %vm227, %v219, 0
    %v328 = vsel %vm227, %v323, 0
    %330 = vmatprep.subr.bf16.mxu0 0
    %331 = vmatpush1.bf16.xpose.msra.mxu0 %v328
    %332 = vmatprep.subr.bf16.mxu0 0
    %333 = vmatpush1.bf16.xpose.msra.mxu0 0
    %334 = vmatprep.subr.bf16.mxu0 0
    %335 = vmatpush1.bf16.xpose.msra.mxu0 0
    %336 = vmatprep.subr.bf16.mxu0 0
    %337 = vmatpush1.bf16.xpose.msra.mxu0 0
    %338 = vmatprep.subr.bf16.mxu0 0
    %339 = vmatpush1.bf16.xpose.msra.mxu0 0
    %340 = vmatprep.subr.bf16.mxu0 0
    %341 = vmatpush1.bf16.xpose.msra.mxu0 0
    %342 = vmatprep.subr.bf16.mxu0 0
    %343 = vmatpush1.bf16.xpose.msra.mxu0 0
    %344 = vmatprep.subr.bf16.mxu0 0
    %345 = vmatpush1.bf16.xpose.msra.mxu0 0
    %346 = vmatprep.subr.bf16.mxu0 0
    %347 = vmatpush1.bf16.xpose.msra.mxu0 0
    %348 = vmatprep.subr.bf16.mxu0 0
    %349 = vmatpush1.bf16.xpose.msra.mxu0 0
    %350 = vmatprep.subr.bf16.mxu0 0
    %351 = vmatpush1.bf16.xpose.msra.mxu0 0
    %352 = vmatprep.subr.bf16.mxu0 0
    %353 = vmatpush1.bf16.xpose.msra.mxu0 0
    %354 = vmatprep.subr.bf16.mxu0 0
    %355 = vmatpush1.bf16.xpose.msra.mxu0 0
    %356 = vmatprep.subr.bf16.mxu0 0
    %357 = vmatpush1.bf16.xpose.msra.mxu0 0
    %358 = vmatprep.subr.bf16.mxu0 0
    %359 = vmatpush1.bf16.xpose.msra.mxu0 0
    %360 = vmatprep.subr.bf16.mxu0 0
    %361 = vmatpush1.bf16.xpose.msra.mxu0 0
    %362 = vmatprep.mubr.bf16.mxu0 0
    %363 = vmatmul.mubr.bf16.gmra.mrb[0].mxu0 %v325
    %v364 = vpop.f32.mrb[0].mxu0
    %v365 = vadd.f32 0.0, %v364
    %v366 = vpop.f32.mrb[0].mxu0
    %v367 = vpop.f32.mrb[0].mxu0
    %v368 = vpop.f32.mrb[0].mxu0
    %369 = vdwg.mxu0
    %370 = vrot.lane.b32.xlu0 %v220, 96
    %v371 = vpop.permute.xlu0 %370
    %v373 = vsel %vm227, %v220, 0
    %v376 = vsel %vm227, %v371, 0
    %378 = vmatprep.subr.bf16.mxu0 0
    %379 = vmatpush1.bf16.xpose.msra.mxu0 %v376
    %380 = vmatprep.subr.bf16.mxu0 0
    %381 = vmatpush1.bf16.xpose.msra.mxu0 0
    %382 = vmatprep.subr.bf16.mxu0 0
    %383 = vmatpush1.bf16.xpose.msra.mxu0 0
    %384 = vmatprep.subr.bf16.mxu0 0
    %385 = vmatpush1.bf16.xpose.msra.mxu0 0
    %386 = vmatprep.subr.bf16.mxu0 0
    %387 = vmatpush1.bf16.xpose.msra.mxu0 0
    %388 = vmatprep.subr.bf16.mxu0 0
    %389 = vmatpush1.bf16.xpose.msra.mxu0 0
    %390 = vmatprep.subr.bf16.mxu0 0
    %391 = vmatpush1.bf16.xpose.msra.mxu0 0
    %392 = vmatprep.subr.bf16.mxu0 0
    %393 = vmatpush1.bf16.xpose.msra.mxu0 0
    %394 = vmatprep.subr.bf16.mxu0 0
    %395 = vmatpush1.bf16.xpose.msra.mxu0 0
    %396 = vmatprep.subr.bf16.mxu0 0
    %397 = vmatpush1.bf16.xpose.msra.mxu0 0
    %398 = vmatprep.subr.bf16.mxu0 0
    %399 = vmatpush1.bf16.xpose.msra.mxu0 0
    %400 = vmatprep.subr.bf16.mxu0 0
    %401 = vmatpush1.bf16.xpose.msra.mxu0 0
    %402 = vmatprep.subr.bf16.mxu0 0
    %403 = vmatpush1.bf16.xpose.msra.mxu0 0
    %404 = vmatprep.subr.bf16.mxu0 0
    %405 = vmatpush1.bf16.xpose.msra.mxu0 0
    %406 = vmatprep.subr.bf16.mxu0 0
    %407 = vmatpush1.bf16.xpose.msra.mxu0 0
    %408 = vmatprep.subr.bf16.mxu0 0
    %409 = vmatpush1.bf16.xpose.msra.mxu0 0
    %410 = vmatprep.mubr.bf16.mxu0 0
    %411 = vmatmul.mubr.bf16.gmra.mrb[0].mxu0 %v373
    %v412 = vpop.f32.mrb[0].mxu0
    %v413 = vadd.f32 0.0, %v412
    %v414 = vpop.f32.mrb[0].mxu0
    %v415 = vpop.f32.mrb[0].mxu0
    %v416 = vpop.f32.mrb[0].mxu0
    %417 = vdwg.mxu0
    %418 = vrot.lane.b32.xlu0 %v221, 96
    %v419 = vpop.permute.xlu0 %418
    %v421 = vsel %vm227, %v221, 0
    %v424 = vsel %vm227, %v419, 0
    %426 = vmatprep.subr.bf16.mxu0 0
    %427 = vmatpush1.bf16.xpose.msra.mxu0 %v424
    %428 = vmatprep.subr.bf16.mxu0 0
    %429 = vmatpush1.bf16.xpose.msra.mxu0 0
    %430 = vmatprep.subr.bf16.mxu0 0
    %431 = vmatpush1.bf16.xpose.msra.mxu0 0
    %432 = vmatprep.subr.bf16.mxu0 0
    %433 = vmatpush1.bf16.xpose.msra.mxu0 0
    %434 = vmatprep.subr.bf16.mxu0 0
    %435 = vmatpush1.bf16.xpose.msra.mxu0 0
    %436 = vmatprep.subr.bf16.mxu0 0
    %437 = vmatpush1.bf16.xpose.msra.mxu0 0
    %438 = vmatprep.subr.bf16.mxu0 0
    %439 = vmatpush1.bf16.xpose.msra.mxu0 0
    %440 = vmatprep.subr.bf16.mxu0 0
    %441 = vmatpush1.bf16.xpose.msra.mxu0 0
    %442 = vmatprep.subr.bf16.mxu0 0
    %443 = vmatpush1.bf16.xpose.msra.mxu0 0
    %444 = vmatprep.subr.bf16.mxu0 0
    %445 = vmatpush1.bf16.xpose.msra.mxu0 0
    %446 = vmatprep.subr.bf16.mxu0 0
    %447 = vmatpush1.bf16.xpose.msra.mxu0 0
    %448 = vmatprep.subr.bf16.mxu0 0
    %449 = vmatpush1.bf16.xpose.msra.mxu0 0
    %450 = vmatprep.subr.bf16.mxu0 0
    %451 = vmatpush1.bf16.xpose.msra.mxu0 0
    %452 = vmatprep.subr.bf16.mxu0 0
    %453 = vmatpush1.bf16.xpose.msra.mxu0 0
    %454 = vmatprep.subr.bf16.mxu0 0
    %455 = vmatpush1.bf16.xpose.msra.mxu0 0
    %456 = vmatprep.subr.bf16.mxu0 0
    %457 = vmatpush1.bf16.xpose.msra.mxu0 0
    %458 = vmatprep.mubr.bf16.mxu0 0
    %459 = vmatmul.mubr.bf16.gmra.mrb[0].mxu0 %v421
    %v460 = vpop.f32.mrb[0].mxu0
    %v461 = vadd.f32 0.0, %v460
    %v462 = vpop.f32.mrb[0].mxu0
    %v463 = vpop.f32.mrb[0].mxu0
    %v464 = vpop.f32.mrb[0].mxu0
    %465 = vdwg.mxu0
    %466 = vrot.lane.b32.xlu0 %v222, 96
    %v467 = vpop.permute.xlu0 %466
    %v469 = vsel %vm227, %v222, 0
    %v472 = vsel %vm227, %v467, 0
    %474 = vmatprep.subr.bf16.mxu0 0
    %475 = vmatpush1.bf16.xpose.msra.mxu0 %v472
    %476 = vmatprep.subr.bf16.mxu0 0
    %477 = vmatpush1.bf16.xpose.msra.mxu0 0
    %478 = vmatprep.subr.bf16.mxu0 0
    %479 = vmatpush1.bf16.xpose.msra.mxu0 0
    %480 = vmatprep.subr.bf16.mxu0 0
    %481 = vmatpush1.bf16.xpose.msra.mxu0 0
    %482 = vmatprep.subr.bf16.mxu0 0
    %483 = vmatpush1.bf16.xpose.msra.mxu0 0
    %484 = vmatprep.subr.bf16.mxu0 0
    %485 = vmatpush1.bf16.xpose.msra.mxu0 0
    %486 = vmatprep.subr.bf16.mxu0 0
    %487 = vmatpush1.bf16.xpose.msra.mxu0 0
    %488 = vmatprep.subr.bf16.mxu0 0
    %489 = vmatpush1.bf16.xpose.msra.mxu0 0
    %490 = vmatprep.subr.bf16.mxu0 0
    %491 = vmatpush1.bf16.xpose.msra.mxu0 0
    %492 = vmatprep.subr.bf16.mxu0 0
    %493 = vmatpush1.bf16.xpose.msra.mxu0 0
    %494 = vmatprep.subr.bf16.mxu0 0
    %495 = vmatpush1.bf16.xpose.msra.mxu0 0
    %496 = vmatprep.subr.bf16.mxu0 0
    %497 = vmatpush1.bf16.xpose.msra.mxu0 0
    %498 = vmatprep.subr.bf16.mxu0 0
    %499 = vmatpush1.bf16.xpose.msra.mxu0 0
    %500 = vmatprep.subr.bf16.mxu0 0
    %501 = vmatpush1.bf16.xpose.msra.mxu0 0
    %502 = vmatprep.subr.bf16.mxu0 0
    %503 = vmatpush1.bf16.xpose.msra.mxu0 0
    %504 = vmatprep.subr.bf16.mxu0 0
    %505 = vmatpush1.bf16.xpose.msra.mxu0 0
    %506 = vmatprep.mubr.bf16.mxu0 0
    %507 = vmatmul.mubr.bf16.gmra.mrb[0].mxu0 %v469
    %v508 = vpop.f32.mrb[0].mxu0
    %v509 = vadd.f32 0.0, %v508
    %v510 = vpop.f32.mrb[0].mxu0
    %v511 = vpop.f32.mrb[0].mxu0
    %v512 = vpop.f32.mrb[0].mxu0
    %513 = vdwg.mxu0
    %514 = vrot.lane.b32.xlu0 %v223, 96
    %v515 = vpop.permute.xlu0 %514
    %v517 = vsel %vm227, %v223, 0
    %v520 = vsel %vm227, %v515, 0
    %522 = vmatprep.subr.bf16.mxu0 0
    %523 = vmatpush1.bf16.xpose.msra.mxu0 %v520
    %524 = vmatprep.subr.bf16.mxu0 0
    %525 = vmatpush1.bf16.xpose.msra.mxu0 0
    %526 = vmatprep.subr.bf16.mxu0 0
    %527 = vmatpush1.bf16.xpose.msra.mxu0 0
    %528 = vmatprep.subr.bf16.mxu0 0
    %529 = vmatpush1.bf16.xpose.msra.mxu0 0
    %530 = vmatprep.subr.bf16.mxu0 0
    %531 = vmatpush1.bf16.xpose.msra.mxu0 0
    %532 = vmatprep.subr.bf16.mxu0 0
    %533 = vmatpush1.bf16.xpose.msra.mxu0 0
    %534 = vmatprep.subr.bf16.mxu0 0
    %535 = vmatpush1.bf16.xpose.msra.mxu0 0
    %536 = vmatprep.subr.bf16.mxu0 0
    %537 = vmatpush1.bf16.xpose.msra.mxu0 0
    %538 = vmatprep.subr.bf16.mxu0 0
    %539 = vmatpush1.bf16.xpose.msra.mxu0 0
    %540 = vmatprep.subr.bf16.mxu0 0
    %541 = vmatpush1.bf16.xpose.msra.mxu0 0
    %542 = vmatprep.subr.bf16.mxu0 0
    %543 = vmatpush1.bf16.xpose.msra.mxu0 0
    %544 = vmatprep.subr.bf16.mxu0 0
    %545 = vmatpush1.bf16.xpose.msra.mxu0 0
    %546 = vmatprep.subr.bf16.mxu0 0
    %547 = vmatpush1.bf16.xpose.msra.mxu0 0
    %548 = vmatprep.subr.bf16.mxu0 0
    %549 = vmatpush1.bf16.xpose.msra.mxu0 0
    %550 = vmatprep.subr.bf16.mxu0 0
    %551 = vmatpush1.bf16.xpose.msra.mxu0 0
    %552 = vmatprep.subr.bf16.mxu0 0
    %553 = vmatpush1.bf16.xpose.msra.mxu0 0
    %554 = vmatprep.mubr.bf16.mxu0 0
    %555 = vmatmul.mubr.bf16.gmra.mrb[0].mxu0 %v517
    %v556 = vpop.f32.mrb[0].mxu0
    %v557 = vadd.f32 0.0, %v556
    %v558 = vpop.f32.mrb[0].mxu0
    %v559 = vpop.f32.mrb[0].mxu0
    %v560 = vpop.f32.mrb[0].mxu0
    %561 = vdwg.mxu0
    %562 = vrot.lane.b32.xlu0 %v224, 96
    %v563 = vpop.permute.xlu0 %562
    %v565 = vsel %vm227, %v224, 0
    %v568 = vsel %vm227, %v563, 0
    %570 = vmatprep.subr.bf16.mxu0 0
    %571 = vmatpush1.bf16.xpose.msra.mxu0 %v568
    %572 = vmatprep.subr.bf16.mxu0 0
    %573 = vmatpush1.bf16.xpose.msra.mxu0 0
    %574 = vmatprep.subr.bf16.mxu0 0
    %575 = vmatpush1.bf16.xpose.msra.mxu0 0
    %576 = vmatprep.subr.bf16.mxu0 0
    %577 = vmatpush1.bf16.xpose.msra.mxu0 0
    %578 = vmatprep.subr.bf16.mxu0 0
    %579 = vmatpush1.bf16.xpose.msra.mxu0 0
    %580 = vmatprep.subr.bf16.mxu0 0
    %581 = vmatpush1.bf16.xpose.msra.mxu0 0
    %582 = vmatprep.subr.bf16.mxu0 0
    %583 = vmatpush1.bf16.xpose.msra.mxu0 0
    %584 = vmatprep.subr.bf16.mxu0 0
    %585 = vmatpush1.bf16.xpose.msra.mxu0 0
    %586 = vmatprep.subr.bf16.mxu0 0
    %587 = vmatpush1.bf16.xpose.msra.mxu0 0
    %588 = vmatprep.subr.bf16.mxu0 0
    %589 = vmatpush1.bf16.xpose.msra.mxu0 0
    %590 = vmatprep.subr.bf16.mxu0 0
    %591 = vmatpush1.bf16.xpose.msra.mxu0 0
    %592 = vmatprep.subr.bf16.mxu0 0
    %593 = vmatpush1.bf16.xpose.msra.mxu0 0
    %594 = vmatprep.subr.bf16.mxu0 0
    %595 = vmatpush1.bf16.xpose.msra.mxu0 0
    %596 = vmatprep.subr.bf16.mxu0 0
    %597 = vmatpush1.bf16.xpose.msra.mxu0 0
    %598 = vmatprep.subr.bf16.mxu0 0
    %599 = vmatpush1.bf16.xpose.msra.mxu0 0
    %600 = vmatprep.subr.bf16.mxu0 0
    %601 = vmatpush1.bf16.xpose.msra.mxu0 0
    %602 = vmatprep.mubr.bf16.mxu0 0
    %603 = vmatmul.mubr.bf16.gmra.mrb[0].mxu0 %v565
    %v604 = vpop.f32.mrb[0].mxu0
    %v605 = vadd.f32 0.0, %v604
    %v606 = vpop.f32.mrb[0].mxu0
    %v607 = vpop.f32.mrb[0].mxu0
    %v608 = vpop.f32.mrb[0].mxu0
    %609 = vdwg.mxu0
    %v610 = vsel %vm227, %v269, -inf
    %611 = vmax.xlane.f32.xlu0 %v610
    %v612 = vpop.xlane.xlu0 %611
    %v613 = vsel %vm227, %v317, -inf
    %614 = vmax.xlane.f32.xlu0 %v613
    %v615 = vpop.xlane.xlu0 %614
    %v616 = vsel %vm227, %v365, -inf
    %617 = vmax.xlane.f32.xlu0 %v616
    %v618 = vpop.xlane.xlu0 %617
    %v619 = vsel %vm227, %v413, -inf
    %620 = vmax.xlane.f32.xlu0 %v619
    %v621 = vpop.xlane.xlu0 %620
    %v622 = vsel %vm227, %v461, -inf
    %623 = vmax.xlane.f32.xlu0 %v622
    %v624 = vpop.xlane.xlu0 %623
    %v625 = vsel %vm227, %v509, -inf
    %626 = vmax.xlane.f32.xlu0 %v625
    %v627 = vpop.xlane.xlu0 %626
    %v628 = vsel %vm227, %v557, -inf
    %629 = vmax.xlane.f32.xlu0 %v628
    %v630 = vpop.xlane.xlu0 %629
    %v631 = vsel %vm227, %v605, -inf
    %632 = vmax.xlane.f32.xlu0 %v631
    %v633 = vpop.xlane.xlu0 %632
    %v634 = vsub.f32 %v269, %v612
    %v635 = vsub.f32 %v317, %v615
    %v636 = vsub.f32 %v365, %v618
    %v637 = vsub.f32 %v413, %v621
    %v638 = vsub.f32 %v461, %v624
    %v639 = vsub.f32 %v509, %v627
    %v640 = vsub.f32 %v557, %v630
    %v641 = vsub.f32 %v605, %v633
    %v642 = vmul.f32 %v634, 1.442695
    %v643 = vpow.pop %v642
    %v644 = vmul.f32 %v635, 1.442695
    %v645 = vpow.pop %v644
    %v646 = vmul.f32 %v636, 1.442695
    %v647 = vpow.pop %v646
    %v648 = vmul.f32 %v637, 1.442695
    %v649 = vpow.pop %v648
    %v650 = vmul.f32 %v638, 1.442695
    %v651 = vpow.pop %v650
    %v652 = vmul.f32 %v639, 1.442695
    %v653 = vpow.pop %v652
    %v654 = vmul.f32 %v640, 1.442695
    %v655 = vpow.pop %v654
    %v656 = vmul.f32 %v641, 1.442695
    %v657 = vpow.pop %v656
    %v658 = vsel %vm227, %v643, 0.0
    %659 = vadd.xlane.f32.xlu0 %v658
    %v660 = vpop.xlane.xlu0 %659
    %v661 = vsel %vm227, %v645, 0.0
    %662 = vadd.xlane.f32.xlu0 %v661
    %v663 = vpop.xlane.xlu0 %662
    %v664 = vsel %vm227, %v647, 0.0
    %665 = vadd.xlane.f32.xlu0 %v664
    %v666 = vpop.xlane.xlu0 %665
    %v667 = vsel %vm227, %v649, 0.0
    %668 = vadd.xlane.f32.xlu0 %v667
    %v669 = vpop.xlane.xlu0 %668
    %v670 = vsel %vm227, %v651, 0.0
    %671 = vadd.xlane.f32.xlu0 %v670
    %v672 = vpop.xlane.xlu0 %671
    %v673 = vsel %vm227, %v653, 0.0
    %674 = vadd.xlane.f32.xlu0 %v673
    %v675 = vpop.xlane.xlu0 %674
    %v676 = vsel %vm227, %v655, 0.0
    %677 = vadd.xlane.f32.xlu0 %v676
    %v678 = vpop.xlane.xlu0 %677
    %v679 = vsel %vm227, %v657, 0.0
    %680 = vadd.xlane.f32.xlu0 %v679
    %v681 = vpop.xlane.xlu0 %680
    %v682 = vrcp.pop %v660
    %v683 = vrcp.pop %v663
    %v684 = vrcp.pop %v666
    %v685 = vrcp.pop %v669
    %v686 = vrcp.pop %v672
    %v687 = vrcp.pop %v675
    %v688 = vrcp.pop %v678
    %v689 = vrcp.pop %v681
    %v690 = vmul.f32 %v643, %v682
    %v691 = vmul.f32 %v645, %v683
    %v692 = vmul.f32 %v647, %v684
    %v693 = vmul.f32 %v649, %v685
    %v694 = vmul.f32 %v651, %v686
    %v695 = vmul.f32 %v653, %v687
    %v696 = vmul.f32 %v655, %v688
    %v697 = vmul.f32 %v657, %v689
    %v698 = vpack.c.bf16 %v690, %v690
    %v699 = vpack.c.bf16 %v691, %v691
    %v700 = vpack.c.bf16 %v692, %v692
    %v701 = vpack.c.bf16 %v693, %v693
    %v702 = vpack.c.bf16 %v694, %v694
    %v703 = vpack.c.bf16 %v695, %v695
    %v704 = vpack.c.bf16 %v696, %v696
    %v705 = vpack.c.bf16 %v697, %v697
    %706 = vrot.lane.b32.xlu0 %v217, 64
    %v707 = vpop.permute.xlu0 %706
    %v709 = vsel %vm227, %v698, 0
    %vm711 = vcmask 1043456
    %v713 = vsel %vm711, %v707, 0
    %715 = vmatprep.subr.bf16.mxu0 0
    %716 = vmatpush1.bf16.msra.mxu0 %v713
    %717 = vmatprep.subr.bf16.mxu0 0
    %718 = vmatpush1.bf16.msra.mxu0 0
    %719 = vmatprep.subr.bf16.mxu0 0
    %720 = vmatpush1.bf16.msra.mxu0 0
    %721 = vmatprep.subr.bf16.mxu0 0
    %722 = vmatpush1.bf16.msra.mxu0 0
    %723 = vmatprep.subr.bf16.mxu0 0
    %724 = vmatpush1.bf16.msra.mxu0 0
    %725 = vmatprep.subr.bf16.mxu0 0
    %726 = vmatpush1.bf16.msra.mxu0 0
    %727 = vmatprep.subr.bf16.mxu0 0
    %728 = vmatpush1.bf16.msra.mxu0 0
    %729 = vmatprep.subr.bf16.mxu0 0
    %730 = vmatpush1.bf16.msra.mxu0 0
    %731 = vmatprep.subr.bf16.mxu0 0
    %732 = vmatpush1.bf16.msra.mxu0 0
    %733 = vmatprep.subr.bf16.mxu0 0
    %734 = vmatpush1.bf16.msra.mxu0 0
    %735 = vmatprep.subr.bf16.mxu0 0
    %736 = vmatpush1.bf16.msra.mxu0 0
    %737 = vmatprep.subr.bf16.mxu0 0
    %738 = vmatpush1.bf16.msra.mxu0 0
    %739 = vmatprep.subr.bf16.mxu0 0
    %740 = vmatpush1.bf16.msra.mxu0 0
    %741 = vmatprep.subr.bf16.mxu0 0
    %742 = vmatpush1.bf16.msra.mxu0 0
    %743 = vmatprep.subr.bf16.mxu0 0
    %744 = vmatpush1.bf16.msra.mxu0 0
    %745 = vmatprep.subr.bf16.mxu0 0
    %746 = vmatpush1.bf16.msra.mxu0 0
    %747 = vmatprep.mubr.bf16.mxu0 0
    %748 = vmatmul.mubr.bf16.gmra.mrb[0].mxu0 %v709
    %v749 = vpop.f32.mrb[0].mxu0
    %v750 = vadd.f32 0.0, %v749
    %v751 = vpop.f32.mrb[0].mxu0
    %v752 = vpop.f32.mrb[0].mxu0
    %v753 = vpop.f32.mrb[0].mxu0
    %754 = vdwg.mxu0
    %755 = vrot.lane.b32.xlu0 %v218, 64
    %v756 = vpop.permute.xlu0 %755
    %v758 = vsel %vm227, %v699, 0
    %v761 = vsel %vm711, %v756, 0
    %763 = vmatprep.subr.bf16.mxu0 0
    %764 = vmatpush1.bf16.msra.mxu0 %v761
    %765 = vmatprep.subr.bf16.mxu0 0
    %766 = vmatpush1.bf16.msra.mxu0 0
    %767 = vmatprep.subr.bf16.mxu0 0
    %768 = vmatpush1.bf16.msra.mxu0 0
    %769 = vmatprep.subr.bf16.mxu0 0
    %770 = vmatpush1.bf16.msra.mxu0 0
    %771 = vmatprep.subr.bf16.mxu0 0
    %772 = vmatpush1.bf16.msra.mxu0 0
    %773 = vmatprep.subr.bf16.mxu0 0
    %774 = vmatpush1.bf16.msra.mxu0 0
    %775 = vmatprep.subr.bf16.mxu0 0
    %776 = vmatpush1.bf16.msra.mxu0 0
    %777 = vmatprep.subr.bf16.mxu0 0
    %778 = vmatpush1.bf16.msra.mxu0 0
    %779 = vmatprep.subr.bf16.mxu0 0
    %780 = vmatpush1.bf16.msra.mxu0 0
    %781 = vmatprep.subr.bf16.mxu0 0
    %782 = vmatpush1.bf16.msra.mxu0 0
    %783 = vmatprep.subr.bf16.mxu0 0
    %784 = vmatpush1.bf16.msra.mxu0 0
    %785 = vmatprep.subr.bf16.mxu0 0
    %786 = vmatpush1.bf16.msra.mxu0 0
    %787 = vmatprep.subr.bf16.mxu0 0
    %788 = vmatpush1.bf16.msra.mxu0 0
    %789 = vmatprep.subr.bf16.mxu0 0
    %790 = vmatpush1.bf16.msra.mxu0 0
    %791 = vmatprep.subr.bf16.mxu0 0
    %792 = vmatpush1.bf16.msra.mxu0 0
    %793 = vmatprep.subr.bf16.mxu0 0
    %794 = vmatpush1.bf16.msra.mxu0 0
    %795 = vmatprep.mubr.bf16.mxu0 0
    %796 = vmatmul.mubr.bf16.gmra.mrb[0].mxu0 %v758
    %v797 = vpop.f32.mrb[0].mxu0
    %v798 = vadd.f32 0.0, %v797
    %v799 = vpop.f32.mrb[0].mxu0
    %v800 = vpop.f32.mrb[0].mxu0
    %v801 = vpop.f32.mrb[0].mxu0
    %802 = vdwg.mxu0
    %803 = vrot.lane.b32.xlu0 %v219, 64
    %v804 = vpop.permute.xlu0 %803
    %v806 = vsel %vm227, %v700, 0
    %v809 = vsel %vm711, %v804, 0
    %811 = vmatprep.subr.bf16.mxu0 0
    %812 = vmatpush1.bf16.msra.mxu0 %v809
    %813 = vmatprep.subr.bf16.mxu0 0
    %814 = vmatpush1.bf16.msra.mxu0 0
    %815 = vmatprep.subr.bf16.mxu0 0
    %816 = vmatpush1.bf16.msra.mxu0 0
    %817 = vmatprep.subr.bf16.mxu0 0
    %818 = vmatpush1.bf16.msra.mxu0 0
    %819 = vmatprep.subr.bf16.mxu0 0
    %820 = vmatpush1.bf16.msra.mxu0 0
    %821 = vmatprep.subr.bf16.mxu0 0
    %822 = vmatpush1.bf16.msra.mxu0 0
    %823 = vmatprep.subr.bf16.mxu0 0
    %824 = vmatpush1.bf16.msra.mxu0 0
    %825 = vmatprep.subr.bf16.mxu0 0
    %826 = vmatpush1.bf16.msra.mxu0 0
    %827 = vmatprep.subr.bf16.mxu0 0
    %828 = vmatpush1.bf16.msra.mxu0 0
    %829 = vmatprep.subr.bf16.mxu0 0
    %830 = vmatpush1.bf16.msra.mxu0 0
    %831 = vmatprep.subr.bf16.mxu0 0
    %832 = vmatpush1.bf16.msra.mxu0 0
    %833 = vmatprep.subr.bf16.mxu0 0
    %834 = vmatpush1.bf16.msra.mxu0 0
    %835 = vmatprep.subr.bf16.mxu0 0
    %836 = vmatpush1.bf16.msra.mxu0 0
    %837 = vmatprep.subr.bf16.mxu0 0
    %838 = vmatpush1.bf16.msra.mxu0 0
    %839 = vmatprep.subr.bf16.mxu0 0
    %840 = vmatpush1.bf16.msra.mxu0 0
    %841 = vmatprep.subr.bf16.mxu0 0
    %842 = vmatpush1.bf16.msra.mxu0 0
    %843 = vmatprep.mubr.bf16.mxu0 0
    %844 = vmatmul.mubr.bf16.gmra.mrb[0].mxu0 %v806
    %v845 = vpop.f32.mrb[0].mxu0
    %v846 = vadd.f32 0.0, %v845
    %v847 = vpop.f32.mrb[0].mxu0
    %v848 = vpop.f32.mrb[0].mxu0
    %v849 = vpop.f32.mrb[0].mxu0
    %850 = vdwg.mxu0
    %851 = vrot.lane.b32.xlu0 %v220, 64
    %v852 = vpop.permute.xlu0 %851
    %v854 = vsel %vm227, %v701, 0
    %v857 = vsel %vm711, %v852, 0
    %859 = vmatprep.subr.bf16.mxu0 0
    %860 = vmatpush1.bf16.msra.mxu0 %v857
    %861 = vmatprep.subr.bf16.mxu0 0
    %862 = vmatpush1.bf16.msra.mxu0 0
    %863 = vmatprep.subr.bf16.mxu0 0
    %864 = vmatpush1.bf16.msra.mxu0 0
    %865 = vmatprep.subr.bf16.mxu0 0
    %866 = vmatpush1.bf16.msra.mxu0 0
    %867 = vmatprep.subr.bf16.mxu0 0
    %868 = vmatpush1.bf16.msra.mxu0 0
    %869 = vmatprep.subr.bf16.mxu0 0
    %870 = vmatpush1.bf16.msra.mxu0 0
    %871 = vmatprep.subr.bf16.mxu0 0
    %872 = vmatpush1.bf16.msra.mxu0 0
    %873 = vmatprep.subr.bf16.mxu0 0
    %874 = vmatpush1.bf16.msra.mxu0 0
    %875 = vmatprep.subr.bf16.mxu0 0
    %876 = vmatpush1.bf16.msra.mxu0 0
    %877 = vmatprep.subr.bf16.mxu0 0
    %878 = vmatpush1.bf16.msra.mxu0 0
    %879 = vmatprep.subr.bf16.mxu0 0
    %880 = vmatpush1.bf16.msra.mxu0 0
    %881 = vmatprep.subr.bf16.mxu0 0
    %882 = vmatpush1.bf16.msra.mxu0 0
    %883 = vmatprep.subr.bf16.mxu0 0
    %884 = vmatpush1.bf16.msra.mxu0 0
    %885 = vmatprep.subr.bf16.mxu0 0
    %886 = vmatpush1.bf16.msra.mxu0 0
    %887 = vmatprep.subr.bf16.mxu0 0
    %888 = vmatpush1.bf16.msra.mxu0 0
    %889 = vmatprep.subr.bf16.mxu0 0
    %890 = vmatpush1.bf16.msra.mxu0 0
    %891 = vmatprep.mubr.bf16.mxu0 0
    %892 = vmatmul.mubr.bf16.gmra.mrb[0].mxu0 %v854
    %v893 = vpop.f32.mrb[0].mxu0
    %v894 = vadd.f32 0.0, %v893
    %v895 = vpop.f32.mrb[0].mxu0
    %v896 = vpop.f32.mrb[0].mxu0
    %v897 = vpop.f32.mrb[0].mxu0
    %898 = vdwg.mxu0
    %899 = vrot.lane.b32.xlu0 %v221, 64
    %v900 = vpop.permute.xlu0 %899
    %v902 = vsel %vm227, %v702, 0
    %v905 = vsel %vm711, %v900, 0
    %907 = vmatprep.subr.bf16.mxu0 0
    %908 = vmatpush1.bf16.msra.mxu0 %v905
    %909 = vmatprep.subr.bf16.mxu0 0
    %910 = vmatpush1.bf16.msra.mxu0 0
    %911 = vmatprep.subr.bf16.mxu0 0
    %912 = vmatpush1.bf16.msra.mxu0 0
    %913 = vmatprep.subr.bf16.mxu0 0
    %914 = vmatpush1.bf16.msra.mxu0 0
    %915 = vmatprep.subr.bf16.mxu0 0
    %916 = vmatpush1.bf16.msra.mxu0 0
    %917 = vmatprep.subr.bf16.mxu0 0
    %918 = vmatpush1.bf16.msra.mxu0 0
    %919 = vmatprep.subr.bf16.mxu0 0
    %920 = vmatpush1.bf16.msra.mxu0 0
    %921 = vmatprep.subr.bf16.mxu0 0
    %922 = vmatpush1.bf16.msra.mxu0 0
    %923 = vmatprep.subr.bf16.mxu0 0
    %924 = vmatpush1.bf16.msra.mxu0 0
    %925 = vmatprep.subr.bf16.mxu0 0
    %926 = vmatpush1.bf16.msra.mxu0 0
    %927 = vmatprep.subr.bf16.mxu0 0
    %928 = vmatpush1.bf16.msra.mxu0 0
    %929 = vmatprep.subr.bf16.mxu0 0
    %930 = vmatpush1.bf16.msra.mxu0 0
    %931 = vmatprep.subr.bf16.mxu0 0
    %932 = vmatpush1.bf16.msra.mxu0 0
    %933 = vmatprep.subr.bf16.mxu0 0
    %934 = vmatpush1.bf16.msra.mxu0 0
    %935 = vmatprep.subr.bf16.mxu0 0
    %936 = vmatpush1.bf16.msra.mxu0 0
    %937 = vmatprep.subr.bf16.mxu0 0
    %938 = vmatpush1.bf16.msra.mxu0 0
    %939 = vmatprep.mubr.bf16.mxu0 0
    %940 = vmatmul.mubr.bf16.gmra.mrb[0].mxu0 %v902
    %v941 = vpop.f32.mrb[0].mxu0
    %v942 = vadd.f32 0.0, %v941
    %v943 = vpop.f32.mrb[0].mxu0
    %v944 = vpop.f32.mrb[0].mxu0
    %v945 = vpop.f32.mrb[0].mxu0
    %946 = vdwg.mxu0
    %947 = vrot.lane.b32.xlu0 %v222, 64
    %v948 = vpop.permute.xlu0 %947
    %v950 = vsel %vm227, %v703, 0
    %v953 = vsel %vm711, %v948, 0
    %955 = vmatprep.subr.bf16.mxu0 0
    %956 = vmatpush1.bf16.msra.mxu0 %v953
    %957 = vmatprep.subr.bf16.mxu0 0
    %958 = vmatpush1.bf16.msra.mxu0 0
    %959 = vmatprep.subr.bf16.mxu0 0
    %960 = vmatpush1.bf16.msra.mxu0 0
    %961 = vmatprep.subr.bf16.mxu0 0
    %962 = vmatpush1.bf16.msra.mxu0 0
    %963 = vmatprep.subr.bf16.mxu0 0
    %964 = vmatpush1.bf16.msra.mxu0 0
    %965 = vmatprep.subr.bf16.mxu0 0
    %966 = vmatpush1.bf16.msra.mxu0 0
    %967 = vmatprep.subr.bf16.mxu0 0
    %968 = vmatpush1.bf16.msra.mxu0 0
    %969 = vmatprep.subr.bf16.mxu0 0
    %970 = vmatpush1.bf16.msra.mxu0 0
    %971 = vmatprep.subr.bf16.mxu0 0
    %972 = vmatpush1.bf16.msra.mxu0 0
    %973 = vmatprep.subr.bf16.mxu0 0
    %974 = vmatpush1.bf16.msra.mxu0 0
    %975 = vmatprep.subr.bf16.mxu0 0
    %976 = vmatpush1.bf16.msra.mxu0 0
    %977 = vmatprep.subr.bf16.mxu0 0
    %978 = vmatpush1.bf16.msra.mxu0 0
    %979 = vmatprep.subr.bf16.mxu0 0
    %980 = vmatpush1.bf16.msra.mxu0 0
    %981 = vmatprep.subr.bf16.mxu0 0
    %982 = vmatpush1.bf16.msra.mxu0 0
    %983 = vmatprep.subr.bf16.mxu0 0
    %984 = vmatpush1.bf16.msra.mxu0 0
    %985 = vmatprep.subr.bf16.mxu0 0
    %986 = vmatpush1.bf16.msra.mxu0 0
    %987 = vmatprep.mubr.bf16.mxu0 0
    %988 = vmatmul.mubr.bf16.gmra.mrb[0].mxu0 %v950
    %v989 = vpop.f32.mrb[0].mxu0
    %v990 = vadd.f32 0.0, %v989
    %v991 = vpop.f32.mrb[0].mxu0
    %v992 = vpop.f32.mrb[0].mxu0
    %v993 = vpop.f32.mrb[0].mxu0
    %994 = vdwg.mxu0
    %995 = vrot.lane.b32.xlu0 %v223, 64
    %v996 = vpop.permute.xlu0 %995
    %v998 = vsel %vm227, %v704, 0
    %v1001 = vsel %vm711, %v996, 0
    %1003 = vmatprep.subr.bf16.mxu0 0
    %1004 = vmatpush1.bf16.msra.mxu0 %v1001
    %1005 = vmatprep.subr.bf16.mxu0 0
    %1006 = vmatpush1.bf16.msra.mxu0 0
    %1007 = vmatprep.subr.bf16.mxu0 0
    %1008 = vmatpush1.bf16.msra.mxu0 0
    %1009 = vmatprep.subr.bf16.mxu0 0
    %1010 = vmatpush1.bf16.msra.mxu0 0
    %1011 = vmatprep.subr.bf16.mxu0 0
    %1012 = vmatpush1.bf16.msra.mxu0 0
    %1013 = vmatprep.subr.bf16.mxu0 0
    %1014 = vmatpush1.bf16.msra.mxu0 0
    %1015 = vmatprep.subr.bf16.mxu0 0
    %1016 = vmatpush1.bf16.msra.mxu0 0
    %1017 = vmatprep.subr.bf16.mxu0 0
    %1018 = vmatpush1.bf16.msra.mxu0 0
    %1019 = vmatprep.subr.bf16.mxu0 0
    %1020 = vmatpush1.bf16.msra.mxu0 0
    %1021 = vmatprep.subr.bf16.mxu0 0
    %1022 = vmatpush1.bf16.msra.mxu0 0
    %1023 = vmatprep.subr.bf16.mxu0 0
    %1024 = vmatpush1.bf16.msra.mxu0 0
    %1025 = vmatprep.subr.bf16.mxu0 0
    %1026 = vmatpush1.bf16.msra.mxu0 0
    %1027 = vmatprep.subr.bf16.mxu0 0
    %1028 = vmatpush1.bf16.msra.mxu0 0
    %1029 = vmatprep.subr.bf16.mxu0 0
    %1030 = vmatpush1.bf16.msra.mxu0 0
    %1031 = vmatprep.subr.bf16.mxu0 0
    %1032 = vmatpush1.bf16.msra.mxu0 0
    %1033 = vmatprep.subr.bf16.mxu0 0
    %1034 = vmatpush1.bf16.msra.mxu0 0
    %1035 = vmatprep.mubr.bf16.mxu0 0
    %1036 = vmatmul.mubr.bf16.gmra.mrb[0].mxu0 %v998
    %v1037 = vpop.f32.mrb[0].mxu0
    %v1038 = vadd.f32 0.0, %v1037
    %v1039 = vpop.f32.mrb[0].mxu0
    %v1040 = vpop.f32.mrb[0].mxu0
    %v1041 = vpop.f32.mrb[0].mxu0
    %1042 = vdwg.mxu0
    %1043 = vrot.lane.b32.xlu0 %v224, 64
    %v1044 = vpop.permute.xlu0 %1043
    %v1046 = vsel %vm227, %v705, 0
    %v1049 = vsel %vm711, %v1044, 0
    %1051 = vmatprep.subr.bf16.mxu0 0
    %1052 = vmatpush1.bf16.msra.mxu0 %v1049
    %1053 = vmatprep.subr.bf16.mxu0 0
    %1054 = vmatpush1.bf16.msra.mxu0 0
    %1055 = vmatprep.subr.bf16.mxu0 0
    %1056 = vmatpush1.bf16.msra.mxu0 0
    %1057 = vmatprep.subr.bf16.mxu0 0
    %1058 = vmatpush1.bf16.msra.mxu0 0
    %1059 = vmatprep.subr.bf16.mxu0 0
    %1060 = vmatpush1.bf16.msra.mxu0 0
    %1061 = vmatprep.subr.bf16.mxu0 0
    %1062 = vmatpush1.bf16.msra.mxu0 0
    %1063 = vmatprep.subr.bf16.mxu0 0
    %1064 = vmatpush1.bf16.msra.mxu0 0
    %1065 = vmatprep.subr.bf16.mxu0 0
    %1066 = vmatpush1.bf16.msra.mxu0 0
    %1067 = vmatprep.subr.bf16.mxu0 0
    %1068 = vmatpush1.bf16.msra.mxu0 0
    %1069 = vmatprep.subr.bf16.mxu0 0
    %1070 = vmatpush1.bf16.msra.mxu0 0
    %1071 = vmatprep.subr.bf16.mxu0 0
    %1072 = vmatpush1.bf16.msra.mxu0 0
    %1073 = vmatprep.subr.bf16.mxu0 0
    %1074 = vmatpush1.bf16.msra.mxu0 0
    %1075 = vmatprep.subr.bf16.mxu0 0
    %1076 = vmatpush1.bf16.msra.mxu0 0
    %1077 = vmatprep.subr.bf16.mxu0 0
    %1078 = vmatpush1.bf16.msra.mxu0 0
    %1079 = vmatprep.subr.bf16.mxu0 0
    %1080 = vmatpush1.bf16.msra.mxu0 0
    %1081 = vmatprep.subr.bf16.mxu0 0
    %1082 = vmatpush1.bf16.msra.mxu0 0
    %1083 = vmatprep.mubr.bf16.mxu0 0
    %1084 = vmatmul.mubr.bf16.gmra.mrb[0].mxu0 %v1046
    %v1085 = vpop.f32.mrb[0].mxu0
    %v1086 = vadd.f32 0.0, %v1085
    %v1087 = vpop.f32.mrb[0].mxu0
    %v1088 = vpop.f32.mrb[0].mxu0
    %v1089 = vpop.f32.mrb[0].mxu0
    %1090 = vdwg.mxu0
    %1093 = vrot.lane.b32.xlu0 %v846, 8
    %v1094 = vpop.permute.xlu0 %1093
    %1095 = vrot.lane.b32.xlu0 %v894, 8
    %v1096 = vpop.permute.xlu0 %1095
    %1101 = vrot.lane.b32.xlu0 %v942, 16
    %v1102 = vpop.permute.xlu0 %1101
    %1103 = vrot.lane.b32.xlu0 %v990, 16
    %v1104 = vpop.permute.xlu0 %1103
    %1109 = vrot.lane.b32.xlu0 %v1038, 24
    %v1110 = vpop.permute.xlu0 %1109
    %1111 = vrot.lane.b32.xlu0 %v1086, 24
    %v1112 = vpop.permute.xlu0 %1111
    %v1115 = vsel %vm227, %v750, %v1094
    %v1116 = vsel %vm227, %v798, %v1096
    %vm1117 = vcmask 130048
    %v1118 = vsel %vm1117, %v1115, %v1102
    %v1119 = vsel %vm1117, %v1116, %v1104
    %vm1120 = vcmask 195584
    %v1121 = vsel %vm1120, %v1118, %v1110
    %v1122 = vsel %vm1120, %v1119, %v1112
    %v1123 = vpack.c.bf16 %v1122, %v1121
    %v1124 = vld [vmem:[%s5] sm:$0xf]
    %v1125 = vld [vmem:[%s5 + $0x4] sm:$0xf]
    %v1126 = vld [vmem:[%s5 + $0x8] sm:$0xf]
    %v1127 = vld [vmem:[%s5 + $0xc] sm:$0xf]
    %v1128 = vld [vmem:[%s6] sm:$0x1]
    %v1130 = vlaneseq
    %v1131 = vshrl.u32 %v1130, 7
    %v1132 = vsub.s32 0, %v1131
    %v1133 = vrot.slane %v1128, %v1132
    %v1139 = vunpack.c.l.b16 %v1124
    %v1140 = vunpack.c.l.b16 %v1125
    %v1141 = vunpack.c.l.b16 %v1126
    %v1142 = vunpack.c.l.b16 %v1127
    %v1143 = vpack.c.b16 %v1140, %v1139
    %v1144 = vpack.c.b16 %v1142, %v1141
    %v1148 = vsel %vm156, %v1123, 0
    %1150 = vmatprep.subr.bf16.mxu0 0
    %1151 = vmatpush1.bf16.msra.mxu0 %v1143
    %1152 = vmatprep.subr.bf16.mxu0 0
    %1153 = vmatpush1.bf16.msra.mxu0 %v1144
    %1154 = vmatprep.subr.bf16.mxu0 0
    %1155 = vmatpush1.bf16.msra.mxu0 0
    %1156 = vmatprep.subr.bf16.mxu0 0
    %1157 = vmatpush1.bf16.msra.mxu0 0
    %1158 = vmatprep.subr.bf16.mxu0 0
    %1159 = vmatpush1.bf16.msra.mxu0 0
    %1160 = vmatprep.subr.bf16.mxu0 0
    %1161 = vmatpush1.bf16.msra.mxu0 0
    %1162 = vmatprep.subr.bf16.mxu0 0
    %1163 = vmatpush1.bf16.msra.mxu0 0
    %1164 = vmatprep.subr.bf16.mxu0 0
    %1165 = vmatpush1.bf16.msra.mxu0 0
    %1166 = vmatprep.subr.bf16.mxu0 0
    %1167 = vmatpush1.bf16.msra.mxu0 0
    %1168 = vmatprep.subr.bf16.mxu0 0
    %1169 = vmatpush1.bf16.msra.mxu0 0
    %1170 = vmatprep.subr.bf16.mxu0 0
    %1171 = vmatpush1.bf16.msra.mxu0 0
    %1172 = vmatprep.subr.bf16.mxu0 0
    %1173 = vmatpush1.bf16.msra.mxu0 0
    %1174 = vmatprep.subr.bf16.mxu0 0
    %1175 = vmatpush1.bf16.msra.mxu0 0
    %1176 = vmatprep.subr.bf16.mxu0 0
    %1177 = vmatpush1.bf16.msra.mxu0 0
    %1178 = vmatprep.subr.bf16.mxu0 0
    %1179 = vmatpush1.bf16.msra.mxu0 0
    %1180 = vmatprep.subr.bf16.mxu0 0
    %1181 = vmatpush1.bf16.msra.mxu0 0
    %1182 = vmatprep.mubr.bf16.mxu0 0
    %1183 = vmatmul.mubr.bf16.gmra.mrb[0].mxu0 %v1148
    %v1184 = vpop.f32.mrb[0].mxu0
    %v1185 = vadd.f32 %v1133, %v1184
    %v1186 = vpop.f32.mrb[0].mxu0
    %v1187 = vpop.f32.mrb[0].mxu0
    %v1188 = vadd.f32 %v1133, %v1187
    %v1189 = vpop.f32.mrb[0].mxu0
    %1190 = vdwg.mxu0
    %v1191 = vadd.f32 %v128, %v1185
    %v1192 = vadd.f32 %v129, %v1188
    %v1193 = vsel %vm156, %v1191, 0.0
    %1194 = vadd.xlane.f32.xlu0 %v1193
    %v1195 = vpop.xlane.xlu0 %1194
    %v1196 = vsel %vm156, %v1192, 0.0
    %1197 = vadd.xlane.f32.xlu0 %v1196
    %v1198 = vpop.xlane.xlu0 %1197
    %v1199 = vrcp.pop 32.0
    %v1200 = vmul.f32 %v1195, %v1199
    %v1201 = vmul.f32 %v1198, %v1199
    %v1202 = vsub.f32 %v1191, %v1200
    %v1203 = vsub.f32 %v1192, %v1201
    %v1204 = vmul.f32 %v1202, %v1202
    %v1205 = vmul.f32 %v1203, %v1203
    %v1206 = vsel %vm156, %v1204, 0.0
    %1207 = vadd.xlane.f32.xlu0 %v1206
    %v1208 = vpop.xlane.xlu0 %1207
    %v1209 = vsel %vm156, %v1205, 0.0
    %1210 = vadd.xlane.f32.xlu0 %v1209
    %v1211 = vpop.xlane.xlu0 %1210
    %v1212 = vmul.f32 %v1208, %v1199
    %v1213 = vmul.f32 %v1211, %v1199
    %v1214 = vadd.f32 %v1212, 1e-05
    %v1215 = vadd.f32 %v1213, 1e-05
    %v1216 = vrsqrt.pop %v1214
    %v1217 = vrsqrt.pop %v1215
    %v1218 = vmul.f32 %v1202, %v1216
    %v1219 = vmul.f32 %v1203, %v1217
    %v1221 = vlaneseq
    %v1222 = vshrl.u32 %v1221, 7
    %v1223 = vsub.s32 0, %v1222
    %v1224 = vrot.slane %v130, %v1223
    %v1226 = vmul.f32 %v1218, %v1224
    %v1227 = vmul.f32 %v1219, %v1224
    %v1229 = vlaneseq
    %v1230 = vshrl.u32 %v1229, 7
    %v1231 = vsub.s32 0, %v1230
    %v1232 = vrot.slane %v131, %v1231
    %v1234 = vadd.f32 %v1226, %v1232
    %v1235 = vadd.f32 %v1227, %v1232
    %v1236 = vpack.c.bf16 %v1235, %v1234
    %v1237 = vld [vmem:[%s9] sm:$0xf]
    %v1238 = vld [vmem:[%s9 + $0x4] sm:$0xf]
    %v1239 = vld [vmem:[%s9 + $0x8] sm:$0xf]
    %v1240 = vld [vmem:[%s9 + $0xc] sm:$0xf]
    %v1241 = vld [vmem:[%s10] sm:$0x1]
    %v1243 = vlaneseq
    %v1244 = vshrl.u32 %v1243, 7
    %v1245 = vsub.s32 0, %v1244
    %v1246 = vrot.slane %v1241, %v1245
    %v1252 = vunpack.c.l.b16 %v1237
    %v1253 = vunpack.c.l.b16 %v1238
    %v1254 = vunpack.c.l.b16 %v1239
    %v1255 = vunpack.c.l.b16 %v1240
    %v1256 = vpack.c.b16 %v1253, %v1252
    %v1257 = vpack.c.b16 %v1255, %v1254
    %v1261 = vsel %vm156, %v1236, 0
    %1263 = vmatprep.subr.bf16.mxu0 0
    %1264 = vmatpush1.bf16.msra.mxu0 %v1256
    %1265 = vmatprep.subr.bf16.mxu0 0
    %1266 = vmatpush1.bf16.msra.mxu0 %v1257
    %1267 = vmatprep.subr.bf16.mxu0 0
    %1268 = vmatpush1.bf16.msra.mxu0 0
    %1269 = vmatprep.subr.bf16.mxu0 0
    %1270 = vmatpush1.bf16.msra.mxu0 0
    %1271 = vmatprep.subr.bf16.mxu0 0
    %1272 = vmatpush1.bf16.msra.mxu0 0
    %1273 = vmatprep.subr.bf16.mxu0 0
    %1274 = vmatpush1.bf16.msra.mxu0 0
    %1275 = vmatprep.subr.bf16.mxu0 0
    %1276 = vmatpush1.bf16.msra.mxu0 0
    %1277 = vmatprep.subr.bf16.mxu0 0
    %1278 = vmatpush1.bf16.msra.mxu0 0
    %1279 = vmatprep.subr.bf16.mxu0 0
    %1280 = vmatpush1.bf16.msra.mxu0 0
    %1281 = vmatprep.subr.bf16.mxu0 0
    %1282 = vmatpush1.bf16.msra.mxu0 0
    %1283 = vmatprep.subr.bf16.mxu0 0
    %1284 = vmatpush1.bf16.msra.mxu0 0
    %1285 = vmatprep.subr.bf16.mxu0 0
    %1286 = vmatpush1.bf16.msra.mxu0 0
    %1287 = vmatprep.subr.bf16.mxu0 0
    %1288 = vmatpush1.bf16.msra.mxu0 0
    %1289 = vmatprep.subr.bf16.mxu0 0
    %1290 = vmatpush1.bf16.msra.mxu0 0
    %1291 = vmatprep.subr.bf16.mxu0 0
    %1292 = vmatpush1.bf16.msra.mxu0 0
    %1293 = vmatprep.subr.bf16.mxu0 0
    %1294 = vmatpush1.bf16.msra.mxu0 0
    %1295 = vmatprep.mubr.bf16.mxu0 0
    %1296 = vmatmul.mubr.bf16.gmra.mrb[0].mxu0 %v1261
    %v1297 = vpop.f32.mrb[0].mxu0
    %v1298 = vadd.f32 %v1246, %v1297
    %v1299 = vpop.f32.mrb[0].mxu0
    %v1300 = vpop.f32.mrb[0].mxu0
    %v1301 = vadd.f32 %v1246, %v1300
    %v1302 = vpop.f32.mrb[0].mxu0
    %1303 = vdwg.mxu0
    %v1304 = vmax.f32 %v1298, 0.0
    %v1305 = vmax.f32 %v1301, 0.0
    %v1306 = vpack.c.bf16 %v1305, %v1304
    %v1307 = vld [vmem:[%s11] sm:$0xf]
    %v1308 = vld [vmem:[%s11 + $0x4] sm:$0xf]
    %v1309 = vld [vmem:[%s11 + $0x8] sm:$0xf]
    %v1310 = vld [vmem:[%s11 + $0xc] sm:$0xf]
    %v1311 = vld [vmem:[%s11 + $0x10] sm:$0xf]
    %v1312 = vld [vmem:[%s11 + $0x14] sm:$0xf]
    %v1313 = vld [vmem:[%s11 + $0x18] sm:$0xf]
    %v1314 = vld [vmem:[%s11 + $0x1c] sm:$0xf]
    %v1315 = vld [vmem:[%s11 + $0x20] sm:$0xf]
    %v1316 = vld [vmem:[%s11 + $0x24] sm:$0xf]
    %v1317 = vld [vmem:[%s11 + $0x28] sm:$0xf]
    %v1318 = vld [vmem:[%s11 + $0x2c] sm:$0xf]
    %v1319 = vld [vmem:[%s11 + $0x30] sm:$0xf]
    %v1320 = vld [vmem:[%s11 + $0x34] sm:$0xf]
    %v1321 = vld [vmem:[%s11 + $0x38] sm:$0xf]
    %v1322 = vld [vmem:[%s11 + $0x3c] sm:$0xf]
    %v1323 = vld [vmem:[%s12] sm:$0x1]
    %v1325 = vlaneseq
    %v1326 = vshrl.u32 %v1325, 7
    %v1327 = vsub.s32 0, %v1326
    %v1328 = vrot.slane %v1323, %v1327
    %v1346 = vunpack.c.l.b16 %v1307
    %v1347 = vunpack.c.l.b16 %v1308
    %v1348 = vunpack.c.l.b16 %v1309
    %v1349 = vunpack.c.l.b16 %v1310
    %v1350 = vunpack.c.l.b16 %v1311
    %v1351 = vunpack.c.l.b16 %v1312
    %v1352 = vunpack.c.l.b16 %v1313
    %v1353 = vunpack.c.l.b16 %v1314
    %v1354 = vunpack.c.l.b16 %v1315
    %v1355 = vunpack.c.l.b16 %v1316
    %v1356 = vunpack.c.l.b16 %v1317
    %v1357 = vunpack.c.l.b16 %v1318
    %v1358 = vunpack.c.l.b16 %v1319
    %v1359 = vunpack.c.l.b16 %v1320
    %v1360 = vunpack.c.l.b16 %v1321
    %v1361 = vunpack.c.l.b16 %v1322
    %v1362 = vpack.c.b16 %v1347, %v1346
    %v1363 = vpack.c.b16 %v1349, %v1348
    %v1364 = vpack.c.b16 %v1351, %v1350
    %v1365 = vpack.c.b16 %v1353, %v1352
    %v1366 = vpack.c.b16 %v1355, %v1354
    %v1367 = vpack.c.b16 %v1357, %v1356
    %v1368 = vpack.c.b16 %v1359, %v1358
    %v1369 = vpack.c.b16 %v1361, %v1360
    %1378 = vmatprep.subr.bf16.mxu0 0
    %1379 = vmatpush1.bf16.msra.mxu0 %v1362
    %1380 = vmatprep.subr.bf16.mxu0 0
    %1381 = vmatpush1.bf16.msra.mxu0 %v1363
    %1382 = vmatprep.subr.bf16.mxu0 0
    %1383 = vmatpush1.bf16.msra.mxu0 %v1364
    %1384 = vmatprep.subr.bf16.mxu0 0
    %1385 = vmatpush1.bf16.msra.mxu0 %v1365
    %1386 = vmatprep.subr.bf16.mxu0 0
    %1387 = vmatpush1.bf16.msra.mxu0 %v1366
    %1388 = vmatprep.subr.bf16.mxu0 0
    %1389 = vmatpush1.bf16.msra.mxu0 %v1367
    %1390 = vmatprep.subr.bf16.mxu0 0
    %1391 = vmatpush1.bf16.msra.mxu0 %v1368
    %1392 = vmatprep.subr.bf16.mxu0 0
    %1393 = vmatpush1.bf16.msra.mxu0 %v1369
    %1394 = vmatprep.subr.bf16.mxu0 0
    %1395 = vmatpush1.bf16.msra.mxu0 0
    %1396 = vmatprep.subr.bf16.mxu0 0
    %1397 = vmatpush1.bf16.msra.mxu0 0
    %1398 = vmatprep.subr.bf16.mxu0 0
    %1399 = vmatpush1.bf16.msra.mxu0 0
    %1400 = vmatprep.subr.bf16.mxu0 0
    %1401 = vmatpush1.bf16.msra.mxu0 0
    %1402 = vmatprep.subr.bf16.mxu0 0
    %1403 = vmatpush1.bf16.msra.mxu0 0
    %1404 = vmatprep.subr.bf16.mxu0 0
    %1405 = vmatpush1.bf16.msra.mxu0 0
    %1406 = vmatprep.subr.bf16.mxu0 0
    %1407 = vmatpush1.bf16.msra.mxu0 0
    %1408 = vmatprep.subr.bf16.mxu0 0
    %1409 = vmatpush1.bf16.msra.mxu0 0
    %1410 = vmatprep.mubr.bf16.mxu0 0
    %1411 = vmatmul.mubr.bf16.gmra.mrb[0].mxu0 %v1306
    %v1412 = vpop.f32.mrb[0].mxu0
    %v1413 = vadd.f32 %v1328, %v1412
    %v1414 = vpop.f32.mrb[0].mxu0
    %v1415 = vpop.f32.mrb[0].mxu0
    %v1416 = vadd.f32 %v1328, %v1415
    %v1417 = vpop.f32.mrb[0].mxu0
    %1418 = vdwg.mxu0
    %v1419 = vadd.f32 %v1234, %v1413
    %v1420 = vadd.f32 %v1235, %v1416
    %v1421 = vsel %vm156, %v1419, 0.0
    %1422 = vadd.xlane.f32.xlu0 %v1421
    %v1423 = vpop.xlane.xlu0 %1422
    %v1424 = vsel %vm156, %v1420, 0.0
    %1425 = vadd.xlane.f32.xlu0 %v1424
    %v1426 = vpop.xlane.xlu0 %1425
    %v1427 = vmul.f32 %v1423, %v1199
    %v1428 = vmul.f32 %v1426, %v1199
    %v1429 = vsub.f32 %v1419, %v1427
    %v1430 = vsub.f32 %v1420, %v1428
    %v1431 = vmul.f32 %v1429, %v1429
    %v1432 = vmul.f32 %v1430, %v1430
    %v1433 = vsel %vm156, %v1431, 0.0
    %1434 = vadd.xlane.f32.xlu0 %v1433
    %v1435 = vpop.xlane.xlu0 %1434
    %v1436 = vsel %vm156, %v1432, 0.0
    %1437 = vadd.xlane.f32.xlu0 %v1436
    %v1438 = vpop.xlane.xlu0 %1437
    %v1439 = vmul.f32 %v1435, %v1199
    %v1440 = vmul.f32 %v1438, %v1199
    %v1441 = vadd.f32 %v1439, 1e-05
    %v1442 = vadd.f32 %v1440, 1e-05
    %v1443 = vrsqrt.pop %v1441
    %v1444 = vrsqrt.pop %v1442
    %v1445 = vmul.f32 %v1429, %v1443
    %v1446 = vmul.f32 %v1430, %v1444
    %v1447 = vmul.f32 %v1445, %v1224
    %v1448 = vmul.f32 %v1446, %v1224
    %v1449 = vadd.f32 %v1447, %v1232
    %v1450 = vadd.f32 %v1448, %v1232
    %s1451 = scalar_lea.vmem %s7, 1
    %v1452 = vld [vmem:[%s1451] sm:$0x1]
    %s1453 = scalar_lea.vmem %s8, 1
    %v1454 = vld [vmem:[%s1453] sm:$0x1]
    %v1455 = vpack.c.bf16 %v1450, %v1449
    %s1456 = scalar_lea.vmem %s3, 16
    %v1457 = vld [vmem:[%s1456] sm:$0xf]
    %v1458 = vld [vmem:[%s1456 + $0x4] sm:$0xf]
    %v1459 = vld [vmem:[%s1456 + $0x8] sm:$0xf]
    %v1460 = vld [vmem:[%s1456 + $0xc] sm:$0xf]
    %s1461 = scalar_lea.vmem %s4, 1
    %v1462 = vld [vmem:[%s1461] sm:$0x1]
    %v1464 = vlaneseq
    %v1465 = vshrl.u32 %v1464, 7
    %v1466 = vsub.s32 0, %v1465
    %v1467 = vrot.slane %v1462, %v1466
    %v1473 = vunpack.c.l.b16 %v1457
    %v1474 = vunpack.c.l.b16 %v1458
    %v1475 = vunpack.c.l.b16 %v1459
    %v1476 = vunpack.c.l.b16 %v1460
    %v1477 = vpack.c.b16 %v1474, %v1473
    %v1478 = vpack.c.b16 %v1476, %v1475
    %v1482 = vsel %vm156, %v1455, 0
    %1484 = vmatprep.subr.bf16.mxu0 0
    %1485 = vmatpush1.bf16.msra.mxu0 %v1477
    %1486 = vmatprep.subr.bf16.mxu0 0
    %1487 = vmatpush1.bf16.msra.mxu0 %v1478
    %1488 = vmatprep.subr.bf16.mxu0 0
    %1489 = vmatpush1.bf16.msra.mxu0 0
    %1490 = vmatprep.subr.bf16.mxu0 0
    %1491 = vmatpush1.bf16.msra.mxu0 0
    %1492 = vmatprep.subr.bf16.mxu0 0
    %1493 = vmatpush1.bf16.msra.mxu0 0
    %1494 = vmatprep.subr.bf16.mxu0 0
    %1495 = vmatpush1.bf16.msra.mxu0 0
    %1496 = vmatprep.subr.bf16.mxu0 0
    %1497 = vmatpush1.bf16.msra.mxu0 0
    %1498 = vmatprep.subr.bf16.mxu0 0
    %1499 = vmatpush1.bf16.msra.mxu0 0
    %1500 = vmatprep.subr.bf16.mxu0 0
    %1501 = vmatpush1.bf16.msra.mxu0 0
    %1502 = vmatprep.subr.bf16.mxu0 0
    %1503 = vmatpush1.bf16.msra.mxu0 0
    %1504 = vmatprep.subr.bf16.mxu0 0
    %1505 = vmatpush1.bf16.msra.mxu0 0
    %1506 = vmatprep.subr.bf16.mxu0 0
    %1507 = vmatpush1.bf16.msra.mxu0 0
    %1508 = vmatprep.subr.bf16.mxu0 0
    %1509 = vmatpush1.bf16.msra.mxu0 0
    %1510 = vmatprep.subr.bf16.mxu0 0
    %1511 = vmatpush1.bf16.msra.mxu0 0
    %1512 = vmatprep.subr.bf16.mxu0 0
    %1513 = vmatpush1.bf16.msra.mxu0 0
    %1514 = vmatprep.subr.bf16.mxu0 0
    %1515 = vmatpush1.bf16.msra.mxu0 0
    %1516 = vmatprep.mubr.bf16.mxu0 0
    %1517 = vmatmul.mubr.bf16.gmra.mrb[0].mxu0 %v1482
    %v1518 = vpop.f32.mrb[0].mxu0
    %v1519 = vadd.f32 %v1467, %v1518
    %v1520 = vpop.f32.mrb[0].mxu0
    %v1521 = vpop.f32.mrb[0].mxu0
    %v1522 = vadd.f32 %v1467, %v1521
    %v1523 = vpop.f32.mrb[0].mxu0
    %1524 = vdwg.mxu0
    %v1525 = vpack.c.bf16 %v1522, %v1519
    %1527 = vrot.lane.b32.xlu0 %v1525, 120
    %v1528 = vpop.permute.xlu0 %1527
    %1529 = vrot.lane.b32.xlu0 %v1525, 112
    %v1530 = vpop.permute.xlu0 %1529
    %1531 = vrot.lane.b32.xlu0 %v1525, 104
    %v1532 = vpop.permute.xlu0 %1531
    %v1533 = vunpack.c.l.b16 %v1525
    %v1534 = vunpack.c.h.b16 %v1525
    %v1535 = vunpack.c.l.b16 %v1528
    %v1536 = vunpack.c.h.b16 %v1528
    %v1537 = vunpack.c.l.b16 %v1530
    %v1538 = vunpack.c.h.b16 %v1530
    %v1539 = vunpack.c.l.b16 %v1532
    %v1540 = vunpack.c.h.b16 %v1532
    %v1541 = vpack.c.b16 %v1533, %v1533
    %v1542 = vpack.c.b16 %v1534, %v1534
    %v1543 = vpack.c.b16 %v1535, %v1535
    %v1544 = vpack.c.b16 %v1536, %v1536
    %v1545 = vpack.c.b16 %v1537, %v1537
    %v1546 = vpack.c.b16 %v1538, %v1538
    %v1547 = vpack.c.b16 %v1539, %v1539
    %v1548 = vpack.c.b16 %v1540, %v1540
    %1549 = vrot.lane.b32.xlu0 %v1541, 96
    %v1550 = vpop.permute.xlu0 %1549
    %v1552 = vsel %vm227, %v1541, 0
    %v1555 = vsel %vm227, %v1550, 0
    %1557 = vmatprep.subr.bf16.mxu0 0
    %1558 = vmatpush1.bf16.xpose.msra.mxu0 %v1555
    %1559 = vmatprep.subr.bf16.mxu0 0
    %1560 = vmatpush1.bf16.xpose.msra.mxu0 0
    %1561 = vmatprep.subr.bf16.mxu0 0
    %1562 = vmatpush1.bf16.xpose.msra.mxu0 0
    %1563 = vmatprep.subr.bf16.mxu0 0
    %1564 = vmatpush1.bf16.xpose.msra.mxu0 0
    %1565 = vmatprep.subr.bf16.mxu0 0
    %1566 = vmatpush1.bf16.xpose.msra.mxu0 0
    %1567 = vmatprep.subr.bf16.mxu0 0
    %1568 = vmatpush1.bf16.xpose.msra.mxu0 0
    %1569 = vmatprep.subr.bf16.mxu0 0
    %1570 = vmatpush1.bf16.xpose.msra.mxu0 0
    %1571 = vmatprep.subr.bf16.mxu0 0
    %1572 = vmatpush1.bf16.xpose.msra.mxu0 0
    %1573 = vmatprep.subr.bf16.mxu0 0
    %1574 = vmatpush1.bf16.xpose.msra.mxu0 0
    %1575 = vmatprep.subr.bf16.mxu0 0
    %1576 = vmatpush1.bf16.xpose.msra.mxu0 0
    %1577 = vmatprep.subr.bf16.mxu0 0
    %1578 = vmatpush1.bf16.xpose.msra.mxu0 0
    %1579 = vmatprep.subr.bf16.mxu0 0
    %1580 = vmatpush1.bf16.xpose.msra.mxu0 0
    %1581 = vmatprep.subr.bf16.mxu0 0
    %1582 = vmatpush1.bf16.xpose.msra.mxu0 0
    %1583 = vmatprep.subr.bf16.mxu0 0
    %1584 = vmatpush1.bf16.xpose.msra.mxu0 0
    %1585 = vmatprep.subr.bf16.mxu0 0
    %1586 = vmatpush1.bf16.xpose.msra.mxu0 0
    %1587 = vmatprep.subr.bf16.mxu0 0
    %1588 = vmatpush1.bf16.xpose.msra.mxu0 0
    %1589 = vmatprep.mubr.bf16.mxu0 0
    %1590 = vmatmul.mubr.bf16.gmra.mrb[0].mxu0 %v1552
    %v1591 = vpop.f32.mrb[0].mxu0
    %v1592 = vadd.f32 0.0, %v1591
    %v1593 = vpop.f32.mrb[0].mxu0
    %v1594 = vpop.f32.mrb[0].mxu0
    %v1595 = vpop.f32.mrb[0].mxu0
    %1596 = vdwg.mxu0
    %1597 = vrot.lane.b32.xlu0 %v1542, 96
    %v1598 = vpop.permute.xlu0 %1597
    %v1600 = vsel %vm227, %v1542, 0
    %v1603 = vsel %vm227, %v1598, 0
    %1605 = vmatprep.subr.bf16.mxu0 0
    %1606 = vmatpush1.bf16.xpose.msra.mxu0 %v1603
    %1607 = vmatprep.subr.bf16.mxu0 0
    %1608 = vmatpush1.bf16.xpose.msra.mxu0 0
    %1609 = vmatprep.subr.bf16.mxu0 0
    %1610 = vmatpush1.bf16.xpose.msra.mxu0 0
    %1611 = vmatprep.subr.bf16.mxu0 0
    %1612 = vmatpush1.bf16.xpose.msra.mxu0 0
    %1613 = vmatprep.subr.bf16.mxu0 0
    %1614 = vmatpush1.bf16.xpose.msra.mxu0 0
    %1615 = vmatprep.subr.bf16.mxu0 0
    %1616 = vmatpush1.bf16.xpose.msra.mxu0 0
    %1617 = vmatprep.subr.bf16.mxu0 0
    %1618 = vmatpush1.bf16.xpose.msra.mxu0 0
    %1619 = vmatprep.subr.bf16.mxu0 0
    %1620 = vmatpush1.bf16.xpose.msra.mxu0 0
    %1621 = vmatprep.subr.bf16.mxu0 0
    %1622 = vmatpush1.bf16.xpose.msra.mxu0 0
    %1623 = vmatprep.subr.bf16.mxu0 0
    %1624 = vmatpush1.bf16.xpose.msra.mxu0 0
    %1625 = vmatprep.subr.bf16.mxu0 0
    %1626 = vmatpush1.bf16.xpose.msra.mxu0 0
    %1627 = vmatprep.subr.bf16.mxu0 0
    %1628 = vmatpush1.bf16.xpose.msra.mxu0 0
    %1629 = vmatprep.subr.bf16.mxu0 0
    %1630 = vmatpush1.bf16.xpose.msra.mxu0 0
    %1631 = vmatprep.subr.bf16.mxu0 0
    %1632 = vmatpush1.bf16.xpose.msra.mxu0 0
    %1633 = vmatprep.subr.bf16.mxu0 0
    %1634 = vmatpush1.bf16.xpose.msra.mxu0 0
    %1635 = vmatprep.subr.bf16.mxu0 0
    %1636 = vmatpush1.bf16.xpose.msra.mxu0 0
    %1637 = vmatprep.mubr.bf16.mxu0 0
    %1638 = vmatmul.mubr.bf16.gmra.mrb[0].mxu0 %v1600
    %v1639 = vpop.f32.mrb[0].mxu0
    %v1640 = vadd.f32 0.0, %v1639
    %v1641 = vpop.f32.mrb[0].mxu0
    %v1642 = vpop.f32.mrb[0].mxu0
    %v1643 = vpop.f32.mrb[0].mxu0
    %1644 = vdwg.mxu0
    %1645 = vrot.lane.b32.xlu0 %v1543, 96
    %v1646 = vpop.permute.xlu0 %1645
    %v1648 = vsel %vm227, %v1543, 0
    %v1651 = vsel %vm227, %v1646, 0
    %1653 = vmatprep.subr.bf16.mxu0 0
    %1654 = vmatpush1.bf16.xpose.msra.mxu0 %v1651
    %1655 = vmatprep.subr.bf16.mxu0 0
    %1656 = vmatpush1.bf16.xpose.msra.mxu0 0
    %1657 = vmatprep.subr.bf16.mxu0 0
    %1658 = vmatpush1.bf16.xpose.msra.mxu0 0
    %1659 = vmatprep.subr.bf16.mxu0 0
    %1660 = vmatpush1.bf16.xpose.msra.mxu0 0
    %1661 = vmatprep.subr.bf16.mxu0 0
    %1662 = vmatpush1.bf16.xpose.msra.mxu0 0
    %1663 = vmatprep.subr.bf16.mxu0 0
    %1664 = vmatpush1.bf16.xpose.msra.mxu0 0
    %1665 = vmatprep.subr.bf16.mxu0 0
    %1666 = vmatpush1.bf16.xpose.msra.mxu0 0
    %1667 = vmatprep.subr.bf16.mxu0 0
    %1668 = vmatpush1.bf16.xpose.msra.mxu0 0
    %1669 = vmatprep.subr.bf16.mxu0 0
    %1670 = vmatpush1.bf16.xpose.msra.mxu0 0
    %1671 = vmatprep.subr.bf16.mxu0 0
    %1672 = vmatpush1.bf16.xpose.msra.mxu0 0
    %1673 = vmatprep.subr.bf16.mxu0 0
    %1674 = vmatpush1.bf16.xpose.msra.mxu0 0
    %1675 = vmatprep.subr.bf16.mxu0 0
    %1676 = vmatpush1.bf16.xpose.msra.mxu0 0
    %1677 = vmatprep.subr.bf16.mxu0 0
    %1678 = vmatpush1.bf16.xpose.msra.mxu0 0
    %1679 = vmatprep.subr.bf16.mxu0 0
    %1680 = vmatpush1.bf16.xpose.msra.mxu0 0
    %1681 = vmatprep.subr.bf16.mxu0 0
    %1682 = vmatpush1.bf16.xpose.msra.mxu0 0
    %1683 = vmatprep.subr.bf16.mxu0 0
    %1684 = vmatpush1.bf16.xpose.msra.mxu0 0
    %1685 = vmatprep.mubr.bf16.mxu0 0
    %1686 = vmatmul.mubr.bf16.gmra.mrb[0].mxu0 %v1648
    %v1687 = vpop.f32.mrb[0].mxu0
    %v1688 = vadd.f32 0.0, %v1687
    %v1689 = vpop.f32.mrb[0].mxu0
    %v1690 = vpop.f32.mrb[0].mxu0
    %v1691 = vpop.f32.mrb[0].mxu0
    %1692 = vdwg.mxu0
    %1693 = vrot.lane.b32.xlu0 %v1544, 96
    %v1694 = vpop.permute.xlu0 %1693
    %v1696 = vsel %vm227, %v1544, 0
    %v1699 = vsel %vm227, %v1694, 0
    %1701 = vmatprep.subr.bf16.mxu0 0
    %1702 = vmatpush1.bf16.xpose.msra.mxu0 %v1699
    %1703 = vmatprep.subr.bf16.mxu0 0
    %1704 = vmatpush1.bf16.xpose.msra.mxu0 0
    %1705 = vmatprep.subr.bf16.mxu0 0
    %1706 = vmatpush1.bf16.xpose.msra.mxu0 0
    %1707 = vmatprep.subr.bf16.mxu0 0
    %1708 = vmatpush1.bf16.xpose.msra.mxu0 0
    %1709 = vmatprep.subr.bf16.mxu0 0
    %1710 = vmatpush1.bf16.xpose.msra.mxu0 0
    %1711 = vmatprep.subr.bf16.mxu0 0
    %1712 = vmatpush1.bf16.xpose.msra.mxu0 0
    %1713 = vmatprep.subr.bf16.mxu0 0
    %1714 = vmatpush1.bf16.xpose.msra.mxu0 0
    %1715 = vmatprep.subr.bf16.mxu0 0
    %1716 = vmatpush1.bf16.xpose.msra.mxu0 0
    %1717 = vmatprep.subr.bf16.mxu0 0
    %1718 = vmatpush1.bf16.xpose.msra.mxu0 0
    %1719 = vmatprep.subr.bf16.mxu0 0
    %1720 = vmatpush1.bf16.xpose.msra.mxu0 0
    %1721 = vmatprep.subr.bf16.mxu0 0
    %1722 = vmatpush1.bf16.xpose.msra.mxu0 0
    %1723 = vmatprep.subr.bf16.mxu0 0
    %1724 = vmatpush1.bf16.xpose.msra.mxu0 0
    %1725 = vmatprep.subr.bf16.mxu0 0
    %1726 = vmatpush1.bf16.xpose.msra.mxu0 0
    %1727 = vmatprep.subr.bf16.mxu0 0
    %1728 = vmatpush1.bf16.xpose.msra.mxu0 0
    %1729 = vmatprep.subr.bf16.mxu0 0
    %1730 = vmatpush1.bf16.xpose.msra.mxu0 0
    %1731 = vmatprep.subr.bf16.mxu0 0
    %1732 = vmatpush1.bf16.xpose.msra.mxu0 0
    %1733 = vmatprep.mubr.bf16.mxu0 0
    %1734 = vmatmul.mubr.bf16.gmra.mrb[0].mxu0 %v1696
    %v1735 = vpop.f32.mrb[0].mxu0
    %v1736 = vadd.f32 0.0, %v1735
    %v1737 = vpop.f32.mrb[0].mxu0
    %v1738 = vpop.f32.mrb[0].mxu0
    %v1739 = vpop.f32.mrb[0].mxu0
    %1740 = vdwg.mxu0
    %1741 = vrot.lane.b32.xlu0 %v1545, 96
    %v1742 = vpop.permute.xlu0 %1741
    %v1744 = vsel %vm227, %v1545, 0
    %v1747 = vsel %vm227, %v1742, 0
    %1749 = vmatprep.subr.bf16.mxu0 0
    %1750 = vmatpush1.bf16.xpose.msra.mxu0 %v1747
    %1751 = vmatprep.subr.bf16.mxu0 0
    %1752 = vmatpush1.bf16.xpose.msra.mxu0 0
    %1753 = vmatprep.subr.bf16.mxu0 0
    %1754 = vmatpush1.bf16.xpose.msra.mxu0 0
    %1755 = vmatprep.subr.bf16.mxu0 0
    %1756 = vmatpush1.bf16.xpose.msra.mxu0 0
    %1757 = vmatprep.subr.bf16.mxu0 0
    %1758 = vmatpush1.bf16.xpose.msra.mxu0 0
    %1759 = vmatprep.subr.bf16.mxu0 0
    %1760 = vmatpush1.bf16.xpose.msra.mxu0 0
    %1761 = vmatprep.subr.bf16.mxu0 0
    %1762 = vmatpush1.bf16.xpose.msra.mxu0 0
    %1763 = vmatprep.subr.bf16.mxu0 0
    %1764 = vmatpush1.bf16.xpose.msra.mxu0 0
    %1765 = vmatprep.subr.bf16.mxu0 0
    %1766 = vmatpush1.bf16.xpose.msra.mxu0 0
    %1767 = vmatprep.subr.bf16.mxu0 0
    %1768 = vmatpush1.bf16.xpose.msra.mxu0 0
    %1769 = vmatprep.subr.bf16.mxu0 0
    %1770 = vmatpush1.bf16.xpose.msra.mxu0 0
    %1771 = vmatprep.subr.bf16.mxu0 0
    %1772 = vmatpush1.bf16.xpose.msra.mxu0 0
    %1773 = vmatprep.subr.bf16.mxu0 0
    %1774 = vmatpush1.bf16.xpose.msra.mxu0 0
    %1775 = vmatprep.subr.bf16.mxu0 0
    %1776 = vmatpush1.bf16.xpose.msra.mxu0 0
    %1777 = vmatprep.subr.bf16.mxu0 0
    %1778 = vmatpush1.bf16.xpose.msra.mxu0 0
    %1779 = vmatprep.subr.bf16.mxu0 0
    %1780 = vmatpush1.bf16.xpose.msra.mxu0 0
    %1781 = vmatprep.mubr.bf16.mxu0 0
    %1782 = vmatmul.mubr.bf16.gmra.mrb[0].mxu0 %v1744
    %v1783 = vpop.f32.mrb[0].mxu0
    %v1784 = vadd.f32 0.0, %v1783
    %v1785 = vpop.f32.mrb[0].mxu0
    %v1786 = vpop.f32.mrb[0].mxu0
    %v1787 = vpop.f32.mrb[0].mxu0
    %1788 = vdwg.mxu0
    %1789 = vrot.lane.b32.xlu0 %v1546, 96
    %v1790 = vpop.permute.xlu0 %1789
    %v1792 = vsel %vm227, %v1546, 0
    %v1795 = vsel %vm227, %v1790, 0
    %1797 = vmatprep.subr.bf16.mxu0 0
    %1798 = vmatpush1.bf16.xpose.msra.mxu0 %v1795
    %1799 = vmatprep.subr.bf16.mxu0 0
    %1800 = vmatpush1.bf16.xpose.msra.mxu0 0
    %1801 = vmatprep.subr.bf16.mxu0 0
    %1802 = vmatpush1.bf16.xpose.msra.mxu0 0
    %1803 = vmatprep.subr.bf16.mxu0 0
    %1804 = vmatpush1.bf16.xpose.msra.mxu0 0
    %1805 = vmatprep.subr.bf16.mxu0 0
    %1806 = vmatpush1.bf16.xpose.msra.mxu0 0
    %1807 = vmatprep.subr.bf16.mxu0 0
    %1808 = vmatpush1.bf16.xpose.msra.mxu0 0
    %1809 = vmatprep.subr.bf16.mxu0 0
    %1810 = vmatpush1.bf16.xpose.msra.mxu0 0
    %1811 = vmatprep.subr.bf16.mxu0 0
    %1812 = vmatpush1.bf16.xpose.msra.mxu0 0
    %1813 = vmatprep.subr.bf16.mxu0 0
    %1814 = vmatpush1.bf16.xpose.msra.mxu0 0
    %1815 = vmatprep.subr.bf16.mxu0 0
    %1816 = vmatpush1.bf16.xpose.msra.mxu0 0
    %1817 = vmatprep.subr.bf16.mxu0 0
    %1818 = vmatpush1.bf16.xpose.msra.mxu0 0
    %1819 = vmatprep.subr.bf16.mxu0 0
    %1820 = vmatpush1.bf16.xpose.msra.mxu0 0
    %1821 = vmatprep.subr.bf16.mxu0 0
    %1822 = vmatpush1.bf16.xpose.msra.mxu0 0
    %1823 = vmatprep.subr.bf16.mxu0 0
    %1824 = vmatpush1.bf16.xpose.msra.mxu0 0
    %1825 = vmatprep.subr.bf16.mxu0 0
    %1826 = vmatpush1.bf16.xpose.msra.mxu0 0
    %1827 = vmatprep.subr.bf16.mxu0 0
    %1828 = vmatpush1.bf16.xpose.msra.mxu0 0
    %1829 = vmatprep.mubr.bf16.mxu0 0
    %1830 = vmatmul.mubr.bf16.gmra.mrb[0].mxu0 %v1792
    %v1831 = vpop.f32.mrb[0].mxu0
    %v1832 = vadd.f32 0.0, %v1831
    %v1833 = vpop.f32.mrb[0].mxu0
    %v1834 = vpop.f32.mrb[0].mxu0
    %v1835 = vpop.f32.mrb[0].mxu0
    %1836 = vdwg.mxu0
    %1837 = vrot.lane.b32.xlu0 %v1547, 96
    %v1838 = vpop.permute.xlu0 %1837
    %v1840 = vsel %vm227, %v1547, 0
    %v1843 = vsel %vm227, %v1838, 0
    %1845 = vmatprep.subr.bf16.mxu0 0
    %1846 = vmatpush1.bf16.xpose.msra.mxu0 %v1843
    %1847 = vmatprep.subr.bf16.mxu0 0
    %1848 = vmatpush1.bf16.xpose.msra.mxu0 0
    %1849 = vmatprep.subr.bf16.mxu0 0
    %1850 = vmatpush1.bf16.xpose.msra.mxu0 0
    %1851 = vmatprep.subr.bf16.mxu0 0
    %1852 = vmatpush1.bf16.xpose.msra.mxu0 0
    %1853 = vmatprep.subr.bf16.mxu0 0
    %1854 = vmatpush1.bf16.xpose.msra.mxu0 0
    %1855 = vmatprep.subr.bf16.mxu0 0
    %1856 = vmatpush1.bf16.xpose.msra.mxu0 0
    %1857 = vmatprep.subr.bf16.mxu0 0
    %1858 = vmatpush1.bf16.xpose.msra.mxu0 0
    %1859 = vmatprep.subr.bf16.mxu0 0
    %1860 = vmatpush1.bf16.xpose.msra.mxu0 0
    %1861 = vmatprep.subr.bf16.mxu0 0
    %1862 = vmatpush1.bf16.xpose.msra.mxu0 0
    %1863 = vmatprep.subr.bf16.mxu0 0
    %1864 = vmatpush1.bf16.xpose.msra.mxu0 0
    %1865 = vmatprep.subr.bf16.mxu0 0
    %1866 = vmatpush1.bf16.xpose.msra.mxu0 0
    %1867 = vmatprep.subr.bf16.mxu0 0
    %1868 = vmatpush1.bf16.xpose.msra.mxu0 0
    %1869 = vmatprep.subr.bf16.mxu0 0
    %1870 = vmatpush1.bf16.xpose.msra.mxu0 0
    %1871 = vmatprep.subr.bf16.mxu0 0
    %1872 = vmatpush1.bf16.xpose.msra.mxu0 0
    %1873 = vmatprep.subr.bf16.mxu0 0
    %1874 = vmatpush1.bf16.xpose.msra.mxu0 0
    %1875 = vmatprep.subr.bf16.mxu0 0
    %1876 = vmatpush1.bf16.xpose.msra.mxu0 0
    %1877 = vmatprep.mubr.bf16.mxu0 0
    %1878 = vmatmul.mubr.bf16.gmra.mrb[0].mxu0 %v1840
    %v1879 = vpop.f32.mrb[0].mxu0
    %v1880 = vadd.f32 0.0, %v1879
    %v1881 = vpop.f32.mrb[0].mxu0
    %v1882 = vpop.f32.mrb[0].mxu0
    %v1883 = vpop.f32.mrb[0].mxu0
    %1884 = vdwg.mxu0
    %1885 = vrot.lane.b32.xlu0 %v1548, 96
    %v1886 = vpop.permute.xlu0 %1885
    %v1888 = vsel %vm227, %v1548, 0
    %v1891 = vsel %vm227, %v1886, 0
    %1893 = vmatprep.subr.bf16.mxu0 0
    %1894 = vmatpush1.bf16.xpose.msra.mxu0 %v1891
    %1895 = vmatprep.subr.bf16.mxu0 0
    %1896 = vmatpush1.bf16.xpose.msra.mxu0 0
    %1897 = vmatprep.subr.bf16.mxu0 0
    %1898 = vmatpush1.bf16.xpose.msra.mxu0 0
    %1899 = vmatprep.subr.bf16.mxu0 0
    %1900 = vmatpush1.bf16.xpose.msra.mxu0 0
    %1901 = vmatprep.subr.bf16.mxu0 0
    %1902 = vmatpush1.bf16.xpose.msra.mxu0 0
    %1903 = vmatprep.subr.bf16.mxu0 0
    %1904 = vmatpush1.bf16.xpose.msra.mxu0 0
    %1905 = vmatprep.subr.bf16.mxu0 0
    %1906 = vmatpush1.bf16.xpose.msra.mxu0 0
    %1907 = vmatprep.subr.bf16.mxu0 0
    %1908 = vmatpush1.bf16.xpose.msra.mxu0 0
    %1909 = vmatprep.subr.bf16.mxu0 0
    %1910 = vmatpush1.bf16.xpose.msra.mxu0 0
    %1911 = vmatprep.subr.bf16.mxu0 0
    %1912 = vmatpush1.bf16.xpose.msra.mxu0 0
    %1913 = vmatprep.subr.bf16.mxu0 0
    %1914 = vmatpush1.bf16.xpose.msra.mxu0 0
    %1915 = vmatprep.subr.bf16.mxu0 0
    %1916 = vmatpush1.bf16.xpose.msra.mxu0 0
    %1917 = vmatprep.subr.bf16.mxu0 0
    %1918 = vmatpush1.bf16.xpose.msra.mxu0 0
    %1919 = vmatprep.subr.bf16.mxu0 0
    %1920 = vmatpush1.bf16.xpose.msra.mxu0 0
    %1921 = vmatprep.subr.bf16.mxu0 0
    %1922 = vmatpush1.bf16.xpose.msra.mxu0 0
    %1923 = vmatprep.subr.bf16.mxu0 0
    %1924 = vmatpush1.bf16.xpose.msra.mxu0 0
    %1925 = vmatprep.mubr.bf16.mxu0 0
    %1926 = vmatmul.mubr.bf16.gmra.mrb[0].mxu0 %v1888
    %v1927 = vpop.f32.mrb[0].mxu0
    %v1928 = vadd.f32 0.0, %v1927
    %v1929 = vpop.f32.mrb[0].mxu0
    %v1930 = vpop.f32.mrb[0].mxu0
    %v1931 = vpop.f32.mrb[0].mxu0
    %1932 = vdwg.mxu0
    %v1933 = vsel %vm227, %v1592, -inf
    %1934 = vmax.xlane.f32.xlu0 %v1933
    %v1935 = vpop.xlane.xlu0 %1934
    %v1936 = vsel %vm227, %v1640, -inf
    %1937 = vmax.xlane.f32.xlu0 %v1936
    %v1938 = vpop.xlane.xlu0 %1937
    %v1939 = vsel %vm227, %v1688, -inf
    %1940 = vmax.xlane.f32.xlu0 %v1939
    %v1941 = vpop.xlane.xlu0 %1940
    %v1942 = vsel %vm227, %v1736, -inf
    %1943 = vmax.xlane.f32.xlu0 %v1942
    %v1944 = vpop.xlane.xlu0 %1943
    %v1945 = vsel %vm227, %v1784, -inf
    %1946 = vmax.xlane.f32.xlu0 %v1945
    %v1947 = vpop.xlane.xlu0 %1946
    %v1948 = vsel %vm227, %v1832, -inf
    %1949 = vmax.xlane.f32.xlu0 %v1948
    %v1950 = vpop.xlane.xlu0 %1949
    %v1951 = vsel %vm227, %v1880, -inf
    %1952 = vmax.xlane.f32.xlu0 %v1951
    %v1953 = vpop.xlane.xlu0 %1952
    %v1954 = vsel %vm227, %v1928, -inf
    %1955 = vmax.xlane.f32.xlu0 %v1954
    %v1956 = vpop.xlane.xlu0 %1955
    %v1957 = vsub.f32 %v1592, %v1935
    %v1958 = vsub.f32 %v1640, %v1938
    %v1959 = vsub.f32 %v1688, %v1941
    %v1960 = vsub.f32 %v1736, %v1944
    %v1961 = vsub.f32 %v1784, %v1947
    %v1962 = vsub.f32 %v1832, %v1950
    %v1963 = vsub.f32 %v1880, %v1953
    %v1964 = vsub.f32 %v1928, %v1956
    %v1965 = vmul.f32 %v1957, 1.442695
    %v1966 = vpow.pop %v1965
    %v1967 = vmul.f32 %v1958, 1.442695
    %v1968 = vpow.pop %v1967
    %v1969 = vmul.f32 %v1959, 1.442695
    %v1970 = vpow.pop %v1969
    %v1971 = vmul.f32 %v1960, 1.442695
    %v1972 = vpow.pop %v1971
    %v1973 = vmul.f32 %v1961, 1.442695
    %v1974 = vpow.pop %v1973
    %v1975 = vmul.f32 %v1962, 1.442695
    %v1976 = vpow.pop %v1975
    %v1977 = vmul.f32 %v1963, 1.442695
    %v1978 = vpow.pop %v1977
    %v1979 = vmul.f32 %v1964, 1.442695
    %v1980 = vpow.pop %v1979
    %v1981 = vsel %vm227, %v1966, 0.0
    %1982 = vadd.xlane.f32.xlu0 %v1981
    %v1983 = vpop.xlane.xlu0 %1982
    %v1984 = vsel %vm227, %v1968, 0.0
    %1985 = vadd.xlane.f32.xlu0 %v1984
    %v1986 = vpop.xlane.xlu0 %1985
    %v1987 = vsel %vm227, %v1970, 0.0
    %1988 = vadd.xlane.f32.xlu0 %v1987
    %v1989 = vpop.xlane.xlu0 %1988
    %v1990 = vsel %vm227, %v1972, 0.0
    %1991 = vadd.xlane.f32.xlu0 %v1990
    %v1992 = vpop.xlane.xlu0 %1991
    %v1993 = vsel %vm227, %v1974, 0.0
    %1994 = vadd.xlane.f32.xlu0 %v1993
    %v1995 = vpop.xlane.xlu0 %1994
    %v1996 = vsel %vm227, %v1976, 0.0
    %1997 = vadd.xlane.f32.xlu0 %v1996
    %v1998 = vpop.xlane.xlu0 %1997
    %v1999 = vsel %vm227, %v1978, 0.0
    %2000 = vadd.xlane.f32.xlu0 %v1999
    %v2001 = vpop.xlane.xlu0 %2000
    %v2002 = vsel %vm227, %v1980, 0.0
    %2003 = vadd.xlane.f32.xlu0 %v2002
    %v2004 = vpop.xlane.xlu0 %2003
    %v2005 = vrcp.pop %v1983
    %v2006 = vrcp.pop %v1986
    %v2007 = vrcp.pop %v1989
    %v2008 = vrcp.pop %v1992
    %v2009 = vrcp.pop %v1995
    %v2010 = vrcp.pop %v1998
    %v2011 = vrcp.pop %v2001
    %v2012 = vrcp.pop %v2004
    %v2013 = vmul.f32 %v1966, %v2005
    %v2014 = vmul.f32 %v1968, %v2006
    %v2015 = vmul.f32 %v1970, %v2007
    %v2016 = vmul.f32 %v1972, %v2008
    %v2017 = vmul.f32 %v1974, %v2009
    %v2018 = vmul.f32 %v1976, %v2010
    %v2019 = vmul.f32 %v1978, %v2011
    %v2020 = vmul.f32 %v1980, %v2012
    %v2021 = vpack.c.bf16 %v2013, %v2013
    %v2022 = vpack.c.bf16 %v2014, %v2014
    %v2023 = vpack.c.bf16 %v2015, %v2015
    %v2024 = vpack.c.bf16 %v2016, %v2016
    %v2025 = vpack.c.bf16 %v2017, %v2017
    %v2026 = vpack.c.bf16 %v2018, %v2018
    %v2027 = vpack.c.bf16 %v2019, %v2019
    %v2028 = vpack.c.bf16 %v2020, %v2020
    %2029 = vrot.lane.b32.xlu0 %v1541, 64
    %v2030 = vpop.permute.xlu0 %2029
    %v2032 = vsel %vm227, %v2021, 0
    %v2035 = vsel %vm711, %v2030, 0
    %2037 = vmatprep.subr.bf16.mxu0 0
    %2038 = vmatpush1.bf16.msra.mxu0 %v2035
    %2039 = vmatprep.subr.bf16.mxu0 0
    %2040 = vmatpush1.bf16.msra.mxu0 0
    %2041 = vmatprep.subr.bf16.mxu0 0
    %2042 = vmatpush1.bf16.msra.mxu0 0
    %2043 = vmatprep.subr.bf16.mxu0 0
    %2044 = vmatpush1.bf16.msra.mxu0 0
    %2045 = vmatprep.subr.bf16.mxu0 0
    %2046 = vmatpush1.bf16.msra.mxu0 0
    %2047 = vmatprep.subr.bf16.mxu0 0
    %2048 = vmatpush1.bf16.msra.mxu0 0
    %2049 = vmatprep.subr.bf16.mxu0 0
    %2050 = vmatpush1.bf16.msra.mxu0 0
    %2051 = vmatprep.subr.bf16.mxu0 0
    %2052 = vmatpush1.bf16.msra.mxu0 0
    %2053 = vmatprep.subr.bf16.mxu0 0
    %2054 = vmatpush1.bf16.msra.mxu0 0
    %2055 = vmatprep.subr.bf16.mxu0 0
    %2056 = vmatpush1.bf16.msra.mxu0 0
    %2057 = vmatprep.subr.bf16.mxu0 0
    %2058 = vmatpush1.bf16.msra.mxu0 0
    %2059 = vmatprep.subr.bf16.mxu0 0
    %2060 = vmatpush1.bf16.msra.mxu0 0
    %2061 = vmatprep.subr.bf16.mxu0 0
    %2062 = vmatpush1.bf16.msra.mxu0 0
    %2063 = vmatprep.subr.bf16.mxu0 0
    %2064 = vmatpush1.bf16.msra.mxu0 0
    %2065 = vmatprep.subr.bf16.mxu0 0
    %2066 = vmatpush1.bf16.msra.mxu0 0
    %2067 = vmatprep.subr.bf16.mxu0 0
    %2068 = vmatpush1.bf16.msra.mxu0 0
    %2069 = vmatprep.mubr.bf16.mxu0 0
    %2070 = vmatmul.mubr.bf16.gmra.mrb[0].mxu0 %v2032
    %v2071 = vpop.f32.mrb[0].mxu0
    %v2072 = vadd.f32 0.0, %v2071
    %v2073 = vpop.f32.mrb[0].mxu0
    %v2074 = vpop.f32.mrb[0].mxu0
    %v2075 = vpop.f32.mrb[0].mxu0
    %2076 = vdwg.mxu0
    %2077 = vrot.lane.b32.xlu0 %v1542, 64
    %v2078 = vpop.permute.xlu0 %2077
    %v2080 = vsel %vm227, %v2022, 0
    %v2083 = vsel %vm711, %v2078, 0
    %2085 = vmatprep.subr.bf16.mxu0 0
    %2086 = vmatpush1.bf16.msra.mxu0 %v2083
    %2087 = vmatprep.subr.bf16.mxu0 0
    %2088 = vmatpush1.bf16.msra.mxu0 0
    %2089 = vmatprep.subr.bf16.mxu0 0
    %2090 = vmatpush1.bf16.msra.mxu0 0
    %2091 = vmatprep.subr.bf16.mxu0 0
    %2092 = vmatpush1.bf16.msra.mxu0 0
    %2093 = vmatprep.subr.bf16.mxu0 0
    %2094 = vmatpush1.bf16.msra.mxu0 0
    %2095 = vmatprep.subr.bf16.mxu0 0
    %2096 = vmatpush1.bf16.msra.mxu0 0
    %2097 = vmatprep.subr.bf16.mxu0 0
    %2098 = vmatpush1.bf16.msra.mxu0 0
    %2099 = vmatprep.subr.bf16.mxu0 0
    %2100 = vmatpush1.bf16.msra.mxu0 0
    %2101 = vmatprep.subr.bf16.mxu0 0
    %2102 = vmatpush1.bf16.msra.mxu0 0
    %2103 = vmatprep.subr.bf16.mxu0 0
    %2104 = vmatpush1.bf16.msra.mxu0 0
    %2105 = vmatprep.subr.bf16.mxu0 0
    %2106 = vmatpush1.bf16.msra.mxu0 0
    %2107 = vmatprep.subr.bf16.mxu0 0
    %2108 = vmatpush1.bf16.msra.mxu0 0
    %2109 = vmatprep.subr.bf16.mxu0 0
    %2110 = vmatpush1.bf16.msra.mxu0 0
    %2111 = vmatprep.subr.bf16.mxu0 0
    %2112 = vmatpush1.bf16.msra.mxu0 0
    %2113 = vmatprep.subr.bf16.mxu0 0
    %2114 = vmatpush1.bf16.msra.mxu0 0
    %2115 = vmatprep.subr.bf16.mxu0 0
    %2116 = vmatpush1.bf16.msra.mxu0 0
    %2117 = vmatprep.mubr.bf16.mxu0 0
    %2118 = vmatmul.mubr.bf16.gmra.mrb[0].mxu0 %v2080
    %v2119 = vpop.f32.mrb[0].mxu0
    %v2120 = vadd.f32 0.0, %v2119
    %v2121 = vpop.f32.mrb[0].mxu0
    %v2122 = vpop.f32.mrb[0].mxu0
    %v2123 = vpop.f32.mrb[0].mxu0
    %2124 = vdwg.mxu0
    %2125 = vrot.lane.b32.xlu0 %v1543, 64
    %v2126 = vpop.permute.xlu0 %2125
    %v2128 = vsel %vm227, %v2023, 0
    %v2131 = vsel %vm711, %v2126, 0
    %2133 = vmatprep.subr.bf16.mxu0 0
    %2134 = vmatpush1.bf16.msra.mxu0 %v2131
    %2135 = vmatprep.subr.bf16.mxu0 0
    %2136 = vmatpush1.bf16.msra.mxu0 0
    %2137 = vmatprep.subr.bf16.mxu0 0
    %2138 = vmatpush1.bf16.msra.mxu0 0
    %2139 = vmatprep.subr.bf16.mxu0 0
    %2140 = vmatpush1.bf16.msra.mxu0 0
    %2141 = vmatprep.subr.bf16.mxu0 0
    %2142 = vmatpush1.bf16.msra.mxu0 0
    %2143 = vmatprep.subr.bf16.mxu0 0
    %2144 = vmatpush1.bf16.msra.mxu0 0
    %2145 = vmatprep.subr.bf16.mxu0 0
    %2146 = vmatpush1.bf16.msra.mxu0 0
    %2147 = vmatprep.subr.bf16.mxu0 0
    %2148 = vmatpush1.bf16.msra.mxu0 0
    %2149 = vmatprep.subr.bf16.mxu0 0
    %2150 = vmatpush1.bf16.msra.mxu0 0
    %2151 = vmatprep.subr.bf16.mxu0 0
    %2152 = vmatpush1.bf16.msra.mxu0 0
    %2153 = vmatprep.subr.bf16.mxu0 0
    %2154 = vmatpush1.bf16.msra.mxu0 0
    %2155 = vmatprep.subr.bf16.mxu0 0
    %2156 = vmatpush1.bf16.msra.mxu0 0
    %2157 = vmatprep.subr.bf16.mxu0 0
    %2158 = vmatpush1.bf16.msra.mxu0 0
    %2159 = vmatprep.subr.bf16.mxu0 0
    %2160 = vmatpush1.bf16.msra.mxu0 0
    %2161 = vmatprep.subr.bf16.mxu0 0
    %2162 = vmatpush1.bf16.msra.mxu0 0
    %2163 = vmatprep.subr.bf16.mxu0 0
    %2164 = vmatpush1.bf16.msra.mxu0 0
    %2165 = vmatprep.mubr.bf16.mxu0 0
    %2166 = vmatmul.mubr.bf16.gmra.mrb[0].mxu0 %v2128
    %v2167 = vpop.f32.mrb[0].mxu0
    %v2168 = vadd.f32 0.0, %v2167
    %v2169 = vpop.f32.mrb[0].mxu0
    %v2170 = vpop.f32.mrb[0].mxu0
    %v2171 = vpop.f32.mrb[0].mxu0
    %2172 = vdwg.mxu0
    %2173 = vrot.lane.b32.xlu0 %v1544, 64
    %v2174 = vpop.permute.xlu0 %2173
    %v2176 = vsel %vm227, %v2024, 0
    %v2179 = vsel %vm711, %v2174, 0
    %2181 = vmatprep.subr.bf16.mxu0 0
    %2182 = vmatpush1.bf16.msra.mxu0 %v2179
    %2183 = vmatprep.subr.bf16.mxu0 0
    %2184 = vmatpush1.bf16.msra.mxu0 0
    %2185 = vmatprep.subr.bf16.mxu0 0
    %2186 = vmatpush1.bf16.msra.mxu0 0
    %2187 = vmatprep.subr.bf16.mxu0 0
    %2188 = vmatpush1.bf16.msra.mxu0 0
    %2189 = vmatprep.subr.bf16.mxu0 0
    %2190 = vmatpush1.bf16.msra.mxu0 0
    %2191 = vmatprep.subr.bf16.mxu0 0
    %2192 = vmatpush1.bf16.msra.mxu0 0
    %2193 = vmatprep.subr.bf16.mxu0 0
    %2194 = vmatpush1.bf16.msra.mxu0 0
    %2195 = vmatprep.subr.bf16.mxu0 0
    %2196 = vmatpush1.bf16.msra.mxu0 0
    %2197 = vmatprep.subr.bf16.mxu0 0
    %2198 = vmatpush1.bf16.msra.mxu0 0
    %2199 = vmatprep.subr.bf16.mxu0 0
    %2200 = vmatpush1.bf16.msra.mxu0 0
    %2201 = vmatprep.subr.bf16.mxu0 0
    %2202 = vmatpush1.bf16.msra.mxu0 0
    %2203 = vmatprep.subr.bf16.mxu0 0
    %2204 = vmatpush1.bf16.msra.mxu0 0
    %2205 = vmatprep.subr.bf16.mxu0 0
    %2206 = vmatpush1.bf16.msra.mxu0 0
    %2207 = vmatprep.subr.bf16.mxu0 0
    %2208 = vmatpush1.bf16.msra.mxu0 0
    %2209 = vmatprep.subr.bf16.mxu0 0
    %2210 = vmatpush1.bf16.msra.mxu0 0
    %2211 = vmatprep.subr.bf16.mxu0 0
    %2212 = vmatpush1.bf16.msra.mxu0 0
    %2213 = vmatprep.mubr.bf16.mxu0 0
    %2214 = vmatmul.mubr.bf16.gmra.mrb[0].mxu0 %v2176
    %v2215 = vpop.f32.mrb[0].mxu0
    %v2216 = vadd.f32 0.0, %v2215
    %v2217 = vpop.f32.mrb[0].mxu0
    %v2218 = vpop.f32.mrb[0].mxu0
    %v2219 = vpop.f32.mrb[0].mxu0
    %2220 = vdwg.mxu0
    %2221 = vrot.lane.b32.xlu0 %v1545, 64
    %v2222 = vpop.permute.xlu0 %2221
    %v2224 = vsel %vm227, %v2025, 0
    %v2227 = vsel %vm711, %v2222, 0
    %2229 = vmatprep.subr.bf16.mxu0 0
    %2230 = vmatpush1.bf16.msra.mxu0 %v2227
    %2231 = vmatprep.subr.bf16.mxu0 0
    %2232 = vmatpush1.bf16.msra.mxu0 0
    %2233 = vmatprep.subr.bf16.mxu0 0
    %2234 = vmatpush1.bf16.msra.mxu0 0
    %2235 = vmatprep.subr.bf16.mxu0 0
    %2236 = vmatpush1.bf16.msra.mxu0 0
    %2237 = vmatprep.subr.bf16.mxu0 0
    %2238 = vmatpush1.bf16.msra.mxu0 0
    %2239 = vmatprep.subr.bf16.mxu0 0
    %2240 = vmatpush1.bf16.msra.mxu0 0
    %2241 = vmatprep.subr.bf16.mxu0 0
    %2242 = vmatpush1.bf16.msra.mxu0 0
    %2243 = vmatprep.subr.bf16.mxu0 0
    %2244 = vmatpush1.bf16.msra.mxu0 0
    %2245 = vmatprep.subr.bf16.mxu0 0
    %2246 = vmatpush1.bf16.msra.mxu0 0
    %2247 = vmatprep.subr.bf16.mxu0 0
    %2248 = vmatpush1.bf16.msra.mxu0 0
    %2249 = vmatprep.subr.bf16.mxu0 0
    %2250 = vmatpush1.bf16.msra.mxu0 0
    %2251 = vmatprep.subr.bf16.mxu0 0
    %2252 = vmatpush1.bf16.msra.mxu0 0
    %2253 = vmatprep.subr.bf16.mxu0 0
    %2254 = vmatpush1.bf16.msra.mxu0 0
    %2255 = vmatprep.subr.bf16.mxu0 0
    %2256 = vmatpush1.bf16.msra.mxu0 0
    %2257 = vmatprep.subr.bf16.mxu0 0
    %2258 = vmatpush1.bf16.msra.mxu0 0
    %2259 = vmatprep.subr.bf16.mxu0 0
    %2260 = vmatpush1.bf16.msra.mxu0 0
    %2261 = vmatprep.mubr.bf16.mxu0 0
    %2262 = vmatmul.mubr.bf16.gmra.mrb[0].mxu0 %v2224
    %v2263 = vpop.f32.mrb[0].mxu0
    %v2264 = vadd.f32 0.0, %v2263
    %v2265 = vpop.f32.mrb[0].mxu0
    %v2266 = vpop.f32.mrb[0].mxu0
    %v2267 = vpop.f32.mrb[0].mxu0
    %2268 = vdwg.mxu0
    %2269 = vrot.lane.b32.xlu0 %v1546, 64
    %v2270 = vpop.permute.xlu0 %2269
    %v2272 = vsel %vm227, %v2026, 0
    %v2275 = vsel %vm711, %v2270, 0
    %2277 = vmatprep.subr.bf16.mxu0 0
    %2278 = vmatpush1.bf16.msra.mxu0 %v2275
    %2279 = vmatprep.subr.bf16.mxu0 0
    %2280 = vmatpush1.bf16.msra.mxu0 0
    %2281 = vmatprep.subr.bf16.mxu0 0
    %2282 = vmatpush1.bf16.msra.mxu0 0
    %2283 = vmatprep.subr.bf16.mxu0 0
    %2284 = vmatpush1.bf16.msra.mxu0 0
    %2285 = vmatprep.subr.bf16.mxu0 0
    %2286 = vmatpush1.bf16.msra.mxu0 0
    %2287 = vmatprep.subr.bf16.mxu0 0
    %2288 = vmatpush1.bf16.msra.mxu0 0
    %2289 = vmatprep.subr.bf16.mxu0 0
    %2290 = vmatpush1.bf16.msra.mxu0 0
    %2291 = vmatprep.subr.bf16.mxu0 0
    %2292 = vmatpush1.bf16.msra.mxu0 0
    %2293 = vmatprep.subr.bf16.mxu0 0
    %2294 = vmatpush1.bf16.msra.mxu0 0
    %2295 = vmatprep.subr.bf16.mxu0 0
    %2296 = vmatpush1.bf16.msra.mxu0 0
    %2297 = vmatprep.subr.bf16.mxu0 0
    %2298 = vmatpush1.bf16.msra.mxu0 0
    %2299 = vmatprep.subr.bf16.mxu0 0
    %2300 = vmatpush1.bf16.msra.mxu0 0
    %2301 = vmatprep.subr.bf16.mxu0 0
    %2302 = vmatpush1.bf16.msra.mxu0 0
    %2303 = vmatprep.subr.bf16.mxu0 0
    %2304 = vmatpush1.bf16.msra.mxu0 0
    %2305 = vmatprep.subr.bf16.mxu0 0
    %2306 = vmatpush1.bf16.msra.mxu0 0
    %2307 = vmatprep.subr.bf16.mxu0 0
    %2308 = vmatpush1.bf16.msra.mxu0 0
    %2309 = vmatprep.mubr.bf16.mxu0 0
    %2310 = vmatmul.mubr.bf16.gmra.mrb[0].mxu0 %v2272
    %v2311 = vpop.f32.mrb[0].mxu0
    %v2312 = vadd.f32 0.0, %v2311
    %v2313 = vpop.f32.mrb[0].mxu0
    %v2314 = vpop.f32.mrb[0].mxu0
    %v2315 = vpop.f32.mrb[0].mxu0
    %2316 = vdwg.mxu0
    %2317 = vrot.lane.b32.xlu0 %v1547, 64
    %v2318 = vpop.permute.xlu0 %2317
    %v2320 = vsel %vm227, %v2027, 0
    %v2323 = vsel %vm711, %v2318, 0
    %2325 = vmatprep.subr.bf16.mxu0 0
    %2326 = vmatpush1.bf16.msra.mxu0 %v2323
    %2327 = vmatprep.subr.bf16.mxu0 0
    %2328 = vmatpush1.bf16.msra.mxu0 0
    %2329 = vmatprep.subr.bf16.mxu0 0
    %2330 = vmatpush1.bf16.msra.mxu0 0
    %2331 = vmatprep.subr.bf16.mxu0 0
    %2332 = vmatpush1.bf16.msra.mxu0 0
    %2333 = vmatprep.subr.bf16.mxu0 0
    %2334 = vmatpush1.bf16.msra.mxu0 0
    %2335 = vmatprep.subr.bf16.mxu0 0
    %2336 = vmatpush1.bf16.msra.mxu0 0
    %2337 = vmatprep.subr.bf16.mxu0 0
    %2338 = vmatpush1.bf16.msra.mxu0 0
    %2339 = vmatprep.subr.bf16.mxu0 0
    %2340 = vmatpush1.bf16.msra.mxu0 0
    %2341 = vmatprep.subr.bf16.mxu0 0
    %2342 = vmatpush1.bf16.msra.mxu0 0
    %2343 = vmatprep.subr.bf16.mxu0 0
    %2344 = vmatpush1.bf16.msra.mxu0 0
    %2345 = vmatprep.subr.bf16.mxu0 0
    %2346 = vmatpush1.bf16.msra.mxu0 0
    %2347 = vmatprep.subr.bf16.mxu0 0
    %2348 = vmatpush1.bf16.msra.mxu0 0
    %2349 = vmatprep.subr.bf16.mxu0 0
    %2350 = vmatpush1.bf16.msra.mxu0 0
    %2351 = vmatprep.subr.bf16.mxu0 0
    %2352 = vmatpush1.bf16.msra.mxu0 0
    %2353 = vmatprep.subr.bf16.mxu0 0
    %2354 = vmatpush1.bf16.msra.mxu0 0
    %2355 = vmatprep.subr.bf16.mxu0 0
    %2356 = vmatpush1.bf16.msra.mxu0 0
    %2357 = vmatprep.mubr.bf16.mxu0 0
    %2358 = vmatmul.mubr.bf16.gmra.mrb[0].mxu0 %v2320
    %v2359 = vpop.f32.mrb[0].mxu0
    %v2360 = vadd.f32 0.0, %v2359
    %v2361 = vpop.f32.mrb[0].mxu0
    %v2362 = vpop.f32.mrb[0].mxu0
    %v2363 = vpop.f32.mrb[0].mxu0
    %2364 = vdwg.mxu0
    %2365 = vrot.lane.b32.xlu0 %v1548, 64
    %v2366 = vpop.permute.xlu0 %2365
    %v2368 = vsel %vm227, %v2028, 0
    %v2371 = vsel %vm711, %v2366, 0
    %2373 = vmatprep.subr.bf16.mxu0 0
    %2374 = vmatpush1.bf16.msra.mxu0 %v2371
    %2375 = vmatprep.subr.bf16.mxu0 0
    %2376 = vmatpush1.bf16.msra.mxu0 0
    %2377 = vmatprep.subr.bf16.mxu0 0
    %2378 = vmatpush1.bf16.msra.mxu0 0
    %2379 = vmatprep.subr.bf16.mxu0 0
    %2380 = vmatpush1.bf16.msra.mxu0 0
    %2381 = vmatprep.subr.bf16.mxu0 0
    %2382 = vmatpush1.bf16.msra.mxu0 0
    %2383 = vmatprep.subr.bf16.mxu0 0
    %2384 = vmatpush1.bf16.msra.mxu0 0
    %2385 = vmatprep.subr.bf16.mxu0 0
    %2386 = vmatpush1.bf16.msra.mxu0 0
    %2387 = vmatprep.subr.bf16.mxu0 0
    %2388 = vmatpush1.bf16.msra.mxu0 0
    %2389 = vmatprep.subr.bf16.mxu0 0
    %2390 = vmatpush1.bf16.msra.mxu0 0
    %2391 = vmatprep.subr.bf16.mxu0 0
    %2392 = vmatpush1.bf16.msra.mxu0 0
    %2393 = vmatprep.subr.bf16.mxu0 0
    %2394 = vmatpush1.bf16.msra.mxu0 0
    %2395 = vmatprep.subr.bf16.mxu0 0
    %2396 = vmatpush1.bf16.msra.mxu0 0
    %2397 = vmatprep.subr.bf16.mxu0 0
    %2398 = vmatpush1.bf16.msra.mxu0 0
    %2399 = vmatprep.subr.bf16.mxu0 0
    %2400 = vmatpush1.bf16.msra.mxu0 0
    %2401 = vmatprep.subr.bf16.mxu0 0
    %2402 = vmatpush1.bf16.msra.mxu0 0
    %2403 = vmatprep.subr.bf16.mxu0 0
    %2404 = vmatpush1.bf16.msra.mxu0 0
    %2405 = vmatprep.mubr.bf16.mxu0 0
    %2406 = vmatmul.mubr.bf16.gmra.mrb[0].mxu0 %v2368
    %v2407 = vpop.f32.mrb[0].mxu0
    %v2408 = vadd.f32 0.0, %v2407
    %v2409 = vpop.f32.mrb[0].mxu0
    %v2410 = vpop.f32.mrb[0].mxu0
    %v2411 = vpop.f32.mrb[0].mxu0
    %2412 = vdwg.mxu0
    %2415 = vrot.lane.b32.xlu0 %v2168, 8
    %v2416 = vpop.permute.xlu0 %2415
    %2417 = vrot.lane.b32.xlu0 %v2216, 8
    %v2418 = vpop.permute.xlu0 %2417
    %2423 = vrot.lane.b32.xlu0 %v2264, 16
    %v2424 = vpop.permute.xlu0 %2423
    %2425 = vrot.lane.b32.xlu0 %v2312, 16
    %v2426 = vpop.permute.xlu0 %2425
    %2431 = vrot.lane.b32.xlu0 %v2360, 24
    %v2432 = vpop.permute.xlu0 %2431
    %2433 = vrot.lane.b32.xlu0 %v2408, 24
    %v2434 = vpop.permute.xlu0 %2433
    %v2437 = vsel %vm227, %v2072, %v2416
    %v2438 = vsel %vm227, %v2120, %v2418
    %v2439 = vsel %vm1117, %v2437, %v2424
    %v2440 = vsel %vm1117, %v2438, %v2426
    %v2441 = vsel %vm1120, %v2439, %v2432
    %v2442 = vsel %vm1120, %v2440, %v2434
    %v2443 = vpack.c.bf16 %v2442, %v2441
    %s2444 = scalar_lea.vmem %s5, 16
    %v2445 = vld [vmem:[%s2444] sm:$0xf]
    %v2446 = vld [vmem:[%s2444 + $0x4] sm:$0xf]
    %v2447 = vld [vmem:[%s2444 + $0x8] sm:$0xf]
    %v2448 = vld [vmem:[%s2444 + $0xc] sm:$0xf]
    %s2449 = scalar_lea.vmem %s6, 1
    %v2450 = vld [vmem:[%s2449] sm:$0x1]
    %v2452 = vlaneseq
    %v2453 = vshrl.u32 %v2452, 7
    %v2454 = vsub.s32 0, %v2453
    %v2455 = vrot.slane %v2450, %v2454
    %v2461 = vunpack.c.l.b16 %v2445
    %v2462 = vunpack.c.l.b16 %v2446
    %v2463 = vunpack.c.l.b16 %v2447
    %v2464 = vunpack.c.l.b16 %v2448
    %v2465 = vpack.c.b16 %v2462, %v2461
    %v2466 = vpack.c.b16 %v2464, %v2463
    %v2470 = vsel %vm156, %v2443, 0
    %2472 = vmatprep.subr.bf16.mxu0 0
    %2473 = vmatpush1.bf16.msra.mxu0 %v2465
    %2474 = vmatprep.subr.bf16.mxu0 0
    %2475 = vmatpush1.bf16.msra.mxu0 %v2466
    %2476 = vmatprep.subr.bf16.mxu0 0
    %2477 = vmatpush1.bf16.msra.mxu0 0
    %2478 = vmatprep.subr.bf16.mxu0 0
    %2479 = vmatpush1.bf16.msra.mxu0 0
    %2480 = vmatprep.subr.bf16.mxu0 0
    %2481 = vmatpush1.bf16.msra.mxu0 0
    %2482 = vmatprep.subr.bf16.mxu0 0
    %2483 = vmatpush1.bf16.msra.mxu0 0
    %2484 = vmatprep.subr.bf16.mxu0 0
    %2485 = vmatpush1.bf16.msra.mxu0 0
    %2486 = vmatprep.subr.bf16.mxu0 0
    %2487 = vmatpush1.bf16.msra.mxu0 0
    %2488 = vmatprep.subr.bf16.mxu0 0
    %2489 = vmatpush1.bf16.msra.mxu0 0
    %2490 = vmatprep.subr.bf16.mxu0 0
    %2491 = vmatpush1.bf16.msra.mxu0 0
    %2492 = vmatprep.subr.bf16.mxu0 0
    %2493 = vmatpush1.bf16.msra.mxu0 0
    %2494 = vmatprep.subr.bf16.mxu0 0
    %2495 = vmatpush1.bf16.msra.mxu0 0
    %2496 = vmatprep.subr.bf16.mxu0 0
    %2497 = vmatpush1.bf16.msra.mxu0 0
    %2498 = vmatprep.subr.bf16.mxu0 0
    %2499 = vmatpush1.bf16.msra.mxu0 0
    %2500 = vmatprep.subr.bf16.mxu0 0
    %2501 = vmatpush1.bf16.msra.mxu0 0
    %2502 = vmatprep.subr.bf16.mxu0 0
    %2503 = vmatpush1.bf16.msra.mxu0 0
    %2504 = vmatprep.mubr.bf16.mxu0 0
    %2505 = vmatmul.mubr.bf16.gmra.mrb[0].mxu0 %v2470
    %v2506 = vpop.f32.mrb[0].mxu0
    %v2507 = vadd.f32 %v2455, %v2506
    %v2508 = vpop.f32.mrb[0].mxu0
    %v2509 = vpop.f32.mrb[0].mxu0
    %v2510 = vadd.f32 %v2455, %v2509
    %v2511 = vpop.f32.mrb[0].mxu0
    %2512 = vdwg.mxu0
    %v2513 = vadd.f32 %v1449, %v2507
    %v2514 = vadd.f32 %v1450, %v2510
    %v2515 = vsel %vm156, %v2513, 0.0
    %2516 = vadd.xlane.f32.xlu0 %v2515
    %v2517 = vpop.xlane.xlu0 %2516
    %v2518 = vsel %vm156, %v2514, 0.0
    %2519 = vadd.xlane.f32.xlu0 %v2518
    %v2520 = vpop.xlane.xlu0 %2519
    %v2521 = vmul.f32 %v2517, %v1199
    %v2522 = vmul.f32 %v2520, %v1199
    %v2523 = vsub.f32 %v2513, %v2521
    %v2524 = vsub.f32 %v2514, %v2522
    %v2525 = vmul.f32 %v2523, %v2523
    %v2526 = vmul.f32 %v2524, %v2524
    %v2527 = vsel %vm156, %v2525, 0.0
    %2528 = vadd.xlane.f32.xlu0 %v2527
    %v2529 = vpop.xlane.xlu0 %2528
    %v2530 = vsel %vm156, %v2526, 0.0
    %2531 = vadd.xlane.f32.xlu0 %v2530
    %v2532 = vpop.xlane.xlu0 %2531
    %v2533 = vmul.f32 %v2529, %v1199
    %v2534 = vmul.f32 %v2532, %v1199
    %v2535 = vadd.f32 %v2533, 1e-05
    %v2536 = vadd.f32 %v2534, 1e-05
    %v2537 = vrsqrt.pop %v2535
    %v2538 = vrsqrt.pop %v2536
    %v2539 = vmul.f32 %v2523, %v2537
    %v2540 = vmul.f32 %v2524, %v2538
    %v2542 = vlaneseq
    %v2543 = vshrl.u32 %v2542, 7
    %v2544 = vsub.s32 0, %v2543
    %v2545 = vrot.slane %v1452, %v2544
    %v2547 = vmul.f32 %v2539, %v2545
    %v2548 = vmul.f32 %v2540, %v2545
    %v2550 = vlaneseq
    %v2551 = vshrl.u32 %v2550, 7
    %v2552 = vsub.s32 0, %v2551
    %v2553 = vrot.slane %v1454, %v2552
    %v2555 = vadd.f32 %v2547, %v2553
    %v2556 = vadd.f32 %v2548, %v2553
    %v2557 = vpack.c.bf16 %v2556, %v2555
    %s2558 = scalar_lea.vmem %s9, 16
    %v2559 = vld [vmem:[%s2558] sm:$0xf]
    %v2560 = vld [vmem:[%s2558 + $0x4] sm:$0xf]
    %v2561 = vld [vmem:[%s2558 + $0x8] sm:$0xf]
    %v2562 = vld [vmem:[%s2558 + $0xc] sm:$0xf]
    %s2563 = scalar_lea.vmem %s10, 1
    %v2564 = vld [vmem:[%s2563] sm:$0x1]
    %v2566 = vlaneseq
    %v2567 = vshrl.u32 %v2566, 7
    %v2568 = vsub.s32 0, %v2567
    %v2569 = vrot.slane %v2564, %v2568
    %v2575 = vunpack.c.l.b16 %v2559
    %v2576 = vunpack.c.l.b16 %v2560
    %v2577 = vunpack.c.l.b16 %v2561
    %v2578 = vunpack.c.l.b16 %v2562
    %v2579 = vpack.c.b16 %v2576, %v2575
    %v2580 = vpack.c.b16 %v2578, %v2577
    %v2584 = vsel %vm156, %v2557, 0
    %2586 = vmatprep.subr.bf16.mxu0 0
    %2587 = vmatpush1.bf16.msra.mxu0 %v2579
    %2588 = vmatprep.subr.bf16.mxu0 0
    %2589 = vmatpush1.bf16.msra.mxu0 %v2580
    %2590 = vmatprep.subr.bf16.mxu0 0
    %2591 = vmatpush1.bf16.msra.mxu0 0
    %2592 = vmatprep.subr.bf16.mxu0 0
    %2593 = vmatpush1.bf16.msra.mxu0 0
    %2594 = vmatprep.subr.bf16.mxu0 0
    %2595 = vmatpush1.bf16.msra.mxu0 0
    %2596 = vmatprep.subr.bf16.mxu0 0
    %2597 = vmatpush1.bf16.msra.mxu0 0
    %2598 = vmatprep.subr.bf16.mxu0 0
    %2599 = vmatpush1.bf16.msra.mxu0 0
    %2600 = vmatprep.subr.bf16.mxu0 0
    %2601 = vmatpush1.bf16.msra.mxu0 0
    %2602 = vmatprep.subr.bf16.mxu0 0
    %2603 = vmatpush1.bf16.msra.mxu0 0
    %2604 = vmatprep.subr.bf16.mxu0 0
    %2605 = vmatpush1.bf16.msra.mxu0 0
    %2606 = vmatprep.subr.bf16.mxu0 0
    %2607 = vmatpush1.bf16.msra.mxu0 0
    %2608 = vmatprep.subr.bf16.mxu0 0
    %2609 = vmatpush1.bf16.msra.mxu0 0
    %2610 = vmatprep.subr.bf16.mxu0 0
    %2611 = vmatpush1.bf16.msra.mxu0 0
    %2612 = vmatprep.subr.bf16.mxu0 0
    %2613 = vmatpush1.bf16.msra.mxu0 0
    %2614 = vmatprep.subr.bf16.mxu0 0
    %2615 = vmatpush1.bf16.msra.mxu0 0
    %2616 = vmatprep.subr.bf16.mxu0 0
    %2617 = vmatpush1.bf16.msra.mxu0 0
    %2618 = vmatprep.mubr.bf16.mxu0 0
    %2619 = vmatmul.mubr.bf16.gmra.mrb[0].mxu0 %v2584
    %v2620 = vpop.f32.mrb[0].mxu0
    %v2621 = vadd.f32 %v2569, %v2620
    %v2622 = vpop.f32.mrb[0].mxu0
    %v2623 = vpop.f32.mrb[0].mxu0
    %v2624 = vadd.f32 %v2569, %v2623
    %v2625 = vpop.f32.mrb[0].mxu0
    %2626 = vdwg.mxu0
    %v2627 = vmax.f32 %v2621, 0.0
    %v2628 = vmax.f32 %v2624, 0.0
    %v2629 = vpack.c.bf16 %v2628, %v2627
    %s2630 = scalar_lea.vmem %s11, 64
    %v2631 = vld [vmem:[%s2630] sm:$0xf]
    %v2632 = vld [vmem:[%s2630 + $0x4] sm:$0xf]
    %v2633 = vld [vmem:[%s2630 + $0x8] sm:$0xf]
    %v2634 = vld [vmem:[%s2630 + $0xc] sm:$0xf]
    %v2635 = vld [vmem:[%s2630 + $0x10] sm:$0xf]
    %v2636 = vld [vmem:[%s2630 + $0x14] sm:$0xf]
    %v2637 = vld [vmem:[%s2630 + $0x18] sm:$0xf]
    %v2638 = vld [vmem:[%s2630 + $0x1c] sm:$0xf]
    %v2639 = vld [vmem:[%s2630 + $0x20] sm:$0xf]
    %v2640 = vld [vmem:[%s2630 + $0x24] sm:$0xf]
    %v2641 = vld [vmem:[%s2630 + $0x28] sm:$0xf]
    %v2642 = vld [vmem:[%s2630 + $0x2c] sm:$0xf]
    %v2643 = vld [vmem:[%s2630 + $0x30] sm:$0xf]
    %v2644 = vld [vmem:[%s2630 + $0x34] sm:$0xf]
    %v2645 = vld [vmem:[%s2630 + $0x38] sm:$0xf]
    %v2646 = vld [vmem:[%s2630 + $0x3c] sm:$0xf]
    %s2647 = scalar_lea.vmem %s12, 1
    %v2648 = vld [vmem:[%s2647] sm:$0x1]
    %v2650 = vlaneseq
    %v2651 = vshrl.u32 %v2650, 7
    %v2652 = vsub.s32 0, %v2651
    %v2653 = vrot.slane %v2648, %v2652
    %v2671 = vunpack.c.l.b16 %v2631
    %v2672 = vunpack.c.l.b16 %v2632
    %v2673 = vunpack.c.l.b16 %v2633
    %v2674 = vunpack.c.l.b16 %v2634
    %v2675 = vunpack.c.l.b16 %v2635
    %v2676 = vunpack.c.l.b16 %v2636
    %v2677 = vunpack.c.l.b16 %v2637
    %v2678 = vunpack.c.l.b16 %v2638
    %v2679 = vunpack.c.l.b16 %v2639
    %v2680 = vunpack.c.l.b16 %v2640
    %v2681 = vunpack.c.l.b16 %v2641
    %v2682 = vunpack.c.l.b16 %v2642
    %v2683 = vunpack.c.l.b16 %v2643
    %v2684 = vunpack.c.l.b16 %v2644
    %v2685 = vunpack.c.l.b16 %v2645
    %v2686 = vunpack.c.l.b16 %v2646
    %v2687 = vpack.c.b16 %v2672, %v2671
    %v2688 = vpack.c.b16 %v2674, %v2673
    %v2689 = vpack.c.b16 %v2676, %v2675
    %v2690 = vpack.c.b16 %v2678, %v2677
    %v2691 = vpack.c.b16 %v2680, %v2679
    %v2692 = vpack.c.b16 %v2682, %v2681
    %v2693 = vpack.c.b16 %v2684, %v2683
    %v2694 = vpack.c.b16 %v2686, %v2685
    %2703 = vmatprep.subr.bf16.mxu0 0
    %2704 = vmatpush1.bf16.msra.mxu0 %v2687
    %2705 = vmatprep.subr.bf16.mxu0 0
    %2706 = vmatpush1.bf16.msra.mxu0 %v2688
    %2707 = vmatprep.subr.bf16.mxu0 0
    %2708 = vmatpush1.bf16.msra.mxu0 %v2689
    %2709 = vmatprep.subr.bf16.mxu0 0
    %2710 = vmatpush1.bf16.msra.mxu0 %v2690
    %2711 = vmatprep.subr.bf16.mxu0 0
    %2712 = vmatpush1.bf16.msra.mxu0 %v2691
    %2713 = vmatprep.subr.bf16.mxu0 0
    %2714 = vmatpush1.bf16.msra.mxu0 %v2692
    %2715 = vmatprep.subr.bf16.mxu0 0
    %2716 = vmatpush1.bf16.msra.mxu0 %v2693
    %2717 = vmatprep.subr.bf16.mxu0 0
    %2718 = vmatpush1.bf16.msra.mxu0 %v2694
    %2719 = vmatprep.subr.bf16.mxu0 0
    %2720 = vmatpush1.bf16.msra.mxu0 0
    %2721 = vmatprep.subr.bf16.mxu0 0
    %2722 = vmatpush1.bf16.msra.mxu0 0
    %2723 = vmatprep.subr.bf16.mxu0 0
    %2724 = vmatpush1.bf16.msra.mxu0 0
    %2725 = vmatprep.subr.bf16.mxu0 0
    %2726 = vmatpush1.bf16.msra.mxu0 0
    %2727 = vmatprep.subr.bf16.mxu0 0
    %2728 = vmatpush1.bf16.msra.mxu0 0
    %2729 = vmatprep.subr.bf16.mxu0 0
    %2730 = vmatpush1.bf16.msra.mxu0 0
    %2731 = vmatprep.subr.bf16.mxu0 0
    %2732 = vmatpush1.bf16.msra.mxu0 0
    %2733 = vmatprep.subr.bf16.mxu0 0
    %2734 = vmatpush1.bf16.msra.mxu0 0
    %2735 = vmatprep.mubr.bf16.mxu0 0
    %2736 = vmatmul.mubr.bf16.gmra.mrb[0].mxu0 %v2629
    %v2737 = vpop.f32.mrb[0].mxu0
    %v2738 = vadd.f32 %v2653, %v2737
    %v2739 = vpop.f32.mrb[0].mxu0
    %v2740 = vpop.f32.mrb[0].mxu0
    %v2741 = vadd.f32 %v2653, %v2740
    %v2742 = vpop.f32.mrb[0].mxu0
    %2743 = vdwg.mxu0
    %v2744 = vadd.f32 %v2555, %v2738
    %v2745 = vadd.f32 %v2556, %v2741
    %v2746 = vsel %vm156, %v2744, 0.0
    %2747 = vadd.xlane.f32.xlu0 %v2746
    %v2748 = vpop.xlane.xlu0 %2747
    %v2749 = vsel %vm156, %v2745, 0.0
    %2750 = vadd.xlane.f32.xlu0 %v2749
    %v2751 = vpop.xlane.xlu0 %2750
    %v2752 = vmul.f32 %v2748, %v1199
    %v2753 = vmul.f32 %v2751, %v1199
    %v2754 = vsub.f32 %v2744, %v2752
    %v2755 = vsub.f32 %v2745, %v2753
    %v2756 = vmul.f32 %v2754, %v2754
    %v2757 = vmul.f32 %v2755, %v2755
    %v2758 = vsel %vm156, %v2756, 0.0
    %2759 = vadd.xlane.f32.xlu0 %v2758
    %v2760 = vpop.xlane.xlu0 %2759
    %v2761 = vsel %vm156, %v2757, 0.0
    %2762 = vadd.xlane.f32.xlu0 %v2761
    %v2763 = vpop.xlane.xlu0 %2762
    %v2764 = vmul.f32 %v2760, %v1199
    %v2765 = vmul.f32 %v2763, %v1199
    %v2766 = vadd.f32 %v2764, 1e-05
    %v2767 = vadd.f32 %v2765, 1e-05
    %v2768 = vrsqrt.pop %v2766
    %v2769 = vrsqrt.pop %v2767
    %v2770 = vmul.f32 %v2754, %v2768
    %v2771 = vmul.f32 %v2755, %v2769
    %v2772 = vmul.f32 %v2770, %v2545
    %v2773 = vmul.f32 %v2771, %v2545
    %v2774 = vadd.f32 %v2772, %v2553
    %v2775 = vadd.f32 %v2773, %v2553
    %2776 = vst.msk [vmem:[#allocation6] sm:$0xff] %vm156, %v2774
    %2777 = vst.msk [vmem:[#allocation6 + $0x8] sm:$0xff] %vm156, %v2775
    // Predicated region
    $region58: #{encoder_forward.1} parent=1 // pred_check
      _
    $region59: #{encoder_forward.1} parent=1 // pred_check_branch
      %2779 = sbr.rel (0) target = $region61
    $region60: #{encoder_forward.1} parent=1 // pred_region
      %s2781 = ssub.s32 256, 256
      %2782 = vsyncadd [#allocation4], %s2781
      %s2783 = sshll.u32 [#allocation6], 4
      %s2784 = int_to_ptr.vmem [resolvable:$true] %s2783
      %2789 = dma.vmem_to_hbm [thread:$0]  %s2784, 256, %s13, [#allocation4], 128, 128, 8
    $region61: #{encoder_forward.1} parent=1 // pred_fallthru
      _
    // Predicated region
    $region62: #{encoder_forward.1} parent=1 // pred_check
      _
    $region63: #{encoder_forward.1} parent=1 // pred_check_branch
      %2791 = sbr.rel (0) target = $region65
    $region64: #{encoder_forward.1} parent=1 // pred_region
      %2792 = dma.done [#allocation4], 256
    $region65: #{encoder_forward.1} parent=1 // pred_fallthru
      _
    %2793 = vsyncpa [#allocation4], 1
    %2794 = vsyncpa [#allocation5], 1

</llo_original>
